<compile_context>
chip_gen: v7x
topology: tpu7x:2x2x1
jax: 0.10.0
libtpu: 0.0.40
codegen_flags: <defaults>
</compile_context>

<pallas_src>
import math
import jax
import jax.numpy as jnp
from jax import lax
from jax.experimental import pallas as pl
from jax.experimental.pallas import tpu as pltpu
from jax.scipy.special import gammaln, digamma

# ---- model dims ----
F    = 32            # dims_h['rna'] (= SCT.features)
H1   = 32            # dims_enc_x[0]
H2   = 32            # dims_enc_x[1]
DZ   = 16            # dim_z
DC   = 8             # dim_c
DB   = DZ - DC       # dim_b
DOUT = 2 * DZ + DC   # encoder output width (40)
ALPHA   = 15.0
A_VAR   = 1e-8
EPS12   = 1e-12
EPS10   = 1e-10
T_PRIOR = 1.0 / (1.0 + EPS12)        # guarded exp(0) of the N(0,I) prior expert
LOG_2PI = math.log(2.0 * math.pi)

# ---- packed-slab layout (everything 128 lanes wide -> lane-dense DMAs) ----
SLAB_W = 128
TM     = 128                          # batch rows per grid step (MXU-row aligned)

# parameter slab rows (all 8-sublane aligned)
ROW_W1, ROW_W2, ROW_W3 = 0, 32, 64    # W1 (F,H1), W2 (H1,H2), W3 (H2,DOUT)
ROW_E1, ROW_E2, ROW_AT = 96, 104, 112 # E1 (DB,F), E2 (DB,F), A^T (DC,F)
ROW_B                  = 120          # [b1 | b2 | b3] packed along lanes
P_ROWS                 = 128

# per-row data slab columns
COL_X, COL_E = 0, F                   # raw counts / mask      (F each)
COL_HB       = 2 * F                  # Beta samples           (DC)
COL_G0       = 2 * F + DC             # Gumbel noise class 0   (DC)
COL_G1       = 2 * F + 2 * DC         # Gumbel noise class 1   (DC)
COL_ZN       = 2 * F + 3 * DC         # z_uni gaussian noise   (DZ) -> ends at 104


def _mish(v):
    sp = jnp.maximum(v, 0.0) + jnp.log(1.0 + jnp.exp(-jnp.abs(v)))   # softplus
    return v * jnp.tanh(sp)


def _sigmoid(t):
    return 0.5 * (jnp.tanh(0.5 * t) + 1.0)


def net_kernel(d_ref, p_ref, o_ref):
    # ---- unpack the per-row data slab (one lane-dense DMA per tile) ----
    x  = d_ref[:, COL_X:COL_X + F]          # raw 'rna' counts
    e  = d_ref[:, COL_E:COL_E + F]          # observation mask
    hb = d_ref[:, COL_HB:COL_HB + DC]       # Beta(beta_a, beta_b) samples
    g0 = d_ref[:, COL_G0:COL_G0 + DC]       # Gumbel noise (class 0)
    g1 = d_ref[:, COL_G1:COL_G1 + DC]       # Gumbel noise (class 1)
    zn = d_ref[:, COL_ZN:COL_ZN + DZ]       # N(0,1) noise for z_uni

    # ---- unpack the (grid-resident) parameter slab ----
    W1 = p_ref[ROW_W1:ROW_W1 + F,  0:H1]
    W2 = p_ref[ROW_W2:ROW_W2 + H1, 0:H2]
    W3 = p_ref[ROW_W3:ROW_W3 + H2, 0:DOUT]
    E1 = p_ref[ROW_E1:ROW_E1 + DB, 0:F]
    E2 = p_ref[ROW_E2:ROW_E2 + DB, 0:F]
    AT = p_ref[ROW_AT:ROW_AT + DC, 0:F]     # A = A_mu + sqrt(A_var)*noise, transposed
    b1 = p_ref[ROW_B:ROW_B + 1, 0:H1]
    b2 = p_ref[ROW_B:ROW_B + 1, H1:H1 + H2]
    b3 = p_ref[ROW_B:ROW_B + 1, H1 + H2:H1 + H2 + DOUT]

    # ---- SCT encoder: preprocess ('rna' -> log1p) + indiv enc + shared enc ----
    h  = jnp.log(1.0 + x) * e
    h1 = _mish(jnp.dot(h,  W1, preferred_element_type=jnp.float32) + b1)
    h2 = _mish(jnp.dot(h1, W2, preferred_element_type=jnp.float32) + b2)
    enc = jnp.dot(h2, W3, preferred_element_type=jnp.float32) + b3
    z_x_mu     = enc[:, 0:DZ]
    z_x_logvar = enc[:, DZ:2 * DZ]
    dd         = enc[:, 2 * DZ:DOUT]        # d_x (+ d_s == 0 since s is None)

    # ---- product of experts with the standard-normal prior expert ----
    # guarded exp(-logvar) with a single EUP exp + approx reciprocal
    u   = -z_x_logvar
    eu  = jnp.exp(-jnp.abs(u))
    T_x = jnp.where(u < 0, eu, pl.reciprocal(eu + EPS12, approx=True))
    inv_T   = pl.reciprocal(T_PRIOR + T_x, approx=True)        # pd_var = 1 / T_sum
    var_eps = inv_T + EPS12
    z_mu     = z_x_mu * T_x * inv_T
    z_logvar = jnp.log(var_eps)

    # eval mode: z = z_mu
    c = z_mu[:, 0:DC]
    b = z_mu[:, DC:DZ]

    # ---- stick breaking: beta = cumprod(hat_beta) (unrolled, VPU-only, no MXU) ----
    col_idx = lax.broadcasted_iota(jnp.int32, hb.shape, 1)
    cp  = hb
    run = hb[:, 0:1]
    for j in range(1, DC):
        run = run * hb[:, j:j + 1]
        cp  = jnp.where(col_idx == j, run, cp)
    beta = cp * (1.0 - EPS10) + EPS10
    # TODO(synk): clamp below 1 for f32 stability (cumprod of Beta(15,1) samples can
    # round to exactly 1.0 in float32, making logit / KL_Ber non-finite upstream).
    beta = jnp.minimum(beta, 1.0 - 1e-6)

    logit_beta_d = jnp.log(beta) - jnp.log(1.0 - beta) + dd
    # TODO(synk): utils.sample_Gumbel_softmax is undefined upstream; modelled as the
    # standard 2-class Gumbel-softmax (tau=1) -> w = class-0 probability.
    w  = _sigmoid(logit_beta_d + g0 - g1)
    p0 = _sigmoid(logit_beta_d)             # deterministic class-0 softmax prob

    # ---- decoder (A pre-sampled + pre-transposed host-side: parameter-only work) ----
    cw    = c * w
    x_r_h = jnp.dot(cw, AT, preferred_element_type=jnp.float32)          # (TM, F)
    bE1   = jnp.exp(jnp.dot(b, E1, preferred_element_type=jnp.float32))
    bE2   = jnp.dot(b, E2, preferred_element_type=jnp.float32)
    x_r_pre = x_r_h * bE1 + bE2             # Poisson log-rate prediction for 'rna'

    # ---- z_uni / cw_all (single modality => per-modality PoE == joint PoE) ----
    z_uni  = z_mu + jnp.sqrt(var_eps) * zn  # exp(0.5*z_logvar) == sqrt(var)
    cw_rna = z_uni[:, 0:DC] * w

    # ================= LossCalculator (per-row contributions) =================
    # recon: PoissonNLLLoss(log_input=True, full=True) * e, summed over features
    t      = x
    t_safe = jnp.where(t > 1.0, t, 1.0)
    log_t  = jnp.log(t_safe)
    stirling = jnp.where(t > 1.0, t * log_t - t + 0.5 * (LOG_2PI + log_t), 0.0)
    pois   = jnp.exp(x_r_pre) - t * x_r_pre + stirling
    recon_row = jnp.sum(pois * e, axis=-1, keepdims=True)

    # KL(z): c part + 5 * b part;  exp(z_logvar) reconstructed as var_eps (no exp)
    kld_el  = -0.5 * (1.0 + z_logvar - z_mu * z_mu - var_eps)
    kld_row = (jnp.sum(kld_el[:, 0:DC], axis=-1, keepdims=True)
               + 5.0 * jnp.sum(kld_el[:, DC:DZ], axis=-1, keepdims=True))

    # KL(Bernoulli): class-0 softmax prob vs prior beta
    kl_ber = (p0 * jnp.log(p0 / beta + EPS12)
              + (1.0 - p0) * jnp.log((1.0 - p0) / (1.0 - beta) + EPS12))
    ber_row = jnp.sum(kl_ber, axis=-1, keepdims=True)

    # consistency (topo) loss: single modality -> stack equals its mean -> 0
    row_loss = recon_row + kld_row + ber_row

    # ---- single (TM, 128) output slab: 1 lane-dense writeback DMA per tile ----
    o_ref[...] = jnp.zeros(o_ref.shape, jnp.float32)
    o_ref[:, 0:DC]              = cw_rna        # cw_all['rna']
    o_ref[:, DC:2 * DC]         = cw            # cw_all['joint']
    o_ref[:, 2 * DC:2 * DC + 1] = row_loss      # per-row loss contribution


def kl_beta_scalar(beta_a, beta_b):
    # TODO(synk): KL(Beta||Beta) needs digamma/gammaln which have no Pallas lowering;
    # it is parameter-only (all rows identical), so sum((N,DC))/N == sum over one row.
    a, b = beta_a, beta_b
    pa = jnp.full_like(a, ALPHA)
    pb = jnp.ones_like(b)
    kl = (gammaln(a + b) - gammaln(a) - gammaln(b)
          - (gammaln(pa + pb) - gammaln(pa) - gammaln(pb))
          + (a - pa) * digamma(a) + (b - pb) * digamma(b)
          + (pa + pb - a - b) * digamma(a + b))
    return jnp.sum(kl).astype(jnp.float32)


def _pack_params(params, A_comb_T):
    P = jnp.zeros((P_ROWS, SLAB_W), jnp.float32)
    P = P.at[ROW_W1:ROW_W1 + F,  0:H1].set(params['W1'])
    P = P.at[ROW_W2:ROW_W2 + H1, 0:H2].set(params['W2'])
    P = P.at[ROW_W3:ROW_W3 + H2, 0:DOUT].set(params['W3'])
    P = P.at[ROW_E1:ROW_E1 + DB, 0:F].set(params['E1'])
    P = P.at[ROW_E2:ROW_E2 + DB, 0:F].set(params['E2'])
    P = P.at[ROW_AT:ROW_AT + DC, 0:F].set(A_comb_T)
    P = P.at[ROW_B:ROW_B + 1, 0:H1].set(params['b1'])
    P = P.at[ROW_B:ROW_B + 1, H1:H1 + H2].set(params['b2'])
    P = P.at[ROW_B:ROW_B + 1, H1 + H2:H1 + H2 + DOUT].set(params['b3'])
    return P


def _pack_data(x, e, noises):
    nb = x.shape[0]
    used = 2 * F + 3 * DC + DZ
    pad = jnp.zeros((nb, SLAB_W - used), jnp.float32)
    return jnp.concatenate(
        [x, e, noises['hat_beta'], noises['g0'], noises['g1'], noises['z_uni'], pad],
        axis=1)


@jax.jit
def net_forward(params, x, e, noises):
    nb = x.shape[0]
    assert nb % TM == 0, "batch must be a multiple of the row tile"

    # parameter-only glue moved host-side (decoder A sample + transpose)
    A_comb_T = jnp.transpose(params['A_mu'] + math.sqrt(A_VAR) * noises['A_noise'])
    pslab = _pack_params(params, A_comb_T)
    dslab = _pack_data(x, e, noises)

    out = pl.pallas_call(
        net_kernel,
        out_shape=jax.ShapeDtypeStruct((nb, SLAB_W), jnp.float32),
        grid=(nb // TM,),
        in_specs=[pl.BlockSpec((TM, SLAB_W), lambda i: (i, 0)),
                  pl.BlockSpec((P_ROWS, SLAB_W), lambda i: (0, 0))],
        out_specs=pl.BlockSpec((TM, SLAB_W), lambda i: (i, 0)),
        compiler_params=pltpu.CompilerParams(dimension_semantics=("parallel",)),
    )(dslab, pslab)

    # parameter-only loss terms (host side)
    loss_beta = kl_beta_scalar(params['beta_a'], params['beta_b'])
    loss_A = 0.5 * jnp.sum(params['A_mu'] * params['A_mu'])

    loss = jnp.sum(out[:, 2 * DC]) / nb + loss_beta + loss_A / nb
    cw_all = {'rna': out[:, 0:DC], 'joint': out[:, DC:2 * DC]}
    return loss, cw_all


if __name__ == "__main__":
    key = jax.random.PRNGKey(0)
    ks = jax.random.split(key, 12)

    N_EX = 256    # 2 grid steps of 128 rows -> both TCs busy on v7x

    def linear_init(k, fin, fout):
        kw, kb = jax.random.split(k)
        bound = 1.0 / math.sqrt(fin)
        W = jax.random.uniform(kw, (fin, fout), jnp.float32, -bound, bound)
        b = jax.random.uniform(kb, (1, fout), jnp.float32, -bound, bound)
        return W, b

    W1, b1 = linear_init(ks[0], F, H1)      # x_indiv_enc
    W2, b2 = linear_init(ks[1], H1, H2)     # x_shared_enc hidden
    W3, b3 = linear_init(ks[2], H2, DOUT)   # x_shared_enc out
    # Module initializes A_mu / E1 / E2 to zeros; use small deterministic values
    # here so the decoder matmuls are actually exercised.
    A_mu = 0.1 * jax.random.normal(ks[3], (F, DC), jnp.float32)
    E1   = 0.1 * jax.random.normal(ks[4], (DB, F), jnp.float32)
    E2   = 0.1 * jax.random.normal(ks[5], (DB, F), jnp.float32)
    beta_a = jnp.ones((1, DC), jnp.float32) * ALPHA
    beta_b = jnp.ones((1, DC), jnp.float32)

    params = dict(W1=W1, b1=b1, W2=W2, b2=b2, W3=W3, b3=b3,
                  A_mu=A_mu, E1=E1, E2=E2, beta_a=beta_a, beta_b=beta_b)

    # inputs: raw 'rna' counts x and observation mask e
    x = jax.random.poisson(ks[6], 5.0, (N_EX, F)).astype(jnp.float32)
    e = jax.random.bernoulli(ks[7], 0.9, (N_EX, F)).astype(jnp.float32)

    # stochastic draws (sampling is glue; the kernel consumes the samples)
    noises = dict(
        hat_beta=jax.random.beta(ks[8],
                                 jnp.broadcast_to(beta_a, (N_EX, DC)),
                                 jnp.broadcast_to(beta_b, (N_EX, DC))).astype(jnp.float32),
        g0=jax.random.gumbel(ks[9], (N_EX, DC), jnp.float32),
        g1=jax.random.gumbel(ks[10], (N_EX, DC), jnp.float32),
        A_noise=jax.random.normal(ks[11], (F, DC), jnp.float32),
        z_uni=jax.random.normal(jax.random.fold_in(key, 99), (N_EX, DZ), jnp.float32),
    )

    loss, cw_all = net_forward(params, x, e, noises)
    jax.block_until_ready((loss, cw_all))
    assert bool(jnp.isfinite(loss))
    assert cw_all['rna'].shape == (N_EX, DC) and cw_all['joint'].shape == (N_EX, DC)
    print("KERNEL_OK")
</pallas_src>

<mosaic_0001>
module attributes {stable_mosaic.version = 11 : i64} {
  func.func @net_kernel(%arg0: i32, %arg1: memref<128x128xf32, #tpu.memory_space<vmem>>, %arg2: memref<128x128xf32, #tpu.memory_space<vmem>>, %arg3: memref<128x128xf32, #tpu.memory_space<vmem>>) attributes {dimension_semantics = [#tpu.dimension_semantics<parallel>], iteration_bounds = array<i64: 2>, scalar_prefetch = 0 : i64, scratch_operands = 0 : i64, tpu.core_type = #tpu.core_type<tc>, window_params = [{transform_indices = @transform_0, window_bounds = array<i64: 128, 128>}, {pipeline_mode = #tpu.pipeline_mode<synchronous>, transform_indices = @transform_1, window_bounds = array<i64: 128, 128>}, {transform_indices = @transform_2, window_bounds = array<i64: 128, 128>}]} {
    %c0 = arith.constant 0 : index
    %c0_0 = arith.constant 0 : index
    %0 = vector.load %arg1[%c0, %c0_0] : memref<128x128xf32, #tpu.memory_space<vmem>>, vector<128x32xf32>
    %c0_1 = arith.constant 0 : index
    %c32 = arith.constant 32 : index
    %1 = vector.load %arg1[%c0_1, %c32] : memref<128x128xf32, #tpu.memory_space<vmem>>, vector<128x32xf32>
    %c0_2 = arith.constant 0 : index
    %c64 = arith.constant 64 : index
    %2 = vector.load %arg1[%c0_2, %c64] : memref<128x128xf32, #tpu.memory_space<vmem>>, vector<128x8xf32>
    %c0_3 = arith.constant 0 : index
    %c72 = arith.constant 72 : index
    %3 = vector.load %arg1[%c0_3, %c72] : memref<128x128xf32, #tpu.memory_space<vmem>>, vector<128x8xf32>
    %c0_4 = arith.constant 0 : index
    %c80 = arith.constant 80 : index
    %4 = vector.load %arg1[%c0_4, %c80] : memref<128x128xf32, #tpu.memory_space<vmem>>, vector<128x8xf32>
    %c0_5 = arith.constant 0 : index
    %c88 = arith.constant 88 : index
    %5 = vector.load %arg1[%c0_5, %c88] : memref<128x128xf32, #tpu.memory_space<vmem>>, vector<128x16xf32>
    %c0_6 = arith.constant 0 : index
    %c0_7 = arith.constant 0 : index
    %6 = vector.load %arg2[%c0_6, %c0_7] : memref<128x128xf32, #tpu.memory_space<vmem>>, vector<32x32xf32>
    %c32_8 = arith.constant 32 : index
    %c0_9 = arith.constant 0 : index
    %7 = vector.load %arg2[%c32_8, %c0_9] : memref<128x128xf32, #tpu.memory_space<vmem>>, vector<32x32xf32>
    %c64_10 = arith.constant 64 : index
    %c0_11 = arith.constant 0 : index
    %8 = vector.load %arg2[%c64_10, %c0_11] : memref<128x128xf32, #tpu.memory_space<vmem>>, vector<32x40xf32>
    %c96 = arith.constant 96 : index
    %c0_12 = arith.constant 0 : index
    %9 = vector.load %arg2[%c96, %c0_12] : memref<128x128xf32, #tpu.memory_space<vmem>>, vector<8x32xf32>
    %c104 = arith.constant 104 : index
    %c0_13 = arith.constant 0 : index
    %10 = vector.load %arg2[%c104, %c0_13] : memref<128x128xf32, #tpu.memory_space<vmem>>, vector<8x32xf32>
    %c112 = arith.constant 112 : index
    %c0_14 = arith.constant 0 : index
    %11 = vector.load %arg2[%c112, %c0_14] : memref<128x128xf32, #tpu.memory_space<vmem>>, vector<8x32xf32>
    %c120 = arith.constant 120 : index
    %c0_15 = arith.constant 0 : index
    %12 = vector.load %arg2[%c120, %c0_15] : memref<128x128xf32, #tpu.memory_space<vmem>>, vector<1x32xf32>
    %c120_16 = arith.constant 120 : index
    %c32_17 = arith.constant 32 : index
    %13 = vector.load %arg2[%c120_16, %c32_17] : memref<128x128xf32, #tpu.memory_space<vmem>>, vector<1x32xf32>
    %c120_18 = arith.constant 120 : index
    %c64_19 = arith.constant 64 : index
    %14 = vector.load %arg2[%c120_18, %c64_19] : memref<128x128xf32, #tpu.memory_space<vmem>>, vector<1x40xf32>
    %cst = arith.constant 1.000000e+00 : f32
    %15 = vector.broadcast %cst : f32 to vector<128x32xf32>
    %16 = arith.addf %15, %0 : vector<128x32xf32>
    %17 = math.log %16 : vector<128x32xf32>
    %18 = arith.mulf %17, %1 : vector<128x32xf32>
    %cst_20 = arith.constant dense<0.000000e+00> : vector<128x32xf32>
    %19 = tpu.matmul %18, %6, %cst_20 {dimension_numbers = #tpu.dot_dimension_numbers<[1], [0], [0], [1], [0, 0, 1, 1], [], []>} : vector<128x32xf32>, vector<32x32xf32>, vector<128x32xf32> -> vector<128x32xf32>
    %20 = vector.broadcast %12 : vector<1x32xf32> to vector<128x32xf32>
    %21 = arith.addf %19, %20 : vector<128x32xf32>
    %cst_21 = arith.constant 0.000000e+00 : f32
    %22 = vector.broadcast %cst_21 : f32 to vector<128x32xf32>
    %23 = arith.maximumf %21, %22 : vector<128x32xf32>
    %24 = math.absf %21 : vector<128x32xf32>
    %cst_22 = arith.constant 0.000000e+00 : f32
    %25 = vector.broadcast %cst_22 : f32 to vector<128x32xf32>
    %26 = arith.subf %25, %24 : vector<128x32xf32>
    %27 = math.exp %26 : vector<128x32xf32>
    %cst_23 = arith.constant 1.000000e+00 : f32
    %28 = vector.broadcast %cst_23 : f32 to vector<128x32xf32>
    %29 = arith.addf %28, %27 : vector<128x32xf32>
    %30 = math.log %29 : vector<128x32xf32>
    %31 = arith.addf %23, %30 : vector<128x32xf32>
    %32 = math.tanh %31 : vector<128x32xf32>
    %33 = arith.mulf %21, %32 : vector<128x32xf32>
    %cst_24 = arith.constant dense<0.000000e+00> : vector<128x32xf32>
    %34 = tpu.matmul %33, %7, %cst_24 {dimension_numbers = #tpu.dot_dimension_numbers<[1], [0], [0], [1], [0, 0, 1, 1], [], []>} : vector<128x32xf32>, vector<32x32xf32>, vector<128x32xf32> -> vector<128x32xf32>
    %35 = vector.broadcast %13 : vector<1x32xf32> to vector<128x32xf32>
    %36 = arith.addf %34, %35 : vector<128x32xf32>
    %cst_25 = arith.constant 0.000000e+00 : f32
    %37 = vector.broadcast %cst_25 : f32 to vector<128x32xf32>
    %38 = arith.maximumf %36, %37 : vector<128x32xf32>
    %39 = math.absf %36 : vector<128x32xf32>
    %cst_26 = arith.constant 0.000000e+00 : f32
    %40 = vector.broadcast %cst_26 : f32 to vector<128x32xf32>
    %41 = arith.subf %40, %39 : vector<128x32xf32>
    %42 = math.exp %41 : vector<128x32xf32>
    %cst_27 = arith.constant 1.000000e+00 : f32
    %43 = vector.broadcast %cst_27 : f32 to vector<128x32xf32>
    %44 = arith.addf %43, %42 : vector<128x32xf32>
    %45 = math.log %44 : vector<128x32xf32>
    %46 = arith.addf %38, %45 : vector<128x32xf32>
    %47 = math.tanh %46 : vector<128x32xf32>
    %48 = arith.mulf %36, %47 : vector<128x32xf32>
    %cst_28 = arith.constant dense<0.000000e+00> : vector<128x40xf32>
    %49 = tpu.matmul %48, %8, %cst_28 {dimension_numbers = #tpu.dot_dimension_numbers<[1], [0], [0], [1], [0, 0, 1, 1], [], []>} : vector<128x32xf32>, vector<32x40xf32>, vector<128x40xf32> -> vector<128x40xf32>
    %50 = vector.broadcast %14 : vector<1x40xf32> to vector<128x40xf32>
    %51 = arith.addf %49, %50 : vector<128x40xf32>
    %52 = vector.extract_strided_slice %51 {offsets = [0, 0], sizes = [128, 16], strides = [1, 1]} : vector<128x40xf32> to vector<128x16xf32>
    %53 = vector.extract_strided_slice %51 {offsets = [0, 16], sizes = [128, 16], strides = [1, 1]} : vector<128x40xf32> to vector<128x16xf32>
    %54 = vector.extract_strided_slice %51 {offsets = [0, 32], sizes = [128, 8], strides = [1, 1]} : vector<128x40xf32> to vector<128x8xf32>
    %cst_29 = arith.constant 0.000000e+00 : f32
    %55 = vector.broadcast %cst_29 : f32 to vector<128x16xf32>
    %56 = arith.subf %55, %53 : vector<128x16xf32>
    %57 = math.absf %56 : vector<128x16xf32>
    %cst_30 = arith.constant 0.000000e+00 : f32
    %58 = vector.broadcast %cst_30 : f32 to vector<128x16xf32>
    %59 = arith.subf %58, %57 : vector<128x16xf32>
    %60 = math.exp %59 : vector<128x16xf32>
    %cst_31 = arith.constant 0.000000e+00 : f32
    %61 = vector.broadcast %cst_31 : f32 to vector<128x16xf32>
    %62 = arith.cmpf olt, %56, %61 : vector<128x16xf32>
    %cst_32 = arith.constant 9.99999996E-13 : f32
    %63 = vector.broadcast %cst_32 : f32 to vector<128x16xf32>
    %64 = arith.addf %60, %63 : vector<128x16xf32>
    %65 = tpu.reciprocal %64 {approx = true} : vector<128x16xf32> -> vector<128x16xf32>
    %66 = arith.select %62, %60, %65 : vector<128x16xi1>, vector<128x16xf32>
    %cst_33 = arith.constant 1.000000e+00 : f32
    %67 = vector.broadcast %cst_33 : f32 to vector<128x16xf32>
    %68 = arith.addf %67, %66 : vector<128x16xf32>
    %69 = tpu.reciprocal %68 {approx = true} : vector<128x16xf32> -> vector<128x16xf32>
    %cst_34 = arith.constant 9.99999996E-13 : f32
    %70 = vector.broadcast %cst_34 : f32 to vector<128x16xf32>
    %71 = arith.addf %69, %70 : vector<128x16xf32>
    %72 = arith.mulf %52, %66 : vector<128x16xf32>
    %73 = arith.mulf %72, %69 : vector<128x16xf32>
    %74 = math.log %71 : vector<128x16xf32>
    %75 = vector.extract_strided_slice %73 {offsets = [0, 0], sizes = [128, 8], strides = [1, 1]} : vector<128x16xf32> to vector<128x8xf32>
    %76 = vector.extract_strided_slice %73 {offsets = [0, 8], sizes = [128, 8], strides = [1, 1]} : vector<128x16xf32> to vector<128x8xf32>
    %77 = tpu.iota {dimensions = array<i32: 1>} : vector<128x8xi32>
    %78 = vector.extract_strided_slice %2 {offsets = [0, 0], sizes = [128, 1], strides = [1, 1]} : vector<128x8xf32> to vector<128x1xf32>
    %79 = vector.extract_strided_slice %2 {offsets = [0, 1], sizes = [128, 1], strides = [1, 1]} : vector<128x8xf32> to vector<128x1xf32>
    %80 = arith.mulf %78, %79 : vector<128x1xf32>
    %c1_i32 = arith.constant 1 : i32
    %81 = vector.broadcast %c1_i32 : i32 to vector<128x8xi32>
    %82 = arith.cmpi eq, %77, %81 : vector<128x8xi32>
    %83 = vector.shape_cast %80 : vector<128x1xf32> to vector<128x1xf32>
    %84 = vector.broadcast %83 : vector<128x1xf32> to vector<128x8xf32>
    %85 = arith.select %82, %84, %2 : vector<128x8xi1>, vector<128x8xf32>
    %86 = vector.extract_strided_slice %2 {offsets = [0, 2], sizes = [128, 1], strides = [1, 1]} : vector<128x8xf32> to vector<128x1xf32>
    %87 = arith.mulf %80, %86 : vector<128x1xf32>
    %c2_i32 = arith.constant 2 : i32
    %88 = vector.broadcast %c2_i32 : i32 to vector<128x8xi32>
    %89 = arith.cmpi eq, %77, %88 : vector<128x8xi32>
    %90 = vector.shape_cast %87 : vector<128x1xf32> to vector<128x1xf32>
    %91 = vector.broadcast %90 : vector<128x1xf32> to vector<128x8xf32>
    %92 = arith.select %89, %91, %85 : vector<128x8xi1>, vector<128x8xf32>
    %93 = vector.extract_strided_slice %2 {offsets = [0, 3], sizes = [128, 1], strides = [1, 1]} : vector<128x8xf32> to vector<128x1xf32>
    %94 = arith.mulf %87, %93 : vector<128x1xf32>
    %c3_i32 = arith.constant 3 : i32
    %95 = vector.broadcast %c3_i32 : i32 to vector<128x8xi32>
    %96 = arith.cmpi eq, %77, %95 : vector<128x8xi32>
    %97 = vector.shape_cast %94 : vector<128x1xf32> to vector<128x1xf32>
    %98 = vector.broadcast %97 : vector<128x1xf32> to vector<128x8xf32>
    %99 = arith.select %96, %98, %92 : vector<128x8xi1>, vector<128x8xf32>
    %100 = vector.extract_strided_slice %2 {offsets = [0, 4], sizes = [128, 1], strides = [1, 1]} : vector<128x8xf32> to vector<128x1xf32>
    %101 = arith.mulf %94, %100 : vector<128x1xf32>
    %c4_i32 = arith.constant 4 : i32
    %102 = vector.broadcast %c4_i32 : i32 to vector<128x8xi32>
    %103 = arith.cmpi eq, %77, %102 : vector<128x8xi32>
    %104 = vector.shape_cast %101 : vector<128x1xf32> to vector<128x1xf32>
    %105 = vector.broadcast %104 : vector<128x1xf32> to vector<128x8xf32>
    %106 = arith.select %103, %105, %99 : vector<128x8xi1>, vector<128x8xf32>
    %107 = vector.extract_strided_slice %2 {offsets = [0, 5], sizes = [128, 1], strides = [1, 1]} : vector<128x8xf32> to vector<128x1xf32>
    %108 = arith.mulf %101, %107 : vector<128x1xf32>
    %c5_i32 = arith.constant 5 : i32
    %109 = vector.broadcast %c5_i32 : i32 to vector<128x8xi32>
    %110 = arith.cmpi eq, %77, %109 : vector<128x8xi32>
    %111 = vector.shape_cast %108 : vector<128x1xf32> to vector<128x1xf32>
    %112 = vector.broadcast %111 : vector<128x1xf32> to vector<128x8xf32>
    %113 = arith.select %110, %112, %106 : vector<128x8xi1>, vector<128x8xf32>
    %114 = vector.extract_strided_slice %2 {offsets = [0, 6], sizes = [128, 1], strides = [1, 1]} : vector<128x8xf32> to vector<128x1xf32>
    %115 = arith.mulf %108, %114 : vector<128x1xf32>
    %c6_i32 = arith.constant 6 : i32
    %116 = vector.broadcast %c6_i32 : i32 to vector<128x8xi32>
    %117 = arith.cmpi eq, %77, %116 : vector<128x8xi32>
    %118 = vector.shape_cast %115 : vector<128x1xf32> to vector<128x1xf32>
    %119 = vector.broadcast %118 : vector<128x1xf32> to vector<128x8xf32>
    %120 = arith.select %117, %119, %113 : vector<128x8xi1>, vector<128x8xf32>
    %121 = vector.extract_strided_slice %2 {offsets = [0, 7], sizes = [128, 1], strides = [1, 1]} : vector<128x8xf32> to vector<128x1xf32>
    %122 = arith.mulf %115, %121 : vector<128x1xf32>
    %c7_i32 = arith.constant 7 : i32
    %123 = vector.broadcast %c7_i32 : i32 to vector<128x8xi32>
    %124 = arith.cmpi eq, %77, %123 : vector<128x8xi32>
    %125 = vector.shape_cast %122 : vector<128x1xf32> to vector<128x1xf32>
    %126 = vector.broadcast %125 : vector<128x1xf32> to vector<128x8xf32>
    %127 = arith.select %124, %126, %120 : vector<128x8xi1>, vector<128x8xf32>
    %cst_35 = arith.constant 1.000000e+00 : f32
    %128 = vector.broadcast %cst_35 : f32 to vector<128x8xf32>
    %129 = arith.mulf %127, %128 : vector<128x8xf32>
    %cst_36 = arith.constant 1.000000e-10 : f32
    %130 = vector.broadcast %cst_36 : f32 to vector<128x8xf32>
    %131 = arith.addf %129, %130 : vector<128x8xf32>
    %cst_37 = arith.constant 0.999998986 : f32
    %132 = vector.broadcast %cst_37 : f32 to vector<128x8xf32>
    %133 = arith.minimumf %131, %132 : vector<128x8xf32>
    %134 = math.log %133 : vector<128x8xf32>
    %cst_38 = arith.constant 1.000000e+00 : f32
    %135 = vector.broadcast %cst_38 : f32 to vector<128x8xf32>
    %136 = arith.subf %135, %133 : vector<128x8xf32>
    %137 = math.log %136 : vector<128x8xf32>
    %138 = arith.subf %134, %137 : vector<128x8xf32>
    %139 = arith.addf %138, %54 : vector<128x8xf32>
    %140 = arith.addf %139, %3 : vector<128x8xf32>
    %141 = arith.subf %140, %4 : vector<128x8xf32>
    %cst_39 = arith.constant 5.000000e-01 : f32
    %142 = vector.broadcast %cst_39 : f32 to vector<128x8xf32>
    %143 = arith.mulf %142, %141 : vector<128x8xf32>
    %144 = math.tanh %143 : vector<128x8xf32>
    %cst_40 = arith.constant 1.000000e+00 : f32
    %145 = vector.broadcast %cst_40 : f32 to vector<128x8xf32>
    %146 = arith.addf %144, %145 : vector<128x8xf32>
    %cst_41 = arith.constant 5.000000e-01 : f32
    %147 = vector.broadcast %cst_41 : f32 to vector<128x8xf32>
    %148 = arith.mulf %147, %146 : vector<128x8xf32>
    %cst_42 = arith.constant 5.000000e-01 : f32
    %149 = vector.broadcast %cst_42 : f32 to vector<128x8xf32>
    %150 = arith.mulf %149, %139 : vector<128x8xf32>
    %151 = math.tanh %150 : vector<128x8xf32>
    %cst_43 = arith.constant 1.000000e+00 : f32
    %152 = vector.broadcast %cst_43 : f32 to vector<128x8xf32>
    %153 = arith.addf %151, %152 : vector<128x8xf32>
    %cst_44 = arith.constant 5.000000e-01 : f32
    %154 = vector.broadcast %cst_44 : f32 to vector<128x8xf32>
    %155 = arith.mulf %154, %153 : vector<128x8xf32>
    %156 = arith.mulf %75, %148 : vector<128x8xf32>
    %cst_45 = arith.constant dense<0.000000e+00> : vector<128x32xf32>
    %157 = tpu.matmul %156, %11, %cst_45 {dimension_numbers = #tpu.dot_dimension_numbers<[1], [0], [0], [1], [0, 0, 1, 1], [], []>} : vector<128x8xf32>, vector<8x32xf32>, vector<128x32xf32> -> vector<128x32xf32>
    %cst_46 = arith.constant dense<0.000000e+00> : vector<128x32xf32>
    %158 = tpu.matmul %76, %9, %cst_46 {dimension_numbers = #tpu.dot_dimension_numbers<[1], [0], [0], [1], [0, 0, 1, 1], [], []>} : vector<128x8xf32>, vector<8x32xf32>, vector<128x32xf32> -> vector<128x32xf32>
    %159 = math.exp %158 : vector<128x32xf32>
    %cst_47 = arith.constant dense<0.000000e+00> : vector<128x32xf32>
    %160 = tpu.matmul %76, %10, %cst_47 {dimension_numbers = #tpu.dot_dimension_numbers<[1], [0], [0], [1], [0, 0, 1, 1], [], []>} : vector<128x8xf32>, vector<8x32xf32>, vector<128x32xf32> -> vector<128x32xf32>
    %161 = arith.mulf %157, %159 : vector<128x32xf32>
    %162 = arith.addf %161, %160 : vector<128x32xf32>
    %163 = math.sqrt %71 : vector<128x16xf32>
    %164 = arith.mulf %163, %5 : vector<128x16xf32>
    %165 = arith.addf %73, %164 : vector<128x16xf32>
    %166 = vector.extract_strided_slice %165 {offsets = [0, 0], sizes = [128, 8], strides = [1, 1]} : vector<128x16xf32> to vector<128x8xf32>
    %167 = arith.mulf %166, %148 : vector<128x8xf32>
    %cst_48 = arith.constant 1.000000e+00 : f32
    %168 = vector.broadcast %cst_48 : f32 to vector<128x32xf32>
    %169 = arith.cmpf ogt, %0, %168 : vector<128x32xf32>
    %cst_49 = arith.constant 1.000000e+00 : f32
    %170 = vector.broadcast %cst_49 : f32 to vector<128x32xf32>
    %171 = arith.select %169, %0, %170 : vector<128x32xi1>, vector<128x32xf32>
    %172 = math.log %171 : vector<128x32xf32>
    %cst_50 = arith.constant 1.000000e+00 : f32
    %173 = vector.broadcast %cst_50 : f32 to vector<128x32xf32>
    %174 = arith.cmpf ogt, %0, %173 : vector<128x32xf32>
    %175 = arith.mulf %0, %172 : vector<128x32xf32>
    %176 = arith.subf %175, %0 : vector<128x32xf32>
    %cst_51 = arith.constant 1.83787704 : f32
    %177 = vector.broadcast %cst_51 : f32 to vector<128x32xf32>
    %178 = arith.addf %177, %172 : vector<128x32xf32>
    %cst_52 = arith.constant 5.000000e-01 : f32
    %179 = vector.broadcast %cst_52 : f32 to vector<128x32xf32>
    %180 = arith.mulf %179, %178 : vector<128x32xf32>
    %181 = arith.addf %176, %180 : vector<128x32xf32>
    %cst_53 = arith.constant 0.000000e+00 : f32
    %182 = vector.broadcast %cst_53 : f32 to vector<128x32xf32>
    %183 = arith.select %174, %181, %182 : vector<128x32xi1>, vector<128x32xf32>
    %184 = math.exp %162 : vector<128x32xf32>
    %185 = arith.mulf %0, %162 : vector<128x32xf32>
    %186 = arith.subf %184, %185 : vector<128x32xf32>
    %187 = arith.addf %186, %183 : vector<128x32xf32>
    %188 = arith.mulf %187, %1 : vector<128x32xf32>
    %cst_54 = arith.constant dense<0.000000e+00> : vector<128xf32>
    %189 = vector.multi_reduction <add>, %188, %cst_54 [1] : vector<128x32xf32> to vector<128xf32>
    %190 = vector.shape_cast %189 : vector<128xf32> to vector<128x1xf32>
    %cst_55 = arith.constant 1.000000e+00 : f32
    %191 = vector.broadcast %cst_55 : f32 to vector<128x16xf32>
    %192 = arith.addf %191, %74 : vector<128x16xf32>
    %193 = arith.mulf %73, %73 : vector<128x16xf32>
    %194 = arith.subf %192, %193 : vector<128x16xf32>
    %195 = arith.subf %194, %71 : vector<128x16xf32>
    %cst_56 = arith.constant -5.000000e-01 : f32
    %196 = vector.broadcast %cst_56 : f32 to vector<128x16xf32>
    %197 = arith.mulf %196, %195 : vector<128x16xf32>
    %198 = vector.extract_strided_slice %197 {offsets = [0, 0], sizes = [128, 8], strides = [1, 1]} : vector<128x16xf32> to vector<128x8xf32>
    %cst_57 = arith.constant dense<0.000000e+00> : vector<128xf32>
    %199 = vector.multi_reduction <add>, %198, %cst_57 [1] : vector<128x8xf32> to vector<128xf32>
    %200 = vector.shape_cast %199 : vector<128xf32> to vector<128x1xf32>
    %201 = vector.extract_strided_slice %197 {offsets = [0, 8], sizes = [128, 8], strides = [1, 1]} : vector<128x16xf32> to vector<128x8xf32>
    %cst_58 = arith.constant dense<0.000000e+00> : vector<128xf32>
    %202 = vector.multi_reduction <add>, %201, %cst_58 [1] : vector<128x8xf32> to vector<128xf32>
    %203 = vector.shape_cast %202 : vector<128xf32> to vector<128x1xf32>
    %cst_59 = arith.constant 5.000000e+00 : f32
    %204 = vector.broadcast %cst_59 : f32 to vector<128x1xf32>
    %205 = arith.mulf %204, %203 : vector<128x1xf32>
    %206 = arith.addf %200, %205 : vector<128x1xf32>
    %207 = arith.divf %155, %133 : vector<128x8xf32>
    %cst_60 = arith.constant 9.99999996E-13 : f32
    %208 = vector.broadcast %cst_60 : f32 to vector<128x8xf32>
    %209 = arith.addf %207, %208 : vector<128x8xf32>
    %210 = math.log %209 : vector<128x8xf32>
    %211 = arith.mulf %155, %210 : vector<128x8xf32>
    %cst_61 = arith.constant 1.000000e+00 : f32
    %212 = vector.broadcast %cst_61 : f32 to vector<128x8xf32>
    %213 = arith.subf %212, %155 : vector<128x8xf32>
    %cst_62 = arith.constant 1.000000e+00 : f32
    %214 = vector.broadcast %cst_62 : f32 to vector<128x8xf32>
    %215 = arith.subf %214, %155 : vector<128x8xf32>
    %cst_63 = arith.constant 1.000000e+00 : f32
    %216 = vector.broadcast %cst_63 : f32 to vector<128x8xf32>
    %217 = arith.subf %216, %133 : vector<128x8xf32>
    %218 = arith.divf %215, %217 : vector<128x8xf32>
    %cst_64 = arith.constant 9.99999996E-13 : f32
    %219 = vector.broadcast %cst_64 : f32 to vector<128x8xf32>
    %220 = arith.addf %218, %219 : vector<128x8xf32>
    %221 = math.log %220 : vector<128x8xf32>
    %222 = arith.mulf %213, %221 : vector<128x8xf32>
    %223 = arith.addf %211, %222 : vector<128x8xf32>
    %cst_65 = arith.constant dense<0.000000e+00> : vector<128xf32>
    %224 = vector.multi_reduction <add>, %223, %cst_65 [1] : vector<128x8xf32> to vector<128xf32>
    %225 = vector.shape_cast %224 : vector<128xf32> to vector<128x1xf32>
    %226 = arith.addf %190, %206 : vector<128x1xf32>
    %227 = arith.addf %226, %225 : vector<128x1xf32>
    %cst_66 = arith.constant 0.000000e+00 : f32
    %228 = vector.broadcast %cst_66 : f32 to vector<128x128xf32>
    %c0_67 = arith.constant 0 : index
    %c0_68 = arith.constant 0 : index
    %229 = vector.load %arg3[%c0_67, %c0_68] : memref<128x128xf32, #tpu.memory_space<vmem>>, vector<128x128xf32>
    tpu.vector_store %arg3[%c0_67, %c0_68], %228 {strides = array<i32>} : memref<128x128xf32, #tpu.memory_space<vmem>>, vector<128x128xf32>,
    %c0_69 = arith.constant 0 : index
    %c0_70 = arith.constant 0 : index
    %230 = vector.load %arg3[%c0_69, %c0_70] : memref<128x128xf32, #tpu.memory_space<vmem>>, vector<128x8xf32>
    tpu.vector_store %arg3[%c0_69, %c0_70], %167 {strides = array<i32>} : memref<128x128xf32, #tpu.memory_space<vmem>>, vector<128x8xf32>,
    %c0_71 = arith.constant 0 : index
    %c8 = arith.constant 8 : index
    %231 = vector.load %arg3[%c0_71, %c8] : memref<128x128xf32, #tpu.memory_space<vmem>>, vector<128x8xf32>
    tpu.vector_store %arg3[%c0_71, %c8], %156 {strides = array<i32>} : memref<128x128xf32, #tpu.memory_space<vmem>>, vector<128x8xf32>,
    %c0_72 = arith.constant 0 : index
    %c16 = arith.constant 16 : index
    %232 = vector.load %arg3[%c0_72, %c16] : memref<128x128xf32, #tpu.memory_space<vmem>>, vector<128x1xf32>
    tpu.vector_store %arg3[%c0_72, %c16], %227 {strides = array<i32>} : memref<128x128xf32, #tpu.memory_space<vmem>>, vector<128x1xf32>,
    return
  }
  func.func @transform_0(%arg0: i32) -> (i32, i32) {
    %c0_i32 = arith.constant 0 : i32
    %c0_i32_0 = arith.constant 0 : i32
    return %arg0, %c0_i32 : i32, i32
  }
  func.func @transform_1(%arg0: i32) -> (i32, i32) {
    %c0_i32 = arith.constant 0 : i32
    %c0_i32_0 = arith.constant 0 : i32
    %c0_i32_1 = arith.constant 0 : i32
    return %c0_i32, %c0_i32_0 : i32, i32
  }
  func.func @transform_2(%arg0: i32) -> (i32, i32) {
    %c0_i32 = arith.constant 0 : i32
    %c0_i32_0 = arith.constant 0 : i32
    return %arg0, %c0_i32 : i32, i32
  }
}

</mosaic_0001>

<llo_original>
// kernel: net_forward.1
$region0: #{net_forward.1}
  #allocation0 [shape = 'u32[]', space=smem, size = 0x4, offset = 0x4, fixed_abs, tag = 'smem constant byte address 0x4 - core index']
  #allocation1 [shape = 'u32[144,128]{1,0:T(1,128)}', space=vmem, size = 0x12000, scoped, tag = 'internal scratch']
  %s0 = inlined_call_operand.vmem [shape: f32[256,128], index: 0, kind: input, shape index: {}]
  %s1 = inlined_call_operand.vmem [shape: f32[128,128], index: 1, kind: input, shape index: {}]
  %s2 = inlined_call_operand.vmem [shape: f32[256,128], index: 2, kind: output, shape index: {}]
  %s3 = sld [smem:[#allocation0]]
  $region41: #{net_forward.1} parent=0
    _
  %s5 = ssub.s32 1, %s3
  %s6 = scalar_select 0, %s5, %s3
  loop: start=0, step=1, limit=4
  $region2: #{net_forward.1} parent=0 // loop_pre_header
    _
  $region3: #{net_forward.1} parent=0 // loop_header
    %s8 = sphi 0, %s12
    %p9 = scmp.ge.s32.totalorder %s8, 4
    %s18 = sphi 0, %s20
    %s21 = sphi 0, %s18
    %s22 = sphi 0, %s21
    %s38 = sphi 0, %s22
    %s42 = sphi 0, %s42
    %s44 = sphi 0, %s42
    %s45 = sphi 0, %s44
    %s59 = sphi 0, %s45
    %s65 = sphi 0, %s67
    %s68 = sphi 0, %s65
    %s69 = sphi 0, %s68
    %s85 = sphi 0, %s69
  $region4: #{net_forward.1} parent=0 // loop_header_branch
    %11 = sbr.rel (%p9) target = $region8
  $region5: #{net_forward.1} parent=0 // loop_body
    %s13 = ssub.s32 %s8, 1
    %s14 = ssub.s32 %s8, 2
    %s15 = sadd.s32 %s8, 1
    %s16 = ssub.s32 %s8, %s15
    %p17 = scmp.eq.s32.totalorder %s16, 0
    %s19 = sadd.s32 %s18, 1
    %s20 = scalar_select %p17, %s18, %s19
    %p23 = pneg %p17
    %p24 = scmp.eq.s32.totalorder %s8, 1
    %p25 = por %p23, %p24
    %p26 = scmp.ne.s32.totalorder %s18, %s21
    %p27 = scmp.eq.s32.totalorder %s8, 0
    %p28 = por %p26, %p27
    %p29 = scmp.ne.s32.totalorder %s18, %s21
    %p30 = scmp.eq.s32.totalorder %s13, 1
    %p31 = por %p29, %p30
    %p32 = scmp.ne.s32.totalorder %s21, %s22
    %p33 = scmp.eq.s32.totalorder %s13, 0
    %p34 = por %p32, %p33
    %p35 = scmp.ne.s32.totalorder %s21, %s22
    %p36 = scmp.eq.s32.totalorder %s14, 1
    %p37 = por %p35, %p36
    %p39 = scmp.ne.s32.totalorder %s22, %s38
    %p40 = scmp.eq.s32.totalorder %s14, 0
    %p41 = por %p39, %p40
    %s43 = sadd.s32 %s42, 1
    %p46 = scmp.eq.s32.totalorder %s8, 1
    %p47 = scmp.ne.s32.totalorder %s42, %s44
    %p48 = scmp.eq.s32.totalorder %s8, 0
    %p49 = por %p47, %p48
    %p50 = scmp.ne.s32.totalorder %s42, %s44
    %p51 = scmp.eq.s32.totalorder %s13, 1
    %p52 = por %p50, %p51
    %p53 = scmp.ne.s32.totalorder %s44, %s45
    %p54 = scmp.eq.s32.totalorder %s13, 0
    %p55 = por %p53, %p54
    %p56 = scmp.ne.s32.totalorder %s44, %s45
    %p57 = scmp.eq.s32.totalorder %s14, 1
    %p58 = por %p56, %p57
    %p60 = scmp.ne.s32.totalorder %s45, %s59
    %p61 = scmp.eq.s32.totalorder %s14, 0
    %p62 = por %p60, %p61
    %s63 = ssub.s32 %s8, %s15
    %p64 = scmp.eq.s32.totalorder %s63, 0
    %s66 = sadd.s32 %s65, 1
    %s67 = scalar_select %p64, %s65, %s66
    %p70 = pneg %p64
    %p71 = scmp.eq.s32.totalorder %s8, 1
    %p72 = por %p70, %p71
    %p73 = scmp.ne.s32.totalorder %s65, %s68
    %p74 = scmp.eq.s32.totalorder %s8, 0
    %p75 = por %p73, %p74
    %p76 = scmp.ne.s32.totalorder %s65, %s68
    %p77 = scmp.eq.s32.totalorder %s13, 1
    %p78 = por %p76, %p77
    %p79 = scmp.ne.s32.totalorder %s68, %s69
    %p80 = scmp.eq.s32.totalorder %s13, 0
    %p81 = por %p79, %p80
    %p82 = scmp.ne.s32.totalorder %s68, %s69
    %p83 = scmp.eq.s32.totalorder %s14, 1
    %p84 = por %p82, %p83
    %p86 = scmp.ne.s32.totalorder %s69, %s85
    %p87 = scmp.eq.s32.totalorder %s14, 0
    %p88 = por %p86, %p87
    %p89 = scmp.le.s32.totalorder 1, %s8
    %p90 = scmp.lt.s32.totalorder %s8, 3
    %p91 = pnand %p89, %p90
    %p92 = pneg %p91
    // Predicated region
    $region9: #{net_forward.1} parent=5 // pred_check
      _
    $region10: #{net_forward.1} parent=5 // pred_check_branch
      %94 = sbr.rel (%p91) target = $region12
    $region11: #{net_forward.1} parent=5 // pred_region
      %s95 = ssub.s32 %s8, 1
      // Predicated region
      $region13: #{net_forward.1} parent=11 // pred_check
        %p96 = pneg %p55
      $region14: #{net_forward.1} parent=11 // pred_check_branch
        %98 = sbr.rel (%p96) target = $region16
      $region15: #{net_forward.1} parent=11 // pred_region
        _
      $region16: #{net_forward.1} parent=11 // pred_fallthru
        _
    $region12: #{net_forward.1} parent=5 // pred_fallthru
      _
    %p99 = scmp.lt.s32.totalorder %s8, 2
    // Predicated region
    $region17: #{net_forward.1} parent=5 // pred_check
      %p100 = pneg %p99
    $region18: #{net_forward.1} parent=5 // pred_check_branch
      %102 = sbr.rel (%p100) target = $region20
    $region19: #{net_forward.1} parent=5 // pred_region
      // Predicated region
      $region21: #{net_forward.1} parent=19 // pred_check
        %p103 = pneg %p28
      $region22: #{net_forward.1} parent=19 // pred_check_branch
        %105 = sbr.rel (%p103) target = $region24
      $region23: #{net_forward.1} parent=19 // pred_region
        %s106 = smul.u32 16, %s8
        %p107 = scmp.lt.s32.totalorder %s106, 31
        %s108 = scalar_select %p107, %s106, 31
        %s109 = smul.addr %s108, 8
        %s110 = scalar_lea.vmem %s0, %s109
        %s111 = smul.u32 16, %s8
      $region24: #{net_forward.1} parent=19 // pred_fallthru
        _
    $region20: #{net_forward.1} parent=5 // pred_fallthru
      _
    %p112 = scmp.le.s32.totalorder 1, %s8
    %p113 = scmp.lt.s32.totalorder %s8, 3
    %p114 = pnand %p112, %p113
    %p115 = pneg %p114
    // Predicated region
    $region25: #{net_forward.1} parent=5 // pred_check
      _
    $region26: #{net_forward.1} parent=5 // pred_check_branch
      %117 = sbr.rel (%p114) target = $region28
    $region27: #{net_forward.1} parent=5 // pred_region
      %s118 = ssub.s32 %s8, 1
      %s119 = smul.u32 16, %s13
      %p120 = scmp.lt.s32.totalorder %s119, 31
      %s121 = scalar_select %p120, %s119, 31
      %s122 = smul.addr %s121, 8
      %s123 = scalar_lea.vmem %s0, %s122
      %p124 = pneg %p34
      %p125 = pneg %p31
      %p126 = pneg %p55
      %p127 = pneg %p52
      %p128 = pneg %p81
      %p129 = pneg %p78
      %s130 = smul.u32 16, %s13
      %p131 = scmp.lt.s32.totalorder %s130, 31
      %s132 = scalar_select %p131, %s130, 31
      %s133 = smul.addr %s132, 8
      %s134 = scalar_lea.vmem %s2, %s133
      %s135 = smul.u32 16, %s13
      %p136 = scmp.lt.s32.totalorder %s135, 31
      %s137 = scalar_select %p136, %s135, 31
      %s138 = smul.addr %s137, 8
      %s139 = scalar_lea.vmem %s0, %s138
      %s140 = smul.u32 16, %s13
      %s141 = smul.u32 16, %s13
      %p142 = scmp.lt.s32.totalorder %s141, 31
      %s143 = scalar_select %p142, %s141, 31
      %s144 = smul.addr %s143, 8
      %s145 = scalar_lea.vmem %s2, %s144
      %s146 = smul.u32 16, %s13
      %v147 = vld [vmem:[%s139] sm:$0xff]
      %v148 = vld [vmem:[%s139 + $0x8] sm:$0xff]
      %v149 = vld [vmem:[%s139 + $0x10] sm:$0xff]
      %v150 = vld [vmem:[%s139 + $0x18] sm:$0xff]
      %v151 = vld [vmem:[%s139 + $0x20] sm:$0xff]
      %v152 = vld [vmem:[%s139 + $0x28] sm:$0xff]
      %v153 = vld [vmem:[%s139 + $0x30] sm:$0xff]
      %v154 = vld [vmem:[%s139 + $0x38] sm:$0xff]
      %v155 = vld [vmem:[%s139 + $0x40] sm:$0xff]
      %v156 = vld [vmem:[%s139 + $0x48] sm:$0xff]
      %v157 = vld [vmem:[%s139 + $0x50] sm:$0xff]
      %v158 = vld [vmem:[%s139 + $0x58] sm:$0xff]
      %v159 = vld [vmem:[%s139 + $0x60] sm:$0xff]
      %v160 = vld [vmem:[%s139 + $0x68] sm:$0xff]
      %v161 = vld [vmem:[%s139 + $0x70] sm:$0xff]
      %v162 = vld [vmem:[%s139 + $0x78] sm:$0xff]
      %v163 = vld [vmem:[%s1] sm:$0xff]
      %v164 = vld [vmem:[%s1 + $0x8] sm:$0xff]
      %v165 = vld [vmem:[%s1 + $0x10] sm:$0xff]
      %v166 = vld [vmem:[%s1 + $0x18] sm:$0xff]
      %v167 = vld [vmem:[%s1 + $0x20] sm:$0xff]
      %v168 = vld [vmem:[%s1 + $0x28] sm:$0xff]
      %v169 = vld [vmem:[%s1 + $0x30] sm:$0xff]
      %v170 = vld [vmem:[%s1 + $0x38] sm:$0xff]
      %v171 = vld [vmem:[%s1 + $0x40] sm:$0xff]
      %v172 = vld [vmem:[%s1 + $0x48] sm:$0xff]
      %v173 = vld [vmem:[%s1 + $0x50] sm:$0xff]
      %v174 = vld [vmem:[%s1 + $0x58] sm:$0xff]
      %v175 = vld [vmem:[%s1 + $0x60] sm:$0xff]
      %v176 = vld [vmem:[%s1 + $0x68] sm:$0xff]
      %v177 = vld [vmem:[%s1 + $0x70] sm:$0xff]
      %v178 = vld [vmem:[%s1 + $0x78] sm:$0x1]
      %v179 = vadd.f32 %v147, 1.0
      %v180 = vadd.f32 %v148, 1.0
      %v181 = vadd.f32 %v149, 1.0
      %v182 = vadd.f32 %v150, 1.0
      %v183 = vadd.f32 %v151, 1.0
      %v184 = vadd.f32 %v152, 1.0
      %v185 = vadd.f32 %v153, 1.0
      %v186 = vadd.f32 %v154, 1.0
      %v187 = vadd.f32 %v155, 1.0
      %v188 = vadd.f32 %v156, 1.0
      %v189 = vadd.f32 %v157, 1.0
      %v190 = vadd.f32 %v158, 1.0
      %v191 = vadd.f32 %v159, 1.0
      %v192 = vadd.f32 %v160, 1.0
      %v193 = vadd.f32 %v161, 1.0
      %v194 = vadd.f32 %v162, 1.0
      %v195 = vlog2.pop %v179
      %v196 = vmul.f32 %v195, 0.6931472
      %v197 = vlog2.pop %v180
      %v198 = vmul.f32 %v197, 0.6931472
      %v199 = vlog2.pop %v181
      %v200 = vmul.f32 %v199, 0.6931472
      %v201 = vlog2.pop %v182
      %v202 = vmul.f32 %v201, 0.6931472
      %v203 = vlog2.pop %v183
      %v204 = vmul.f32 %v203, 0.6931472
      %v205 = vlog2.pop %v184
      %v206 = vmul.f32 %v205, 0.6931472
      %v207 = vlog2.pop %v185
      %v208 = vmul.f32 %v207, 0.6931472
      %v209 = vlog2.pop %v186
      %v210 = vmul.f32 %v209, 0.6931472
      %v211 = vlog2.pop %v187
      %v212 = vmul.f32 %v211, 0.6931472
      %v213 = vlog2.pop %v188
      %v214 = vmul.f32 %v213, 0.6931472
      %v215 = vlog2.pop %v189
      %v216 = vmul.f32 %v215, 0.6931472
      %v217 = vlog2.pop %v190
      %v218 = vmul.f32 %v217, 0.6931472
      %v219 = vlog2.pop %v191
      %v220 = vmul.f32 %v219, 0.6931472
      %v221 = vlog2.pop %v192
      %v222 = vmul.f32 %v221, 0.6931472
      %v223 = vlog2.pop %v193
      %v224 = vmul.f32 %v223, 0.6931472
      %v225 = vlog2.pop %v194
      %v226 = vmul.f32 %v225, 0.6931472
      %243 = vrot.lane.b32.xlu0 %v147, 96
      %v244 = vpop.permute.xlu0 %243
      %245 = vrot.lane.b32.xlu0 %v148, 96
      %v246 = vpop.permute.xlu0 %245
      %247 = vrot.lane.b32.xlu0 %v149, 96
      %v248 = vpop.permute.xlu0 %247
      %249 = vrot.lane.b32.xlu0 %v150, 96
      %v250 = vpop.permute.xlu0 %249
      %251 = vrot.lane.b32.xlu0 %v151, 96
      %v252 = vpop.permute.xlu0 %251
      %253 = vrot.lane.b32.xlu0 %v152, 96
      %v254 = vpop.permute.xlu0 %253
      %255 = vrot.lane.b32.xlu0 %v153, 96
      %v256 = vpop.permute.xlu0 %255
      %257 = vrot.lane.b32.xlu0 %v154, 96
      %v258 = vpop.permute.xlu0 %257
      %259 = vrot.lane.b32.xlu0 %v155, 96
      %v260 = vpop.permute.xlu0 %259
      %261 = vrot.lane.b32.xlu0 %v156, 96
      %v262 = vpop.permute.xlu0 %261
      %263 = vrot.lane.b32.xlu0 %v157, 96
      %v264 = vpop.permute.xlu0 %263
      %265 = vrot.lane.b32.xlu0 %v158, 96
      %v266 = vpop.permute.xlu0 %265
      %267 = vrot.lane.b32.xlu0 %v159, 96
      %v268 = vpop.permute.xlu0 %267
      %269 = vrot.lane.b32.xlu0 %v160, 96
      %v270 = vpop.permute.xlu0 %269
      %271 = vrot.lane.b32.xlu0 %v161, 96
      %v272 = vpop.permute.xlu0 %271
      %273 = vrot.lane.b32.xlu0 %v162, 96
      %v274 = vpop.permute.xlu0 %273
      %v291 = vmul.f32 %v196, %v244
      %v292 = vmul.f32 %v198, %v246
      %v293 = vmul.f32 %v200, %v248
      %v294 = vmul.f32 %v202, %v250
      %v295 = vmul.f32 %v204, %v252
      %v296 = vmul.f32 %v206, %v254
      %v297 = vmul.f32 %v208, %v256
      %v298 = vmul.f32 %v210, %v258
      %v299 = vmul.f32 %v212, %v260
      %v300 = vmul.f32 %v214, %v262
      %v301 = vmul.f32 %v216, %v264
      %v302 = vmul.f32 %v218, %v266
      %v303 = vmul.f32 %v220, %v268
      %v304 = vmul.f32 %v222, %v270
      %v305 = vmul.f32 %v224, %v272
      %v306 = vmul.f32 %v226, %v274
      %v307 = vlaneseq
      %v308 = vshrl.u32 %v307, 7
      %v309 = vsub.s32 0, %v308
      %v310 = vrot.slane %v178, %v309
      %vm311 = vcmask 261120
      %v313 = vsel %vm311, %v291, 0
      %v316 = vsel %vm311, %v292, 0
      %v319 = vsel %vm311, %v293, 0
      %v322 = vsel %vm311, %v294, 0
      %v325 = vsel %vm311, %v295, 0
      %v328 = vsel %vm311, %v296, 0
      %v331 = vsel %vm311, %v297, 0
      %v334 = vsel %vm311, %v298, 0
      %v337 = vsel %vm311, %v299, 0
      %v340 = vsel %vm311, %v300, 0
      %v343 = vsel %vm311, %v301, 0
      %v346 = vsel %vm311, %v302, 0
      %v349 = vsel %vm311, %v303, 0
      %v352 = vsel %vm311, %v304, 0
      %v355 = vsel %vm311, %v305, 0
      %v358 = vsel %vm311, %v306, 0
      %360 = vmatprep.subr.mxu0 0.0
      %361 = vmatpush1.msra.mxu0 %v163
      %362 = vmatprep.subr.mxu0 0.0
      %363 = vmatpush1.msra.mxu0 %v164
      %364 = vmatprep.subr.mxu0 0.0
      %365 = vmatpush1.msra.mxu0 %v165
      %366 = vmatprep.subr.mxu0 0.0
      %367 = vmatpush1.msra.mxu0 %v166
      %368 = vmatprep.subr.mxu0 0.0
      %369 = vmatpush1.msra.mxu0 0.0
      %370 = vmatprep.subr.mxu0 0.0
      %371 = vmatpush1.msra.mxu0 0.0
      %372 = vmatprep.subr.mxu0 0.0
      %373 = vmatpush1.msra.mxu0 0.0
      %374 = vmatprep.subr.mxu0 0.0
      %375 = vmatpush1.msra.mxu0 0.0
      %376 = vmatprep.subr.mxu0 0.0
      %377 = vmatpush1.msra.mxu0 0.0
      %378 = vmatprep.subr.mxu0 0.0
      %379 = vmatpush1.msra.mxu0 0.0
      %380 = vmatprep.subr.mxu0 0.0
      %381 = vmatpush1.msra.mxu0 0.0
      %382 = vmatprep.subr.mxu0 0.0
      %383 = vmatpush1.msra.mxu0 0.0
      %384 = vmatprep.subr.mxu0 0.0
      %385 = vmatpush1.msra.mxu0 0.0
      %386 = vmatprep.subr.mxu0 0.0
      %387 = vmatpush1.msra.mxu0 0.0
      %388 = vmatprep.subr.mxu0 0.0
      %389 = vmatpush1.msra.mxu0 0.0
      %390 = vmatprep.subr.mxu0 0.0
      %391 = vmatpush1.msra.mxu0 0.0
      %392 = vmatprep.subr.mxu0 0.0
      %393 = vmatpush1.msra.mxu0 0.0
      %394 = vmatprep.subr.mxu0 0.0
      %395 = vmatpush1.msra.mxu0 0.0
      %396 = vmatprep.subr.mxu0 0.0
      %397 = vmatpush1.msra.mxu0 0.0
      %398 = vmatprep.subr.mxu0 0.0
      %399 = vmatpush1.msra.mxu0 0.0
      %400 = vmatprep.subr.mxu0 0.0
      %401 = vmatpush1.msra.mxu0 0.0
      %402 = vmatprep.subr.mxu0 0.0
      %403 = vmatpush1.msra.mxu0 0.0
      %404 = vmatprep.subr.mxu0 0.0
      %405 = vmatpush1.msra.mxu0 0.0
      %406 = vmatprep.subr.mxu0 0.0
      %407 = vmatpush1.msra.mxu0 0.0
      %408 = vmatprep.subr.mxu0 0.0
      %409 = vmatpush1.msra.mxu0 0.0
      %410 = vmatprep.subr.mxu0 0.0
      %411 = vmatpush1.msra.mxu0 0.0
      %412 = vmatprep.subr.mxu0 0.0
      %413 = vmatpush1.msra.mxu0 0.0
      %414 = vmatprep.subr.mxu0 0.0
      %415 = vmatpush1.msra.mxu0 0.0
      %416 = vmatprep.subr.mxu0 0.0
      %417 = vmatpush1.msra.mxu0 0.0
      %418 = vmatprep.subr.mxu0 0.0
      %419 = vmatpush1.msra.mxu0 0.0
      %420 = vmatprep.subr.mxu0 0.0
      %421 = vmatpush1.msra.mxu0 0.0
      %422 = vmatprep.subr.mxu0 0.0
      %423 = vmatpush1.msra.mxu0 0.0
      %424 = vmatprep.mubr.f32.mxu0 0.0
      %425 = vmatmul.mubr.f32.gmra.mrb[0].mxu0 %v313
      %v426 = vpop.f32.mrb[0].mxu0
      %v427 = vadd.f32 %v310, %v426
      %v428 = vpop.f32.mrb[0].mxu0
      %429 = vmatprep.mubr.f32.mxu0 0.0
      %430 = vmatmul.mubr.f32.gmra.mrb[0].mxu0 %v316
      %v431 = vpop.f32.mrb[0].mxu0
      %v432 = vadd.f32 %v310, %v431
      %v433 = vpop.f32.mrb[0].mxu0
      %434 = vmatprep.mubr.f32.mxu0 0.0
      %435 = vmatmul.mubr.f32.gmra.mrb[0].mxu0 %v319
      %v436 = vpop.f32.mrb[0].mxu0
      %v437 = vadd.f32 %v310, %v436
      %v438 = vpop.f32.mrb[0].mxu0
      %439 = vmatprep.mubr.f32.mxu0 0.0
      %440 = vmatmul.mubr.f32.gmra.mrb[0].mxu0 %v322
      %v441 = vpop.f32.mrb[0].mxu0
      %v442 = vadd.f32 %v310, %v441
      %v443 = vpop.f32.mrb[0].mxu0
      %444 = vmatprep.mubr.f32.mxu0 0.0
      %445 = vmatmul.mubr.f32.gmra.mrb[0].mxu0 %v325
      %v446 = vpop.f32.mrb[0].mxu0
      %v447 = vadd.f32 %v310, %v446
      %v448 = vpop.f32.mrb[0].mxu0
      %449 = vmatprep.mubr.f32.mxu0 0.0
      %450 = vmatmul.mubr.f32.gmra.mrb[0].mxu0 %v328
      %v451 = vpop.f32.mrb[0].mxu0
      %v452 = vadd.f32 %v310, %v451
      %v453 = vpop.f32.mrb[0].mxu0
      %454 = vmatprep.mubr.f32.mxu0 0.0
      %455 = vmatmul.mubr.f32.gmra.mrb[0].mxu0 %v331
      %v456 = vpop.f32.mrb[0].mxu0
      %v457 = vadd.f32 %v310, %v456
      %v458 = vpop.f32.mrb[0].mxu0
      %459 = vmatprep.mubr.f32.mxu0 0.0
      %460 = vmatmul.mubr.f32.gmra.mrb[0].mxu0 %v334
      %v461 = vpop.f32.mrb[0].mxu0
      %v462 = vadd.f32 %v310, %v461
      %v463 = vpop.f32.mrb[0].mxu0
      %464 = vmatprep.mubr.f32.mxu0 0.0
      %465 = vmatmul.mubr.f32.gmra.mrb[0].mxu0 %v337
      %v466 = vpop.f32.mrb[0].mxu0
      %v467 = vadd.f32 %v310, %v466
      %v468 = vpop.f32.mrb[0].mxu0
      %469 = vmatprep.mubr.f32.mxu0 0.0
      %470 = vmatmul.mubr.f32.gmra.mrb[0].mxu0 %v340
      %v471 = vpop.f32.mrb[0].mxu0
      %v472 = vadd.f32 %v310, %v471
      %v473 = vpop.f32.mrb[0].mxu0
      %474 = vmatprep.mubr.f32.mxu0 0.0
      %475 = vmatmul.mubr.f32.gmra.mrb[0].mxu0 %v343
      %v476 = vpop.f32.mrb[0].mxu0
      %v477 = vadd.f32 %v310, %v476
      %v478 = vpop.f32.mrb[0].mxu0
      %479 = vmatprep.mubr.f32.mxu0 0.0
      %480 = vmatmul.mubr.f32.gmra.mrb[0].mxu0 %v346
      %v481 = vpop.f32.mrb[0].mxu0
      %v482 = vadd.f32 %v310, %v481
      %v483 = vpop.f32.mrb[0].mxu0
      %484 = vmatprep.mubr.f32.mxu0 0.0
      %485 = vmatmul.mubr.f32.gmra.mrb[0].mxu0 %v349
      %v486 = vpop.f32.mrb[0].mxu0
      %v487 = vadd.f32 %v310, %v486
      %v488 = vpop.f32.mrb[0].mxu0
      %489 = vmatprep.mubr.f32.mxu0 0.0
      %490 = vmatmul.mubr.f32.gmra.mrb[0].mxu0 %v352
      %v491 = vpop.f32.mrb[0].mxu0
      %v492 = vadd.f32 %v310, %v491
      %v493 = vpop.f32.mrb[0].mxu0
      %494 = vmatprep.mubr.f32.mxu0 0.0
      %495 = vmatmul.mubr.f32.gmra.mrb[0].mxu0 %v355
      %v496 = vpop.f32.mrb[0].mxu0
      %v497 = vadd.f32 %v310, %v496
      %v498 = vpop.f32.mrb[0].mxu0
      %499 = vmatprep.mubr.f32.mxu0 0.0
      %500 = vmatmul.mubr.f32.gmra.mrb[0].mxu0 %v358
      %v501 = vpop.f32.mrb[0].mxu0
      %v502 = vadd.f32 %v310, %v501
      %v503 = vpop.f32.mrb[0].mxu0
      %504 = vdwg.mxu0
      %v505 = vmax.f32 %v427, 0.0
      %v506 = vmax.f32 %v432, 0.0
      %v507 = vmax.f32 %v437, 0.0
      %v508 = vmax.f32 %v442, 0.0
      %v509 = vmax.f32 %v447, 0.0
      %v510 = vmax.f32 %v452, 0.0
      %v511 = vmax.f32 %v457, 0.0
      %v512 = vmax.f32 %v462, 0.0
      %v513 = vmax.f32 %v467, 0.0
      %v514 = vmax.f32 %v472, 0.0
      %v515 = vmax.f32 %v477, 0.0
      %v516 = vmax.f32 %v482, 0.0
      %v517 = vmax.f32 %v487, 0.0
      %v518 = vmax.f32 %v492, 0.0
      %v519 = vmax.f32 %v497, 0.0
      %v520 = vmax.f32 %v502, 0.0
      %v521 = vand.u32 2147483647, %v427
      %v522 = vand.u32 2147483647, %v432
      %v523 = vand.u32 2147483647, %v437
      %v524 = vand.u32 2147483647, %v442
      %v525 = vand.u32 2147483647, %v447
      %v526 = vand.u32 2147483647, %v452
      %v527 = vand.u32 2147483647, %v457
      %v528 = vand.u32 2147483647, %v462
      %v529 = vand.u32 2147483647, %v467
      %v530 = vand.u32 2147483647, %v472
      %v531 = vand.u32 2147483647, %v477
      %v532 = vand.u32 2147483647, %v482
      %v533 = vand.u32 2147483647, %v487
      %v534 = vand.u32 2147483647, %v492
      %v535 = vand.u32 2147483647, %v497
      %v536 = vand.u32 2147483647, %v502
      %v537 = vsub.f32 0.0, %v521
      %v538 = vsub.f32 0.0, %v522
      %v539 = vsub.f32 0.0, %v523
      %v540 = vsub.f32 0.0, %v524
      %v541 = vsub.f32 0.0, %v525
      %v542 = vsub.f32 0.0, %v526
      %v543 = vsub.f32 0.0, %v527
      %v544 = vsub.f32 0.0, %v528
      %v545 = vsub.f32 0.0, %v529
      %v546 = vsub.f32 0.0, %v530
      %v547 = vsub.f32 0.0, %v531
      %v548 = vsub.f32 0.0, %v532
      %v549 = vsub.f32 0.0, %v533
      %v550 = vsub.f32 0.0, %v534
      %v551 = vsub.f32 0.0, %v535
      %v552 = vsub.f32 0.0, %v536
      %v553 = vmul.f32 %v537, 1.442695
      %v554 = vpow.pop %v553
      %v555 = vmul.f32 %v538, 1.442695
      %v556 = vpow.pop %v555
      %v557 = vmul.f32 %v539, 1.442695
      %v558 = vpow.pop %v557
      %v559 = vmul.f32 %v540, 1.442695
      %v560 = vpow.pop %v559
      %v561 = vmul.f32 %v541, 1.442695
      %v562 = vpow.pop %v561
      %v563 = vmul.f32 %v542, 1.442695
      %v564 = vpow.pop %v563
      %v565 = vmul.f32 %v543, 1.442695
      %v566 = vpow.pop %v565
      %v567 = vmul.f32 %v544, 1.442695
      %v568 = vpow.pop %v567
      %v569 = vmul.f32 %v545, 1.442695
      %v570 = vpow.pop %v569
      %v571 = vmul.f32 %v546, 1.442695
      %v572 = vpow.pop %v571
      %v573 = vmul.f32 %v547, 1.442695
      %v574 = vpow.pop %v573
      %v575 = vmul.f32 %v548, 1.442695
      %v576 = vpow.pop %v575
      %v577 = vmul.f32 %v549, 1.442695
      %v578 = vpow.pop %v577
      %v579 = vmul.f32 %v550, 1.442695
      %v580 = vpow.pop %v579
      %v581 = vmul.f32 %v551, 1.442695
      %v582 = vpow.pop %v581
      %v583 = vmul.f32 %v552, 1.442695
      %v584 = vpow.pop %v583
      %v585 = vadd.f32 %v554, 1.0
      %v586 = vadd.f32 %v556, 1.0
      %v587 = vadd.f32 %v558, 1.0
      %v588 = vadd.f32 %v560, 1.0
      %v589 = vadd.f32 %v562, 1.0
      %v590 = vadd.f32 %v564, 1.0
      %v591 = vadd.f32 %v566, 1.0
      %v592 = vadd.f32 %v568, 1.0
      %v593 = vadd.f32 %v570, 1.0
      %v594 = vadd.f32 %v572, 1.0
      %v595 = vadd.f32 %v574, 1.0
      %v596 = vadd.f32 %v576, 1.0
      %v597 = vadd.f32 %v578, 1.0
      %v598 = vadd.f32 %v580, 1.0
      %v599 = vadd.f32 %v582, 1.0
      %v600 = vadd.f32 %v584, 1.0
      %v601 = vlog2.pop %v585
      %v602 = vmul.f32 %v601, 0.6931472
      %v603 = vlog2.pop %v586
      %v604 = vmul.f32 %v603, 0.6931472
      %v605 = vlog2.pop %v587
      %v606 = vmul.f32 %v605, 0.6931472
      %v607 = vlog2.pop %v588
      %v608 = vmul.f32 %v607, 0.6931472
      %v609 = vlog2.pop %v589
      %v610 = vmul.f32 %v609, 0.6931472
      %v611 = vlog2.pop %v590
      %v612 = vmul.f32 %v611, 0.6931472
      %v613 = vlog2.pop %v591
      %v614 = vmul.f32 %v613, 0.6931472
      %v615 = vlog2.pop %v592
      %v616 = vmul.f32 %v615, 0.6931472
      %v617 = vlog2.pop %v593
      %v618 = vmul.f32 %v617, 0.6931472
      %v619 = vlog2.pop %v594
      %v620 = vmul.f32 %v619, 0.6931472
      %v621 = vlog2.pop %v595
      %v622 = vmul.f32 %v621, 0.6931472
      %v623 = vlog2.pop %v596
      %v624 = vmul.f32 %v623, 0.6931472
      %v625 = vlog2.pop %v597
      %v626 = vmul.f32 %v625, 0.6931472
      %v627 = vlog2.pop %v598
      %v628 = vmul.f32 %v627, 0.6931472
      %v629 = vlog2.pop %v599
      %v630 = vmul.f32 %v629, 0.6931472
      %v631 = vlog2.pop %v600
      %v632 = vmul.f32 %v631, 0.6931472
      %v633 = vadd.f32 %v505, %v602
      %v634 = vadd.f32 %v506, %v604
      %v635 = vadd.f32 %v507, %v606
      %v636 = vadd.f32 %v508, %v608
      %v637 = vadd.f32 %v509, %v610
      %v638 = vadd.f32 %v510, %v612
      %v639 = vadd.f32 %v511, %v614
      %v640 = vadd.f32 %v512, %v616
      %v641 = vadd.f32 %v513, %v618
      %v642 = vadd.f32 %v514, %v620
      %v643 = vadd.f32 %v515, %v622
      %v644 = vadd.f32 %v516, %v624
      %v645 = vadd.f32 %v517, %v626
      %v646 = vadd.f32 %v518, %v628
      %v647 = vadd.f32 %v519, %v630
      %v648 = vadd.f32 %v520, %v632
      %v649 = vtanh.pop %v633
      %v650 = vtanh.pop %v634
      %v651 = vtanh.pop %v635
      %v652 = vtanh.pop %v636
      %v653 = vtanh.pop %v637
      %v654 = vtanh.pop %v638
      %v655 = vtanh.pop %v639
      %v656 = vtanh.pop %v640
      %v657 = vtanh.pop %v641
      %v658 = vtanh.pop %v642
      %v659 = vtanh.pop %v643
      %v660 = vtanh.pop %v644
      %v661 = vtanh.pop %v645
      %v662 = vtanh.pop %v646
      %v663 = vtanh.pop %v647
      %v664 = vtanh.pop %v648
      %v665 = vmul.f32 %v427, %v649
      %v666 = vmul.f32 %v432, %v650
      %v667 = vmul.f32 %v437, %v651
      %v668 = vmul.f32 %v442, %v652
      %v669 = vmul.f32 %v447, %v653
      %v670 = vmul.f32 %v452, %v654
      %v671 = vmul.f32 %v457, %v655
      %v672 = vmul.f32 %v462, %v656
      %v673 = vmul.f32 %v467, %v657
      %v674 = vmul.f32 %v472, %v658
      %v675 = vmul.f32 %v477, %v659
      %v676 = vmul.f32 %v482, %v660
      %v677 = vmul.f32 %v487, %v661
      %v678 = vmul.f32 %v492, %v662
      %v679 = vmul.f32 %v497, %v663
      %v680 = vmul.f32 %v502, %v664
      %682 = vrot.lane.b32.xlu0 %v310, 96
      %v683 = vpop.permute.xlu0 %682
      %v686 = vsel %vm311, %v665, 0
      %v689 = vsel %vm311, %v666, 0
      %v692 = vsel %vm311, %v667, 0
      %v695 = vsel %vm311, %v668, 0
      %v698 = vsel %vm311, %v669, 0
      %v701 = vsel %vm311, %v670, 0
      %v704 = vsel %vm311, %v671, 0
      %v707 = vsel %vm311, %v672, 0
      %v710 = vsel %vm311, %v673, 0
      %v713 = vsel %vm311, %v674, 0
      %v716 = vsel %vm311, %v675, 0
      %v719 = vsel %vm311, %v676, 0
      %v722 = vsel %vm311, %v677, 0
      %v725 = vsel %vm311, %v678, 0
      %v728 = vsel %vm311, %v679, 0
      %v731 = vsel %vm311, %v680, 0
      %733 = vmatprep.subr.mxu0 0.0
      %734 = vmatpush1.msra.mxu0 %v167
      %735 = vmatprep.subr.mxu0 0.0
      %736 = vmatpush1.msra.mxu0 %v168
      %737 = vmatprep.subr.mxu0 0.0
      %738 = vmatpush1.msra.mxu0 %v169
      %739 = vmatprep.subr.mxu0 0.0
      %740 = vmatpush1.msra.mxu0 %v170
      %741 = vmatprep.subr.mxu0 0.0
      %742 = vmatpush1.msra.mxu0 0.0
      %743 = vmatprep.subr.mxu0 0.0
      %744 = vmatpush1.msra.mxu0 0.0
      %745 = vmatprep.subr.mxu0 0.0
      %746 = vmatpush1.msra.mxu0 0.0
      %747 = vmatprep.subr.mxu0 0.0
      %748 = vmatpush1.msra.mxu0 0.0
      %749 = vmatprep.subr.mxu0 0.0
      %750 = vmatpush1.msra.mxu0 0.0
      %751 = vmatprep.subr.mxu0 0.0
      %752 = vmatpush1.msra.mxu0 0.0
      %753 = vmatprep.subr.mxu0 0.0
      %754 = vmatpush1.msra.mxu0 0.0
      %755 = vmatprep.subr.mxu0 0.0
      %756 = vmatpush1.msra.mxu0 0.0
      %757 = vmatprep.subr.mxu0 0.0
      %758 = vmatpush1.msra.mxu0 0.0
      %759 = vmatprep.subr.mxu0 0.0
      %760 = vmatpush1.msra.mxu0 0.0
      %761 = vmatprep.subr.mxu0 0.0
      %762 = vmatpush1.msra.mxu0 0.0
      %763 = vmatprep.subr.mxu0 0.0
      %764 = vmatpush1.msra.mxu0 0.0
      %765 = vmatprep.subr.mxu0 0.0
      %766 = vmatpush1.msra.mxu0 0.0
      %767 = vmatprep.subr.mxu0 0.0
      %768 = vmatpush1.msra.mxu0 0.0
      %769 = vmatprep.subr.mxu0 0.0
      %770 = vmatpush1.msra.mxu0 0.0
      %771 = vmatprep.subr.mxu0 0.0
      %772 = vmatpush1.msra.mxu0 0.0
      %773 = vmatprep.subr.mxu0 0.0
      %774 = vmatpush1.msra.mxu0 0.0
      %775 = vmatprep.subr.mxu0 0.0
      %776 = vmatpush1.msra.mxu0 0.0
      %777 = vmatprep.subr.mxu0 0.0
      %778 = vmatpush1.msra.mxu0 0.0
      %779 = vmatprep.subr.mxu0 0.0
      %780 = vmatpush1.msra.mxu0 0.0
      %781 = vmatprep.subr.mxu0 0.0
      %782 = vmatpush1.msra.mxu0 0.0
      %783 = vmatprep.subr.mxu0 0.0
      %784 = vmatpush1.msra.mxu0 0.0
      %785 = vmatprep.subr.mxu0 0.0
      %786 = vmatpush1.msra.mxu0 0.0
      %787 = vmatprep.subr.mxu0 0.0
      %788 = vmatpush1.msra.mxu0 0.0
      %789 = vmatprep.subr.mxu0 0.0
      %790 = vmatpush1.msra.mxu0 0.0
      %791 = vmatprep.subr.mxu0 0.0
      %792 = vmatpush1.msra.mxu0 0.0
      %793 = vmatprep.subr.mxu0 0.0
      %794 = vmatpush1.msra.mxu0 0.0
      %795 = vmatprep.subr.mxu0 0.0
      %796 = vmatpush1.msra.mxu0 0.0
      %797 = vmatprep.mubr.f32.mxu0 0.0
      %798 = vmatmul.mubr.f32.gmra.mrb[0].mxu0 %v686
      %v799 = vpop.f32.mrb[0].mxu0
      %v800 = vadd.f32 %v683, %v799
      %v801 = vpop.f32.mrb[0].mxu0
      %802 = vmatprep.mubr.f32.mxu0 0.0
      %803 = vmatmul.mubr.f32.gmra.mrb[0].mxu0 %v689
      %v804 = vpop.f32.mrb[0].mxu0
      %v805 = vadd.f32 %v683, %v804
      %v806 = vpop.f32.mrb[0].mxu0
      %807 = vmatprep.mubr.f32.mxu0 0.0
      %808 = vmatmul.mubr.f32.gmra.mrb[0].mxu0 %v692
      %v809 = vpop.f32.mrb[0].mxu0
      %v810 = vadd.f32 %v683, %v809
      %v811 = vpop.f32.mrb[0].mxu0
      %812 = vmatprep.mubr.f32.mxu0 0.0
      %813 = vmatmul.mubr.f32.gmra.mrb[0].mxu0 %v695
      %v814 = vpop.f32.mrb[0].mxu0
      %v815 = vadd.f32 %v683, %v814
      %v816 = vpop.f32.mrb[0].mxu0
      %817 = vmatprep.mubr.f32.mxu0 0.0
      %818 = vmatmul.mubr.f32.gmra.mrb[0].mxu0 %v698
      %v819 = vpop.f32.mrb[0].mxu0
      %v820 = vadd.f32 %v683, %v819
      %v821 = vpop.f32.mrb[0].mxu0
      %822 = vmatprep.mubr.f32.mxu0 0.0
      %823 = vmatmul.mubr.f32.gmra.mrb[0].mxu0 %v701
      %v824 = vpop.f32.mrb[0].mxu0
      %v825 = vadd.f32 %v683, %v824
      %v826 = vpop.f32.mrb[0].mxu0
      %827 = vmatprep.mubr.f32.mxu0 0.0
      %828 = vmatmul.mubr.f32.gmra.mrb[0].mxu0 %v704
      %v829 = vpop.f32.mrb[0].mxu0
      %v830 = vadd.f32 %v683, %v829
      %v831 = vpop.f32.mrb[0].mxu0
      %832 = vmatprep.mubr.f32.mxu0 0.0
      %833 = vmatmul.mubr.f32.gmra.mrb[0].mxu0 %v707
      %v834 = vpop.f32.mrb[0].mxu0
      %v835 = vadd.f32 %v683, %v834
      %v836 = vpop.f32.mrb[0].mxu0
      %837 = vmatprep.mubr.f32.mxu0 0.0
      %838 = vmatmul.mubr.f32.gmra.mrb[0].mxu0 %v710
      %v839 = vpop.f32.mrb[0].mxu0
      %v840 = vadd.f32 %v683, %v839
      %v841 = vpop.f32.mrb[0].mxu0
      %842 = vmatprep.mubr.f32.mxu0 0.0
      %843 = vmatmul.mubr.f32.gmra.mrb[0].mxu0 %v713
      %v844 = vpop.f32.mrb[0].mxu0
      %v845 = vadd.f32 %v683, %v844
      %v846 = vpop.f32.mrb[0].mxu0
      %847 = vmatprep.mubr.f32.mxu0 0.0
      %848 = vmatmul.mubr.f32.gmra.mrb[0].mxu0 %v716
      %v849 = vpop.f32.mrb[0].mxu0
      %v850 = vadd.f32 %v683, %v849
      %v851 = vpop.f32.mrb[0].mxu0
      %852 = vmatprep.mubr.f32.mxu0 0.0
      %853 = vmatmul.mubr.f32.gmra.mrb[0].mxu0 %v719
      %v854 = vpop.f32.mrb[0].mxu0
      %v855 = vadd.f32 %v683, %v854
      %v856 = vpop.f32.mrb[0].mxu0
      %857 = vmatprep.mubr.f32.mxu0 0.0
      %858 = vmatmul.mubr.f32.gmra.mrb[0].mxu0 %v722
      %v859 = vpop.f32.mrb[0].mxu0
      %v860 = vadd.f32 %v683, %v859
      %v861 = vpop.f32.mrb[0].mxu0
      %862 = vmatprep.mubr.f32.mxu0 0.0
      %863 = vmatmul.mubr.f32.gmra.mrb[0].mxu0 %v725
      %v864 = vpop.f32.mrb[0].mxu0
      %v865 = vadd.f32 %v683, %v864
      %v866 = vpop.f32.mrb[0].mxu0
      %867 = vmatprep.mubr.f32.mxu0 0.0
      %868 = vmatmul.mubr.f32.gmra.mrb[0].mxu0 %v728
      %v869 = vpop.f32.mrb[0].mxu0
      %v870 = vadd.f32 %v683, %v869
      %v871 = vpop.f32.mrb[0].mxu0
      %872 = vmatprep.mubr.f32.mxu0 0.0
      %873 = vmatmul.mubr.f32.gmra.mrb[0].mxu0 %v731
      %v874 = vpop.f32.mrb[0].mxu0
      %v875 = vadd.f32 %v683, %v874
      %v876 = vpop.f32.mrb[0].mxu0
      %877 = vdwg.mxu0
      %v878 = vmax.f32 %v800, 0.0
      %v879 = vmax.f32 %v805, 0.0
      %v880 = vmax.f32 %v810, 0.0
      %v881 = vmax.f32 %v815, 0.0
      %v882 = vmax.f32 %v820, 0.0
      %v883 = vmax.f32 %v825, 0.0
      %v884 = vmax.f32 %v830, 0.0
      %v885 = vmax.f32 %v835, 0.0
      %v886 = vmax.f32 %v840, 0.0
      %v887 = vmax.f32 %v845, 0.0
      %v888 = vmax.f32 %v850, 0.0
      %v889 = vmax.f32 %v855, 0.0
      %v890 = vmax.f32 %v860, 0.0
      %v891 = vmax.f32 %v865, 0.0
      %v892 = vmax.f32 %v870, 0.0
      %v893 = vmax.f32 %v875, 0.0
      %v894 = vand.u32 2147483647, %v800
      %v895 = vand.u32 2147483647, %v805
      %v896 = vand.u32 2147483647, %v810
      %v897 = vand.u32 2147483647, %v815
      %v898 = vand.u32 2147483647, %v820
      %v899 = vand.u32 2147483647, %v825
      %v900 = vand.u32 2147483647, %v830
      %v901 = vand.u32 2147483647, %v835
      %v902 = vand.u32 2147483647, %v840
      %v903 = vand.u32 2147483647, %v845
      %v904 = vand.u32 2147483647, %v850
      %v905 = vand.u32 2147483647, %v855
      %v906 = vand.u32 2147483647, %v860
      %v907 = vand.u32 2147483647, %v865
      %v908 = vand.u32 2147483647, %v870
      %v909 = vand.u32 2147483647, %v875
      %v910 = vsub.f32 0.0, %v894
      %v911 = vsub.f32 0.0, %v895
      %v912 = vsub.f32 0.0, %v896
      %v913 = vsub.f32 0.0, %v897
      %v914 = vsub.f32 0.0, %v898
      %v915 = vsub.f32 0.0, %v899
      %v916 = vsub.f32 0.0, %v900
      %v917 = vsub.f32 0.0, %v901
      %v918 = vsub.f32 0.0, %v902
      %v919 = vsub.f32 0.0, %v903
      %v920 = vsub.f32 0.0, %v904
      %v921 = vsub.f32 0.0, %v905
      %v922 = vsub.f32 0.0, %v906
      %v923 = vsub.f32 0.0, %v907
      %v924 = vsub.f32 0.0, %v908
      %v925 = vsub.f32 0.0, %v909
      %v926 = vmul.f32 %v910, 1.442695
      %v927 = vpow.pop %v926
      %v928 = vmul.f32 %v911, 1.442695
      %v929 = vpow.pop %v928
      %v930 = vmul.f32 %v912, 1.442695
      %v931 = vpow.pop %v930
      %v932 = vmul.f32 %v913, 1.442695
      %v933 = vpow.pop %v932
      %v934 = vmul.f32 %v914, 1.442695
      %v935 = vpow.pop %v934
      %v936 = vmul.f32 %v915, 1.442695
      %v937 = vpow.pop %v936
      %v938 = vmul.f32 %v916, 1.442695
      %v939 = vpow.pop %v938
      %v940 = vmul.f32 %v917, 1.442695
      %v941 = vpow.pop %v940
      %v942 = vmul.f32 %v918, 1.442695
      %v943 = vpow.pop %v942
      %v944 = vmul.f32 %v919, 1.442695
      %v945 = vpow.pop %v944
      %v946 = vmul.f32 %v920, 1.442695
      %v947 = vpow.pop %v946
      %v948 = vmul.f32 %v921, 1.442695
      %v949 = vpow.pop %v948
      %v950 = vmul.f32 %v922, 1.442695
      %v951 = vpow.pop %v950
      %v952 = vmul.f32 %v923, 1.442695
      %v953 = vpow.pop %v952
      %v954 = vmul.f32 %v924, 1.442695
      %v955 = vpow.pop %v954
      %v956 = vmul.f32 %v925, 1.442695
      %v957 = vpow.pop %v956
      %v958 = vadd.f32 %v927, 1.0
      %v959 = vadd.f32 %v929, 1.0
      %v960 = vadd.f32 %v931, 1.0
      %v961 = vadd.f32 %v933, 1.0
      %v962 = vadd.f32 %v935, 1.0
      %v963 = vadd.f32 %v937, 1.0
      %v964 = vadd.f32 %v939, 1.0
      %v965 = vadd.f32 %v941, 1.0
      %v966 = vadd.f32 %v943, 1.0
      %v967 = vadd.f32 %v945, 1.0
      %v968 = vadd.f32 %v947, 1.0
      %v969 = vadd.f32 %v949, 1.0
      %v970 = vadd.f32 %v951, 1.0
      %v971 = vadd.f32 %v953, 1.0
      %v972 = vadd.f32 %v955, 1.0
      %v973 = vadd.f32 %v957, 1.0
      %v974 = vlog2.pop %v958
      %v975 = vmul.f32 %v974, 0.6931472
      %v976 = vlog2.pop %v959
      %v977 = vmul.f32 %v976, 0.6931472
      %v978 = vlog2.pop %v960
      %v979 = vmul.f32 %v978, 0.6931472
      %v980 = vlog2.pop %v961
      %v981 = vmul.f32 %v980, 0.6931472
      %v982 = vlog2.pop %v962
      %v983 = vmul.f32 %v982, 0.6931472
      %v984 = vlog2.pop %v963
      %v985 = vmul.f32 %v984, 0.6931472
      %v986 = vlog2.pop %v964
      %v987 = vmul.f32 %v986, 0.6931472
      %v988 = vlog2.pop %v965
      %v989 = vmul.f32 %v988, 0.6931472
      %v990 = vlog2.pop %v966
      %v991 = vmul.f32 %v990, 0.6931472
      %v992 = vlog2.pop %v967
      %v993 = vmul.f32 %v992, 0.6931472
      %v994 = vlog2.pop %v968
      %v995 = vmul.f32 %v994, 0.6931472
      %v996 = vlog2.pop %v969
      %v997 = vmul.f32 %v996, 0.6931472
      %v998 = vlog2.pop %v970
      %v999 = vmul.f32 %v998, 0.6931472
      %v1000 = vlog2.pop %v971
      %v1001 = vmul.f32 %v1000, 0.6931472
      %v1002 = vlog2.pop %v972
      %v1003 = vmul.f32 %v1002, 0.6931472
      %v1004 = vlog2.pop %v973
      %v1005 = vmul.f32 %v1004, 0.6931472
      %v1006 = vadd.f32 %v878, %v975
      %v1007 = vadd.f32 %v879, %v977
      %v1008 = vadd.f32 %v880, %v979
      %v1009 = vadd.f32 %v881, %v981
      %v1010 = vadd.f32 %v882, %v983
      %v1011 = vadd.f32 %v883, %v985
      %v1012 = vadd.f32 %v884, %v987
      %v1013 = vadd.f32 %v885, %v989
      %v1014 = vadd.f32 %v886, %v991
      %v1015 = vadd.f32 %v887, %v993
      %v1016 = vadd.f32 %v888, %v995
      %v1017 = vadd.f32 %v889, %v997
      %v1018 = vadd.f32 %v890, %v999
      %v1019 = vadd.f32 %v891, %v1001
      %v1020 = vadd.f32 %v892, %v1003
      %v1021 = vadd.f32 %v893, %v1005
      %v1022 = vtanh.pop %v1006
      %v1023 = vtanh.pop %v1007
      %v1024 = vtanh.pop %v1008
      %v1025 = vtanh.pop %v1009
      %v1026 = vtanh.pop %v1010
      %v1027 = vtanh.pop %v1011
      %v1028 = vtanh.pop %v1012
      %v1029 = vtanh.pop %v1013
      %v1030 = vtanh.pop %v1014
      %v1031 = vtanh.pop %v1015
      %v1032 = vtanh.pop %v1016
      %v1033 = vtanh.pop %v1017
      %v1034 = vtanh.pop %v1018
      %v1035 = vtanh.pop %v1019
      %v1036 = vtanh.pop %v1020
      %v1037 = vtanh.pop %v1021
      %v1038 = vmul.f32 %v800, %v1022
      %v1039 = vmul.f32 %v805, %v1023
      %v1040 = vmul.f32 %v810, %v1024
      %v1041 = vmul.f32 %v815, %v1025
      %v1042 = vmul.f32 %v820, %v1026
      %v1043 = vmul.f32 %v825, %v1027
      %v1044 = vmul.f32 %v830, %v1028
      %v1045 = vmul.f32 %v835, %v1029
      %v1046 = vmul.f32 %v840, %v1030
      %v1047 = vmul.f32 %v845, %v1031
      %v1048 = vmul.f32 %v850, %v1032
      %v1049 = vmul.f32 %v855, %v1033
      %v1050 = vmul.f32 %v860, %v1034
      %v1051 = vmul.f32 %v865, %v1035
      %v1052 = vmul.f32 %v870, %v1036
      %v1053 = vmul.f32 %v875, %v1037
      %1054 = vrot.lane.b32.xlu0 %v310, 64
      %v1055 = vpop.permute.xlu0 %1054
      %v1058 = vsel %vm311, %v1038, 0
      %v1061 = vsel %vm311, %v1039, 0
      %v1064 = vsel %vm311, %v1040, 0
      %v1067 = vsel %vm311, %v1041, 0
      %v1070 = vsel %vm311, %v1042, 0
      %v1073 = vsel %vm311, %v1043, 0
      %v1076 = vsel %vm311, %v1044, 0
      %v1079 = vsel %vm311, %v1045, 0
      %v1082 = vsel %vm311, %v1046, 0
      %v1085 = vsel %vm311, %v1047, 0
      %v1088 = vsel %vm311, %v1048, 0
      %v1091 = vsel %vm311, %v1049, 0
      %v1094 = vsel %vm311, %v1050, 0
      %v1097 = vsel %vm311, %v1051, 0
      %v1100 = vsel %vm311, %v1052, 0
      %v1103 = vsel %vm311, %v1053, 0
      %1105 = vmatprep.subr.mxu0 0.0
      %1106 = vmatpush1.msra.mxu0 %v171
      %1107 = vmatprep.subr.mxu0 0.0
      %1108 = vmatpush1.msra.mxu0 %v172
      %1109 = vmatprep.subr.mxu0 0.0
      %1110 = vmatpush1.msra.mxu0 %v173
      %1111 = vmatprep.subr.mxu0 0.0
      %1112 = vmatpush1.msra.mxu0 %v174
      %1113 = vmatprep.subr.mxu0 0.0
      %1114 = vmatpush1.msra.mxu0 0.0
      %1115 = vmatprep.subr.mxu0 0.0
      %1116 = vmatpush1.msra.mxu0 0.0
      %1117 = vmatprep.subr.mxu0 0.0
      %1118 = vmatpush1.msra.mxu0 0.0
      %1119 = vmatprep.subr.mxu0 0.0
      %1120 = vmatpush1.msra.mxu0 0.0
      %1121 = vmatprep.subr.mxu0 0.0
      %1122 = vmatpush1.msra.mxu0 0.0
      %1123 = vmatprep.subr.mxu0 0.0
      %1124 = vmatpush1.msra.mxu0 0.0
      %1125 = vmatprep.subr.mxu0 0.0
      %1126 = vmatpush1.msra.mxu0 0.0
      %1127 = vmatprep.subr.mxu0 0.0
      %1128 = vmatpush1.msra.mxu0 0.0
      %1129 = vmatprep.subr.mxu0 0.0
      %1130 = vmatpush1.msra.mxu0 0.0
      %1131 = vmatprep.subr.mxu0 0.0
      %1132 = vmatpush1.msra.mxu0 0.0
      %1133 = vmatprep.subr.mxu0 0.0
      %1134 = vmatpush1.msra.mxu0 0.0
      %1135 = vmatprep.subr.mxu0 0.0
      %1136 = vmatpush1.msra.mxu0 0.0
      %1137 = vmatprep.subr.mxu0 0.0
      %1138 = vmatpush1.msra.mxu0 0.0
      %1139 = vmatprep.subr.mxu0 0.0
      %1140 = vmatpush1.msra.mxu0 0.0
      %1141 = vmatprep.subr.mxu0 0.0
      %1142 = vmatpush1.msra.mxu0 0.0
      %1143 = vmatprep.subr.mxu0 0.0
      %1144 = vmatpush1.msra.mxu0 0.0
      %1145 = vmatprep.subr.mxu0 0.0
      %1146 = vmatpush1.msra.mxu0 0.0
      %1147 = vmatprep.subr.mxu0 0.0
      %1148 = vmatpush1.msra.mxu0 0.0
      %1149 = vmatprep.subr.mxu0 0.0
      %1150 = vmatpush1.msra.mxu0 0.0
      %1151 = vmatprep.subr.mxu0 0.0
      %1152 = vmatpush1.msra.mxu0 0.0
      %1153 = vmatprep.subr.mxu0 0.0
      %1154 = vmatpush1.msra.mxu0 0.0
      %1155 = vmatprep.subr.mxu0 0.0
      %1156 = vmatpush1.msra.mxu0 0.0
      %1157 = vmatprep.subr.mxu0 0.0
      %1158 = vmatpush1.msra.mxu0 0.0
      %1159 = vmatprep.subr.mxu0 0.0
      %1160 = vmatpush1.msra.mxu0 0.0
      %1161 = vmatprep.subr.mxu0 0.0
      %1162 = vmatpush1.msra.mxu0 0.0
      %1163 = vmatprep.subr.mxu0 0.0
      %1164 = vmatpush1.msra.mxu0 0.0
      %1165 = vmatprep.subr.mxu0 0.0
      %1166 = vmatpush1.msra.mxu0 0.0
      %1167 = vmatprep.subr.mxu0 0.0
      %1168 = vmatpush1.msra.mxu0 0.0
      %1169 = vmatprep.mubr.f32.mxu0 0.0
      %1170 = vmatmul.mubr.f32.gmra.mrb[0].mxu0 %v1058
      %v1171 = vpop.f32.mrb[0].mxu0
      %v1172 = vadd.f32 %v1055, %v1171
      %v1173 = vpop.f32.mrb[0].mxu0
      %1174 = vmatprep.mubr.f32.mxu0 0.0
      %1175 = vmatmul.mubr.f32.gmra.mrb[0].mxu0 %v1061
      %v1176 = vpop.f32.mrb[0].mxu0
      %v1177 = vadd.f32 %v1055, %v1176
      %v1178 = vpop.f32.mrb[0].mxu0
      %1179 = vmatprep.mubr.f32.mxu0 0.0
      %1180 = vmatmul.mubr.f32.gmra.mrb[0].mxu0 %v1064
      %v1181 = vpop.f32.mrb[0].mxu0
      %v1182 = vadd.f32 %v1055, %v1181
      %v1183 = vpop.f32.mrb[0].mxu0
      %1184 = vmatprep.mubr.f32.mxu0 0.0
      %1185 = vmatmul.mubr.f32.gmra.mrb[0].mxu0 %v1067
      %v1186 = vpop.f32.mrb[0].mxu0
      %v1187 = vadd.f32 %v1055, %v1186
      %v1188 = vpop.f32.mrb[0].mxu0
      %1189 = vmatprep.mubr.f32.mxu0 0.0
      %1190 = vmatmul.mubr.f32.gmra.mrb[0].mxu0 %v1070
      %v1191 = vpop.f32.mrb[0].mxu0
      %v1192 = vadd.f32 %v1055, %v1191
      %v1193 = vpop.f32.mrb[0].mxu0
      %1194 = vmatprep.mubr.f32.mxu0 0.0
      %1195 = vmatmul.mubr.f32.gmra.mrb[0].mxu0 %v1073
      %v1196 = vpop.f32.mrb[0].mxu0
      %v1197 = vadd.f32 %v1055, %v1196
      %v1198 = vpop.f32.mrb[0].mxu0
      %1199 = vmatprep.mubr.f32.mxu0 0.0
      %1200 = vmatmul.mubr.f32.gmra.mrb[0].mxu0 %v1076
      %v1201 = vpop.f32.mrb[0].mxu0
      %v1202 = vadd.f32 %v1055, %v1201
      %v1203 = vpop.f32.mrb[0].mxu0
      %1204 = vmatprep.mubr.f32.mxu0 0.0
      %1205 = vmatmul.mubr.f32.gmra.mrb[0].mxu0 %v1079
      %v1206 = vpop.f32.mrb[0].mxu0
      %v1207 = vadd.f32 %v1055, %v1206
      %v1208 = vpop.f32.mrb[0].mxu0
      %1209 = vmatprep.mubr.f32.mxu0 0.0
      %1210 = vmatmul.mubr.f32.gmra.mrb[0].mxu0 %v1082
      %v1211 = vpop.f32.mrb[0].mxu0
      %v1212 = vadd.f32 %v1055, %v1211
      %v1213 = vpop.f32.mrb[0].mxu0
      %1214 = vmatprep.mubr.f32.mxu0 0.0
      %1215 = vmatmul.mubr.f32.gmra.mrb[0].mxu0 %v1085
      %v1216 = vpop.f32.mrb[0].mxu0
      %v1217 = vadd.f32 %v1055, %v1216
      %v1218 = vpop.f32.mrb[0].mxu0
      %1219 = vmatprep.mubr.f32.mxu0 0.0
      %1220 = vmatmul.mubr.f32.gmra.mrb[0].mxu0 %v1088
      %v1221 = vpop.f32.mrb[0].mxu0
      %v1222 = vadd.f32 %v1055, %v1221
      %v1223 = vpop.f32.mrb[0].mxu0
      %1224 = vmatprep.mubr.f32.mxu0 0.0
      %1225 = vmatmul.mubr.f32.gmra.mrb[0].mxu0 %v1091
      %v1226 = vpop.f32.mrb[0].mxu0
      %v1227 = vadd.f32 %v1055, %v1226
      %v1228 = vpop.f32.mrb[0].mxu0
      %1229 = vmatprep.mubr.f32.mxu0 0.0
      %1230 = vmatmul.mubr.f32.gmra.mrb[0].mxu0 %v1094
      %v1231 = vpop.f32.mrb[0].mxu0
      %v1232 = vadd.f32 %v1055, %v1231
      %v1233 = vpop.f32.mrb[0].mxu0
      %1234 = vmatprep.mubr.f32.mxu0 0.0
      %1235 = vmatmul.mubr.f32.gmra.mrb[0].mxu0 %v1097
      %v1236 = vpop.f32.mrb[0].mxu0
      %v1237 = vadd.f32 %v1055, %v1236
      %v1238 = vpop.f32.mrb[0].mxu0
      %1239 = vmatprep.mubr.f32.mxu0 0.0
      %1240 = vmatmul.mubr.f32.gmra.mrb[0].mxu0 %v1100
      %v1241 = vpop.f32.mrb[0].mxu0
      %v1242 = vadd.f32 %v1055, %v1241
      %v1243 = vpop.f32.mrb[0].mxu0
      %1244 = vmatprep.mubr.f32.mxu0 0.0
      %1245 = vmatmul.mubr.f32.gmra.mrb[0].mxu0 %v1103
      %v1246 = vpop.f32.mrb[0].mxu0
      %v1247 = vadd.f32 %v1055, %v1246
      %v1248 = vpop.f32.mrb[0].mxu0
      %1249 = vdwg.mxu0
      %v1250 = vsub.f32 0.0, %v1172
      %v1251 = vsub.f32 0.0, %v1177
      %v1252 = vsub.f32 0.0, %v1182
      %v1253 = vsub.f32 0.0, %v1187
      %v1254 = vsub.f32 0.0, %v1192
      %v1255 = vsub.f32 0.0, %v1197
      %v1256 = vsub.f32 0.0, %v1202
      %v1257 = vsub.f32 0.0, %v1207
      %v1258 = vsub.f32 0.0, %v1212
      %v1259 = vsub.f32 0.0, %v1217
      %v1260 = vsub.f32 0.0, %v1222
      %v1261 = vsub.f32 0.0, %v1227
      %v1262 = vsub.f32 0.0, %v1232
      %v1263 = vsub.f32 0.0, %v1237
      %v1264 = vsub.f32 0.0, %v1242
      %v1265 = vsub.f32 0.0, %v1247
      %v1266 = vand.u32 2147483647, %v1250
      %v1267 = vand.u32 2147483647, %v1251
      %v1268 = vand.u32 2147483647, %v1252
      %v1269 = vand.u32 2147483647, %v1253
      %v1270 = vand.u32 2147483647, %v1254
      %v1271 = vand.u32 2147483647, %v1255
      %v1272 = vand.u32 2147483647, %v1256
      %v1273 = vand.u32 2147483647, %v1257
      %v1274 = vand.u32 2147483647, %v1258
      %v1275 = vand.u32 2147483647, %v1259
      %v1276 = vand.u32 2147483647, %v1260
      %v1277 = vand.u32 2147483647, %v1261
      %v1278 = vand.u32 2147483647, %v1262
      %v1279 = vand.u32 2147483647, %v1263
      %v1280 = vand.u32 2147483647, %v1264
      %v1281 = vand.u32 2147483647, %v1265
      %v1282 = vsub.f32 0.0, %v1266
      %v1283 = vsub.f32 0.0, %v1267
      %v1284 = vsub.f32 0.0, %v1268
      %v1285 = vsub.f32 0.0, %v1269
      %v1286 = vsub.f32 0.0, %v1270
      %v1287 = vsub.f32 0.0, %v1271
      %v1288 = vsub.f32 0.0, %v1272
      %v1289 = vsub.f32 0.0, %v1273
      %v1290 = vsub.f32 0.0, %v1274
      %v1291 = vsub.f32 0.0, %v1275
      %v1292 = vsub.f32 0.0, %v1276
      %v1293 = vsub.f32 0.0, %v1277
      %v1294 = vsub.f32 0.0, %v1278
      %v1295 = vsub.f32 0.0, %v1279
      %v1296 = vsub.f32 0.0, %v1280
      %v1297 = vsub.f32 0.0, %v1281
      %v1298 = vmul.f32 %v1282, 1.442695
      %v1299 = vpow.pop %v1298
      %v1300 = vmul.f32 %v1283, 1.442695
      %v1301 = vpow.pop %v1300
      %v1302 = vmul.f32 %v1284, 1.442695
      %v1303 = vpow.pop %v1302
      %v1304 = vmul.f32 %v1285, 1.442695
      %v1305 = vpow.pop %v1304
      %v1306 = vmul.f32 %v1286, 1.442695
      %v1307 = vpow.pop %v1306
      %v1308 = vmul.f32 %v1287, 1.442695
      %v1309 = vpow.pop %v1308
      %v1310 = vmul.f32 %v1288, 1.442695
      %v1311 = vpow.pop %v1310
      %v1312 = vmul.f32 %v1289, 1.442695
      %v1313 = vpow.pop %v1312
      %v1314 = vmul.f32 %v1290, 1.442695
      %v1315 = vpow.pop %v1314
      %v1316 = vmul.f32 %v1291, 1.442695
      %v1317 = vpow.pop %v1316
      %v1318 = vmul.f32 %v1292, 1.442695
      %v1319 = vpow.pop %v1318
      %v1320 = vmul.f32 %v1293, 1.442695
      %v1321 = vpow.pop %v1320
      %v1322 = vmul.f32 %v1294, 1.442695
      %v1323 = vpow.pop %v1322
      %v1324 = vmul.f32 %v1295, 1.442695
      %v1325 = vpow.pop %v1324
      %v1326 = vmul.f32 %v1296, 1.442695
      %v1327 = vpow.pop %v1326
      %v1328 = vmul.f32 %v1297, 1.442695
      %v1329 = vpow.pop %v1328
      %vm1330 = vcmp.lt.f32.partialorder %v1250, 0.0
      %vm1331 = vcmp.lt.f32.partialorder %v1251, 0.0
      %vm1332 = vcmp.lt.f32.partialorder %v1252, 0.0
      %vm1333 = vcmp.lt.f32.partialorder %v1253, 0.0
      %vm1334 = vcmp.lt.f32.partialorder %v1254, 0.0
      %vm1335 = vcmp.lt.f32.partialorder %v1255, 0.0
      %vm1336 = vcmp.lt.f32.partialorder %v1256, 0.0
      %vm1337 = vcmp.lt.f32.partialorder %v1257, 0.0
      %vm1338 = vcmp.lt.f32.partialorder %v1258, 0.0
      %vm1339 = vcmp.lt.f32.partialorder %v1259, 0.0
      %vm1340 = vcmp.lt.f32.partialorder %v1260, 0.0
      %vm1341 = vcmp.lt.f32.partialorder %v1261, 0.0
      %vm1342 = vcmp.lt.f32.partialorder %v1262, 0.0
      %vm1343 = vcmp.lt.f32.partialorder %v1263, 0.0
      %vm1344 = vcmp.lt.f32.partialorder %v1264, 0.0
      %vm1345 = vcmp.lt.f32.partialorder %v1265, 0.0
      %v1346 = vadd.f32 %v1299, 1e-12
      %v1347 = vadd.f32 %v1301, 1e-12
      %v1348 = vadd.f32 %v1303, 1e-12
      %v1349 = vadd.f32 %v1305, 1e-12
      %v1350 = vadd.f32 %v1307, 1e-12
      %v1351 = vadd.f32 %v1309, 1e-12
      %v1352 = vadd.f32 %v1311, 1e-12
      %v1353 = vadd.f32 %v1313, 1e-12
      %v1354 = vadd.f32 %v1315, 1e-12
      %v1355 = vadd.f32 %v1317, 1e-12
      %v1356 = vadd.f32 %v1319, 1e-12
      %v1357 = vadd.f32 %v1321, 1e-12
      %v1358 = vadd.f32 %v1323, 1e-12
      %v1359 = vadd.f32 %v1325, 1e-12
      %v1360 = vadd.f32 %v1327, 1e-12
      %v1361 = vadd.f32 %v1329, 1e-12
      %v1362 = vrcp.pop %v1346
      %v1363 = vrcp.pop %v1347
      %v1364 = vrcp.pop %v1348
      %v1365 = vrcp.pop %v1349
      %v1366 = vrcp.pop %v1350
      %v1367 = vrcp.pop %v1351
      %v1368 = vrcp.pop %v1352
      %v1369 = vrcp.pop %v1353
      %v1370 = vrcp.pop %v1354
      %v1371 = vrcp.pop %v1355
      %v1372 = vrcp.pop %v1356
      %v1373 = vrcp.pop %v1357
      %v1374 = vrcp.pop %v1358
      %v1375 = vrcp.pop %v1359
      %v1376 = vrcp.pop %v1360
      %v1377 = vrcp.pop %v1361
      %v1378 = vsel %vm1330, %v1299, %v1362
      %v1379 = vsel %vm1331, %v1301, %v1363
      %v1380 = vsel %vm1332, %v1303, %v1364
      %v1381 = vsel %vm1333, %v1305, %v1365
      %v1382 = vsel %vm1334, %v1307, %v1366
      %v1383 = vsel %vm1335, %v1309, %v1367
      %v1384 = vsel %vm1336, %v1311, %v1368
      %v1385 = vsel %vm1337, %v1313, %v1369
      %v1386 = vsel %vm1338, %v1315, %v1370
      %v1387 = vsel %vm1339, %v1317, %v1371
      %v1388 = vsel %vm1340, %v1319, %v1372
      %v1389 = vsel %vm1341, %v1321, %v1373
      %v1390 = vsel %vm1342, %v1323, %v1374
      %v1391 = vsel %vm1343, %v1325, %v1375
      %v1392 = vsel %vm1344, %v1327, %v1376
      %v1393 = vsel %vm1345, %v1329, %v1377
      %v1394 = vadd.f32 %v1378, 1.0
      %v1395 = vadd.f32 %v1379, 1.0
      %v1396 = vadd.f32 %v1380, 1.0
      %v1397 = vadd.f32 %v1381, 1.0
      %v1398 = vadd.f32 %v1382, 1.0
      %v1399 = vadd.f32 %v1383, 1.0
      %v1400 = vadd.f32 %v1384, 1.0
      %v1401 = vadd.f32 %v1385, 1.0
      %v1402 = vadd.f32 %v1386, 1.0
      %v1403 = vadd.f32 %v1387, 1.0
      %v1404 = vadd.f32 %v1388, 1.0
      %v1405 = vadd.f32 %v1389, 1.0
      %v1406 = vadd.f32 %v1390, 1.0
      %v1407 = vadd.f32 %v1391, 1.0
      %v1408 = vadd.f32 %v1392, 1.0
      %v1409 = vadd.f32 %v1393, 1.0
      %v1410 = vrcp.pop %v1394
      %v1411 = vrcp.pop %v1395
      %v1412 = vrcp.pop %v1396
      %v1413 = vrcp.pop %v1397
      %v1414 = vrcp.pop %v1398
      %v1415 = vrcp.pop %v1399
      %v1416 = vrcp.pop %v1400
      %v1417 = vrcp.pop %v1401
      %v1418 = vrcp.pop %v1402
      %v1419 = vrcp.pop %v1403
      %v1420 = vrcp.pop %v1404
      %v1421 = vrcp.pop %v1405
      %v1422 = vrcp.pop %v1406
      %v1423 = vrcp.pop %v1407
      %v1424 = vrcp.pop %v1408
      %v1425 = vrcp.pop %v1409
      %v1426 = vadd.f32 %v1410, 1e-12
      %v1427 = vadd.f32 %v1411, 1e-12
      %v1428 = vadd.f32 %v1412, 1e-12
      %v1429 = vadd.f32 %v1413, 1e-12
      %v1430 = vadd.f32 %v1414, 1e-12
      %v1431 = vadd.f32 %v1415, 1e-12
      %v1432 = vadd.f32 %v1416, 1e-12
      %v1433 = vadd.f32 %v1417, 1e-12
      %v1434 = vadd.f32 %v1418, 1e-12
      %v1435 = vadd.f32 %v1419, 1e-12
      %v1436 = vadd.f32 %v1420, 1e-12
      %v1437 = vadd.f32 %v1421, 1e-12
      %v1438 = vadd.f32 %v1422, 1e-12
      %v1439 = vadd.f32 %v1423, 1e-12
      %v1440 = vadd.f32 %v1424, 1e-12
      %v1441 = vadd.f32 %v1425, 1e-12
      %1458 = vrot.lane.b32.xlu0 %v1378, 112
      %v1459 = vpop.permute.xlu0 %1458
      %1460 = vrot.lane.b32.xlu0 %v1379, 112
      %v1461 = vpop.permute.xlu0 %1460
      %1462 = vrot.lane.b32.xlu0 %v1380, 112
      %v1463 = vpop.permute.xlu0 %1462
      %1464 = vrot.lane.b32.xlu0 %v1381, 112
      %v1465 = vpop.permute.xlu0 %1464
      %1466 = vrot.lane.b32.xlu0 %v1382, 112
      %v1467 = vpop.permute.xlu0 %1466
      %1468 = vrot.lane.b32.xlu0 %v1383, 112
      %v1469 = vpop.permute.xlu0 %1468
      %1470 = vrot.lane.b32.xlu0 %v1384, 112
      %v1471 = vpop.permute.xlu0 %1470
      %1472 = vrot.lane.b32.xlu0 %v1385, 112
      %v1473 = vpop.permute.xlu0 %1472
      %1474 = vrot.lane.b32.xlu0 %v1386, 112
      %v1475 = vpop.permute.xlu0 %1474
      %1476 = vrot.lane.b32.xlu0 %v1387, 112
      %v1477 = vpop.permute.xlu0 %1476
      %1478 = vrot.lane.b32.xlu0 %v1388, 112
      %v1479 = vpop.permute.xlu0 %1478
      %1480 = vrot.lane.b32.xlu0 %v1389, 112
      %v1481 = vpop.permute.xlu0 %1480
      %1482 = vrot.lane.b32.xlu0 %v1390, 112
      %v1483 = vpop.permute.xlu0 %1482
      %1484 = vrot.lane.b32.xlu0 %v1391, 112
      %v1485 = vpop.permute.xlu0 %1484
      %1486 = vrot.lane.b32.xlu0 %v1392, 112
      %v1487 = vpop.permute.xlu0 %1486
      %1488 = vrot.lane.b32.xlu0 %v1393, 112
      %v1489 = vpop.permute.xlu0 %1488
      %v1506 = vmul.f32 %v1172, %v1459
      %v1507 = vmul.f32 %v1177, %v1461
      %v1508 = vmul.f32 %v1182, %v1463
      %v1509 = vmul.f32 %v1187, %v1465
      %v1510 = vmul.f32 %v1192, %v1467
      %v1511 = vmul.f32 %v1197, %v1469
      %v1512 = vmul.f32 %v1202, %v1471
      %v1513 = vmul.f32 %v1207, %v1473
      %v1514 = vmul.f32 %v1212, %v1475
      %v1515 = vmul.f32 %v1217, %v1477
      %v1516 = vmul.f32 %v1222, %v1479
      %v1517 = vmul.f32 %v1227, %v1481
      %v1518 = vmul.f32 %v1232, %v1483
      %v1519 = vmul.f32 %v1237, %v1485
      %v1520 = vmul.f32 %v1242, %v1487
      %v1521 = vmul.f32 %v1247, %v1489
      %1538 = vrot.lane.b32.xlu0 %v1410, 112
      %v1539 = vpop.permute.xlu0 %1538
      %1540 = vrot.lane.b32.xlu0 %v1411, 112
      %v1541 = vpop.permute.xlu0 %1540
      %1542 = vrot.lane.b32.xlu0 %v1412, 112
      %v1543 = vpop.permute.xlu0 %1542
      %1544 = vrot.lane.b32.xlu0 %v1413, 112
      %v1545 = vpop.permute.xlu0 %1544
      %1546 = vrot.lane.b32.xlu0 %v1414, 112
      %v1547 = vpop.permute.xlu0 %1546
      %1548 = vrot.lane.b32.xlu0 %v1415, 112
      %v1549 = vpop.permute.xlu0 %1548
      %1550 = vrot.lane.b32.xlu0 %v1416, 112
      %v1551 = vpop.permute.xlu0 %1550
      %1552 = vrot.lane.b32.xlu0 %v1417, 112
      %v1553 = vpop.permute.xlu0 %1552
      %1554 = vrot.lane.b32.xlu0 %v1418, 112
      %v1555 = vpop.permute.xlu0 %1554
      %1556 = vrot.lane.b32.xlu0 %v1419, 112
      %v1557 = vpop.permute.xlu0 %1556
      %1558 = vrot.lane.b32.xlu0 %v1420, 112
      %v1559 = vpop.permute.xlu0 %1558
      %1560 = vrot.lane.b32.xlu0 %v1421, 112
      %v1561 = vpop.permute.xlu0 %1560
      %1562 = vrot.lane.b32.xlu0 %v1422, 112
      %v1563 = vpop.permute.xlu0 %1562
      %1564 = vrot.lane.b32.xlu0 %v1423, 112
      %v1565 = vpop.permute.xlu0 %1564
      %1566 = vrot.lane.b32.xlu0 %v1424, 112
      %v1567 = vpop.permute.xlu0 %1566
      %1568 = vrot.lane.b32.xlu0 %v1425, 112
      %v1569 = vpop.permute.xlu0 %1568
      %v1586 = vmul.f32 %v1506, %v1539
      %v1587 = vmul.f32 %v1507, %v1541
      %v1588 = vmul.f32 %v1508, %v1543
      %v1589 = vmul.f32 %v1509, %v1545
      %v1590 = vmul.f32 %v1510, %v1547
      %v1591 = vmul.f32 %v1511, %v1549
      %v1592 = vmul.f32 %v1512, %v1551
      %v1593 = vmul.f32 %v1513, %v1553
      %v1594 = vmul.f32 %v1514, %v1555
      %v1595 = vmul.f32 %v1515, %v1557
      %v1596 = vmul.f32 %v1516, %v1559
      %v1597 = vmul.f32 %v1517, %v1561
      %v1598 = vmul.f32 %v1518, %v1563
      %v1599 = vmul.f32 %v1519, %v1565
      %v1600 = vmul.f32 %v1520, %v1567
      %v1601 = vmul.f32 %v1521, %v1569
      %v1602 = vlog2.pop %v1426
      %v1603 = vmul.f32 %v1602, 0.6931472
      %v1604 = vlog2.pop %v1427
      %v1605 = vmul.f32 %v1604, 0.6931472
      %v1606 = vlog2.pop %v1428
      %v1607 = vmul.f32 %v1606, 0.6931472
      %v1608 = vlog2.pop %v1429
      %v1609 = vmul.f32 %v1608, 0.6931472
      %v1610 = vlog2.pop %v1430
      %v1611 = vmul.f32 %v1610, 0.6931472
      %v1612 = vlog2.pop %v1431
      %v1613 = vmul.f32 %v1612, 0.6931472
      %v1614 = vlog2.pop %v1432
      %v1615 = vmul.f32 %v1614, 0.6931472
      %v1616 = vlog2.pop %v1433
      %v1617 = vmul.f32 %v1616, 0.6931472
      %v1618 = vlog2.pop %v1434
      %v1619 = vmul.f32 %v1618, 0.6931472
      %v1620 = vlog2.pop %v1435
      %v1621 = vmul.f32 %v1620, 0.6931472
      %v1622 = vlog2.pop %v1436
      %v1623 = vmul.f32 %v1622, 0.6931472
      %v1624 = vlog2.pop %v1437
      %v1625 = vmul.f32 %v1624, 0.6931472
      %v1626 = vlog2.pop %v1438
      %v1627 = vmul.f32 %v1626, 0.6931472
      %v1628 = vlog2.pop %v1439
      %v1629 = vmul.f32 %v1628, 0.6931472
      %v1630 = vlog2.pop %v1440
      %v1631 = vmul.f32 %v1630, 0.6931472
      %v1632 = vlog2.pop %v1441
      %v1633 = vmul.f32 %v1632, 0.6931472
      %v1634 = vlaneseq
      %v1635 = vand.u32 %v1634, 127
      %1636 = vrot.lane.b32.xlu0 %v147, 127
      %v1637 = vpop.permute.xlu0 %1636
      %1638 = vrot.lane.b32.xlu0 %v148, 127
      %v1639 = vpop.permute.xlu0 %1638
      %1640 = vrot.lane.b32.xlu0 %v149, 127
      %v1641 = vpop.permute.xlu0 %1640
      %1642 = vrot.lane.b32.xlu0 %v150, 127
      %v1643 = vpop.permute.xlu0 %1642
      %1644 = vrot.lane.b32.xlu0 %v151, 127
      %v1645 = vpop.permute.xlu0 %1644
      %1646 = vrot.lane.b32.xlu0 %v152, 127
      %v1647 = vpop.permute.xlu0 %1646
      %1648 = vrot.lane.b32.xlu0 %v153, 127
      %v1649 = vpop.permute.xlu0 %1648
      %1650 = vrot.lane.b32.xlu0 %v154, 127
      %v1651 = vpop.permute.xlu0 %1650
      %1652 = vrot.lane.b32.xlu0 %v155, 127
      %v1653 = vpop.permute.xlu0 %1652
      %1654 = vrot.lane.b32.xlu0 %v156, 127
      %v1655 = vpop.permute.xlu0 %1654
      %1656 = vrot.lane.b32.xlu0 %v157, 127
      %v1657 = vpop.permute.xlu0 %1656
      %1658 = vrot.lane.b32.xlu0 %v158, 127
      %v1659 = vpop.permute.xlu0 %1658
      %1660 = vrot.lane.b32.xlu0 %v159, 127
      %v1661 = vpop.permute.xlu0 %1660
      %1662 = vrot.lane.b32.xlu0 %v160, 127
      %v1663 = vpop.permute.xlu0 %1662
      %1664 = vrot.lane.b32.xlu0 %v161, 127
      %v1665 = vpop.permute.xlu0 %1664
      %1666 = vrot.lane.b32.xlu0 %v162, 127
      %v1667 = vpop.permute.xlu0 %1666
      %v1684 = vmul.f32 %v147, %v1637
      %v1685 = vmul.f32 %v148, %v1639
      %v1686 = vmul.f32 %v149, %v1641
      %v1687 = vmul.f32 %v150, %v1643
      %v1688 = vmul.f32 %v151, %v1645
      %v1689 = vmul.f32 %v152, %v1647
      %v1690 = vmul.f32 %v153, %v1649
      %v1691 = vmul.f32 %v154, %v1651
      %v1692 = vmul.f32 %v155, %v1653
      %v1693 = vmul.f32 %v156, %v1655
      %v1694 = vmul.f32 %v157, %v1657
      %v1695 = vmul.f32 %v158, %v1659
      %v1696 = vmul.f32 %v159, %v1661
      %v1697 = vmul.f32 %v160, %v1663
      %v1698 = vmul.f32 %v161, %v1665
      %v1699 = vmul.f32 %v162, %v1667
      %vm1700 = vcmp.eq.s32.totalorder %v1635, 1
      %1702 = vset.pattern.permute.xlu0 64
      %1703 = vperm.xlu0 %1702, %v1684
      %v1704 = vpop.permute.xlu0 %1703
      %1707 = vset.pattern.permute.xlu0 64
      %1708 = vperm.xlu0 %1707, %v1685
      %v1709 = vpop.permute.xlu0 %1708
      %1712 = vset.pattern.permute.xlu0 64
      %1713 = vperm.xlu0 %1712, %v1686
      %v1714 = vpop.permute.xlu0 %1713
      %1717 = vset.pattern.permute.xlu0 64
      %1718 = vperm.xlu0 %1717, %v1687
      %v1719 = vpop.permute.xlu0 %1718
      %1722 = vset.pattern.permute.xlu0 64
      %1723 = vperm.xlu0 %1722, %v1688
      %v1724 = vpop.permute.xlu0 %1723
      %1727 = vset.pattern.permute.xlu0 64
      %1728 = vperm.xlu0 %1727, %v1689
      %v1729 = vpop.permute.xlu0 %1728
      %1732 = vset.pattern.permute.xlu0 64
      %1733 = vperm.xlu0 %1732, %v1690
      %v1734 = vpop.permute.xlu0 %1733
      %1737 = vset.pattern.permute.xlu0 64
      %1738 = vperm.xlu0 %1737, %v1691
      %v1739 = vpop.permute.xlu0 %1738
      %1742 = vset.pattern.permute.xlu0 64
      %1743 = vperm.xlu0 %1742, %v1692
      %v1744 = vpop.permute.xlu0 %1743
      %1747 = vset.pattern.permute.xlu0 64
      %1748 = vperm.xlu0 %1747, %v1693
      %v1749 = vpop.permute.xlu0 %1748
      %1752 = vset.pattern.permute.xlu0 64
      %1753 = vperm.xlu0 %1752, %v1694
      %v1754 = vpop.permute.xlu0 %1753
      %1757 = vset.pattern.permute.xlu0 64
      %1758 = vperm.xlu0 %1757, %v1695
      %v1759 = vpop.permute.xlu0 %1758
      %1762 = vset.pattern.permute.xlu0 64
      %1763 = vperm.xlu0 %1762, %v1696
      %v1764 = vpop.permute.xlu0 %1763
      %1767 = vset.pattern.permute.xlu0 64
      %1768 = vperm.xlu0 %1767, %v1697
      %v1769 = vpop.permute.xlu0 %1768
      %1772 = vset.pattern.permute.xlu0 64
      %1773 = vperm.xlu0 %1772, %v1698
      %v1774 = vpop.permute.xlu0 %1773
      %1777 = vset.pattern.permute.xlu0 64
      %1778 = vperm.xlu0 %1777, %v1699
      %v1779 = vpop.permute.xlu0 %1778
      %1781 = vrot.lane.b32.xlu0 %v147, 64
      %v1782 = vpop.permute.xlu0 %1781
      %1783 = vrot.lane.b32.xlu0 %v148, 64
      %v1784 = vpop.permute.xlu0 %1783
      %1785 = vrot.lane.b32.xlu0 %v149, 64
      %v1786 = vpop.permute.xlu0 %1785
      %1787 = vrot.lane.b32.xlu0 %v150, 64
      %v1788 = vpop.permute.xlu0 %1787
      %1789 = vrot.lane.b32.xlu0 %v151, 64
      %v1790 = vpop.permute.xlu0 %1789
      %1791 = vrot.lane.b32.xlu0 %v152, 64
      %v1792 = vpop.permute.xlu0 %1791
      %1793 = vrot.lane.b32.xlu0 %v153, 64
      %v1794 = vpop.permute.xlu0 %1793
      %1795 = vrot.lane.b32.xlu0 %v154, 64
      %v1796 = vpop.permute.xlu0 %1795
      %1797 = vrot.lane.b32.xlu0 %v155, 64
      %v1798 = vpop.permute.xlu0 %1797
      %1799 = vrot.lane.b32.xlu0 %v156, 64
      %v1800 = vpop.permute.xlu0 %1799
      %1801 = vrot.lane.b32.xlu0 %v157, 64
      %v1802 = vpop.permute.xlu0 %1801
      %1803 = vrot.lane.b32.xlu0 %v158, 64
      %v1804 = vpop.permute.xlu0 %1803
      %1805 = vrot.lane.b32.xlu0 %v159, 64
      %v1806 = vpop.permute.xlu0 %1805
      %1807 = vrot.lane.b32.xlu0 %v160, 64
      %v1808 = vpop.permute.xlu0 %1807
      %1809 = vrot.lane.b32.xlu0 %v161, 64
      %v1810 = vpop.permute.xlu0 %1809
      %1811 = vrot.lane.b32.xlu0 %v162, 64
      %v1812 = vpop.permute.xlu0 %1811
      %v1829 = vsel %vm1700, %v1704, %v1782
      %v1830 = vsel %vm1700, %v1709, %v1784
      %v1831 = vsel %vm1700, %v1714, %v1786
      %v1832 = vsel %vm1700, %v1719, %v1788
      %v1833 = vsel %vm1700, %v1724, %v1790
      %v1834 = vsel %vm1700, %v1729, %v1792
      %v1835 = vsel %vm1700, %v1734, %v1794
      %v1836 = vsel %vm1700, %v1739, %v1796
      %v1837 = vsel %vm1700, %v1744, %v1798
      %v1838 = vsel %vm1700, %v1749, %v1800
      %v1839 = vsel %vm1700, %v1754, %v1802
      %v1840 = vsel %vm1700, %v1759, %v1804
      %v1841 = vsel %vm1700, %v1764, %v1806
      %v1842 = vsel %vm1700, %v1769, %v1808
      %v1843 = vsel %vm1700, %v1774, %v1810
      %v1844 = vsel %vm1700, %v1779, %v1812
      %1845 = vrot.lane.b32.xlu0 %v147, 126
      %v1846 = vpop.permute.xlu0 %1845
      %1847 = vrot.lane.b32.xlu0 %v148, 126
      %v1848 = vpop.permute.xlu0 %1847
      %1849 = vrot.lane.b32.xlu0 %v149, 126
      %v1850 = vpop.permute.xlu0 %1849
      %1851 = vrot.lane.b32.xlu0 %v150, 126
      %v1852 = vpop.permute.xlu0 %1851
      %1853 = vrot.lane.b32.xlu0 %v151, 126
      %v1854 = vpop.permute.xlu0 %1853
      %1855 = vrot.lane.b32.xlu0 %v152, 126
      %v1856 = vpop.permute.xlu0 %1855
      %1857 = vrot.lane.b32.xlu0 %v153, 126
      %v1858 = vpop.permute.xlu0 %1857
      %1859 = vrot.lane.b32.xlu0 %v154, 126
      %v1860 = vpop.permute.xlu0 %1859
      %1861 = vrot.lane.b32.xlu0 %v155, 126
      %v1862 = vpop.permute.xlu0 %1861
      %1863 = vrot.lane.b32.xlu0 %v156, 126
      %v1864 = vpop.permute.xlu0 %1863
      %1865 = vrot.lane.b32.xlu0 %v157, 126
      %v1866 = vpop.permute.xlu0 %1865
      %1867 = vrot.lane.b32.xlu0 %v158, 126
      %v1868 = vpop.permute.xlu0 %1867
      %1869 = vrot.lane.b32.xlu0 %v159, 126
      %v1870 = vpop.permute.xlu0 %1869
      %1871 = vrot.lane.b32.xlu0 %v160, 126
      %v1872 = vpop.permute.xlu0 %1871
      %1873 = vrot.lane.b32.xlu0 %v161, 126
      %v1874 = vpop.permute.xlu0 %1873
      %1875 = vrot.lane.b32.xlu0 %v162, 126
      %v1876 = vpop.permute.xlu0 %1875
      %v1893 = vmul.f32 %v1684, %v1846
      %v1894 = vmul.f32 %v1685, %v1848
      %v1895 = vmul.f32 %v1686, %v1850
      %v1896 = vmul.f32 %v1687, %v1852
      %v1897 = vmul.f32 %v1688, %v1854
      %v1898 = vmul.f32 %v1689, %v1856
      %v1899 = vmul.f32 %v1690, %v1858
      %v1900 = vmul.f32 %v1691, %v1860
      %v1901 = vmul.f32 %v1692, %v1862
      %v1902 = vmul.f32 %v1693, %v1864
      %v1903 = vmul.f32 %v1694, %v1866
      %v1904 = vmul.f32 %v1695, %v1868
      %v1905 = vmul.f32 %v1696, %v1870
      %v1906 = vmul.f32 %v1697, %v1872
      %v1907 = vmul.f32 %v1698, %v1874
      %v1908 = vmul.f32 %v1699, %v1876
      %vm1909 = vcmp.eq.s32.totalorder %v1635, 2
      %1911 = vset.pattern.permute.xlu0 64
      %1912 = vperm.xlu0 %1911, %v1893
      %v1913 = vpop.permute.xlu0 %1912
      %1916 = vset.pattern.permute.xlu0 64
      %1917 = vperm.xlu0 %1916, %v1894
      %v1918 = vpop.permute.xlu0 %1917
      %1921 = vset.pattern.permute.xlu0 64
      %1922 = vperm.xlu0 %1921, %v1895
      %v1923 = vpop.permute.xlu0 %1922
      %1926 = vset.pattern.permute.xlu0 64
      %1927 = vperm.xlu0 %1926, %v1896
      %v1928 = vpop.permute.xlu0 %1927
      %1931 = vset.pattern.permute.xlu0 64
      %1932 = vperm.xlu0 %1931, %v1897
      %v1933 = vpop.permute.xlu0 %1932
      %1936 = vset.pattern.permute.xlu0 64
      %1937 = vperm.xlu0 %1936, %v1898
      %v1938 = vpop.permute.xlu0 %1937
      %1941 = vset.pattern.permute.xlu0 64
      %1942 = vperm.xlu0 %1941, %v1899
      %v1943 = vpop.permute.xlu0 %1942
      %1946 = vset.pattern.permute.xlu0 64
      %1947 = vperm.xlu0 %1946, %v1900
      %v1948 = vpop.permute.xlu0 %1947
      %1951 = vset.pattern.permute.xlu0 64
      %1952 = vperm.xlu0 %1951, %v1901
      %v1953 = vpop.permute.xlu0 %1952
      %1956 = vset.pattern.permute.xlu0 64
      %1957 = vperm.xlu0 %1956, %v1902
      %v1958 = vpop.permute.xlu0 %1957
      %1961 = vset.pattern.permute.xlu0 64
      %1962 = vperm.xlu0 %1961, %v1903
      %v1963 = vpop.permute.xlu0 %1962
      %1966 = vset.pattern.permute.xlu0 64
      %1967 = vperm.xlu0 %1966, %v1904
      %v1968 = vpop.permute.xlu0 %1967
      %1971 = vset.pattern.permute.xlu0 64
      %1972 = vperm.xlu0 %1971, %v1905
      %v1973 = vpop.permute.xlu0 %1972
      %1976 = vset.pattern.permute.xlu0 64
      %1977 = vperm.xlu0 %1976, %v1906
      %v1978 = vpop.permute.xlu0 %1977
      %1981 = vset.pattern.permute.xlu0 64
      %1982 = vperm.xlu0 %1981, %v1907
      %v1983 = vpop.permute.xlu0 %1982
      %1986 = vset.pattern.permute.xlu0 64
      %1987 = vperm.xlu0 %1986, %v1908
      %v1988 = vpop.permute.xlu0 %1987
      %v1990 = vsel %vm1909, %v1913, %v1829
      %v1991 = vsel %vm1909, %v1918, %v1830
      %v1992 = vsel %vm1909, %v1923, %v1831
      %v1993 = vsel %vm1909, %v1928, %v1832
      %v1994 = vsel %vm1909, %v1933, %v1833
      %v1995 = vsel %vm1909, %v1938, %v1834
      %v1996 = vsel %vm1909, %v1943, %v1835
      %v1997 = vsel %vm1909, %v1948, %v1836
      %v1998 = vsel %vm1909, %v1953, %v1837
      %v1999 = vsel %vm1909, %v1958, %v1838
      %v2000 = vsel %vm1909, %v1963, %v1839
      %v2001 = vsel %vm1909, %v1968, %v1840
      %v2002 = vsel %vm1909, %v1973, %v1841
      %v2003 = vsel %vm1909, %v1978, %v1842
      %v2004 = vsel %vm1909, %v1983, %v1843
      %v2005 = vsel %vm1909, %v1988, %v1844
      %2006 = vrot.lane.b32.xlu0 %v147, 125
      %v2007 = vpop.permute.xlu0 %2006
      %2008 = vrot.lane.b32.xlu0 %v148, 125
      %v2009 = vpop.permute.xlu0 %2008
      %2010 = vrot.lane.b32.xlu0 %v149, 125
      %v2011 = vpop.permute.xlu0 %2010
      %2012 = vrot.lane.b32.xlu0 %v150, 125
      %v2013 = vpop.permute.xlu0 %2012
      %2014 = vrot.lane.b32.xlu0 %v151, 125
      %v2015 = vpop.permute.xlu0 %2014
      %2016 = vrot.lane.b32.xlu0 %v152, 125
      %v2017 = vpop.permute.xlu0 %2016
      %2018 = vrot.lane.b32.xlu0 %v153, 125
      %v2019 = vpop.permute.xlu0 %2018
      %2020 = vrot.lane.b32.xlu0 %v154, 125
      %v2021 = vpop.permute.xlu0 %2020
      %2022 = vrot.lane.b32.xlu0 %v155, 125
      %v2023 = vpop.permute.xlu0 %2022
      %2024 = vrot.lane.b32.xlu0 %v156, 125
      %v2025 = vpop.permute.xlu0 %2024
      %2026 = vrot.lane.b32.xlu0 %v157, 125
      %v2027 = vpop.permute.xlu0 %2026
      %2028 = vrot.lane.b32.xlu0 %v158, 125
      %v2029 = vpop.permute.xlu0 %2028
      %2030 = vrot.lane.b32.xlu0 %v159, 125
      %v2031 = vpop.permute.xlu0 %2030
      %2032 = vrot.lane.b32.xlu0 %v160, 125
      %v2033 = vpop.permute.xlu0 %2032
      %2034 = vrot.lane.b32.xlu0 %v161, 125
      %v2035 = vpop.permute.xlu0 %2034
      %2036 = vrot.lane.b32.xlu0 %v162, 125
      %v2037 = vpop.permute.xlu0 %2036
      %v2054 = vmul.f32 %v1893, %v2007
      %v2055 = vmul.f32 %v1894, %v2009
      %v2056 = vmul.f32 %v1895, %v2011
      %v2057 = vmul.f32 %v1896, %v2013
      %v2058 = vmul.f32 %v1897, %v2015
      %v2059 = vmul.f32 %v1898, %v2017
      %v2060 = vmul.f32 %v1899, %v2019
      %v2061 = vmul.f32 %v1900, %v2021
      %v2062 = vmul.f32 %v1901, %v2023
      %v2063 = vmul.f32 %v1902, %v2025
      %v2064 = vmul.f32 %v1903, %v2027
      %v2065 = vmul.f32 %v1904, %v2029
      %v2066 = vmul.f32 %v1905, %v2031
      %v2067 = vmul.f32 %v1906, %v2033
      %v2068 = vmul.f32 %v1907, %v2035
      %v2069 = vmul.f32 %v1908, %v2037
      %vm2070 = vcmp.eq.s32.totalorder %v1635, 3
      %2072 = vset.pattern.permute.xlu0 64
      %2073 = vperm.xlu0 %2072, %v2054
      %v2074 = vpop.permute.xlu0 %2073
      %2077 = vset.pattern.permute.xlu0 64
      %2078 = vperm.xlu0 %2077, %v2055
      %v2079 = vpop.permute.xlu0 %2078
      %2082 = vset.pattern.permute.xlu0 64
      %2083 = vperm.xlu0 %2082, %v2056
      %v2084 = vpop.permute.xlu0 %2083
      %2087 = vset.pattern.permute.xlu0 64
      %2088 = vperm.xlu0 %2087, %v2057
      %v2089 = vpop.permute.xlu0 %2088
      %2092 = vset.pattern.permute.xlu0 64
      %2093 = vperm.xlu0 %2092, %v2058
      %v2094 = vpop.permute.xlu0 %2093
      %2097 = vset.pattern.permute.xlu0 64
      %2098 = vperm.xlu0 %2097, %v2059
      %v2099 = vpop.permute.xlu0 %2098
      %2102 = vset.pattern.permute.xlu0 64
      %2103 = vperm.xlu0 %2102, %v2060
      %v2104 = vpop.permute.xlu0 %2103
      %2107 = vset.pattern.permute.xlu0 64
      %2108 = vperm.xlu0 %2107, %v2061
      %v2109 = vpop.permute.xlu0 %2108
      %2112 = vset.pattern.permute.xlu0 64
      %2113 = vperm.xlu0 %2112, %v2062
      %v2114 = vpop.permute.xlu0 %2113
      %2117 = vset.pattern.permute.xlu0 64
      %2118 = vperm.xlu0 %2117, %v2063
      %v2119 = vpop.permute.xlu0 %2118
      %2122 = vset.pattern.permute.xlu0 64
      %2123 = vperm.xlu0 %2122, %v2064
      %v2124 = vpop.permute.xlu0 %2123
      %2127 = vset.pattern.permute.xlu0 64
      %2128 = vperm.xlu0 %2127, %v2065
      %v2129 = vpop.permute.xlu0 %2128
      %2132 = vset.pattern.permute.xlu0 64
      %2133 = vperm.xlu0 %2132, %v2066
      %v2134 = vpop.permute.xlu0 %2133
      %2137 = vset.pattern.permute.xlu0 64
      %2138 = vperm.xlu0 %2137, %v2067
      %v2139 = vpop.permute.xlu0 %2138
      %2142 = vset.pattern.permute.xlu0 64
      %2143 = vperm.xlu0 %2142, %v2068
      %v2144 = vpop.permute.xlu0 %2143
      %2147 = vset.pattern.permute.xlu0 64
      %2148 = vperm.xlu0 %2147, %v2069
      %v2149 = vpop.permute.xlu0 %2148
      %v2151 = vsel %vm2070, %v2074, %v1990
      %v2152 = vsel %vm2070, %v2079, %v1991
      %v2153 = vsel %vm2070, %v2084, %v1992
      %v2154 = vsel %vm2070, %v2089, %v1993
      %v2155 = vsel %vm2070, %v2094, %v1994
      %v2156 = vsel %vm2070, %v2099, %v1995
      %v2157 = vsel %vm2070, %v2104, %v1996
      %v2158 = vsel %vm2070, %v2109, %v1997
      %v2159 = vsel %vm2070, %v2114, %v1998
      %v2160 = vsel %vm2070, %v2119, %v1999
      %v2161 = vsel %vm2070, %v2124, %v2000
      %v2162 = vsel %vm2070, %v2129, %v2001
      %v2163 = vsel %vm2070, %v2134, %v2002
      %v2164 = vsel %vm2070, %v2139, %v2003
      %v2165 = vsel %vm2070, %v2144, %v2004
      %v2166 = vsel %vm2070, %v2149, %v2005
      %2167 = vrot.lane.b32.xlu0 %v147, 124
      %v2168 = vpop.permute.xlu0 %2167
      %2169 = vrot.lane.b32.xlu0 %v148, 124
      %v2170 = vpop.permute.xlu0 %2169
      %2171 = vrot.lane.b32.xlu0 %v149, 124
      %v2172 = vpop.permute.xlu0 %2171
      %2173 = vrot.lane.b32.xlu0 %v150, 124
      %v2174 = vpop.permute.xlu0 %2173
      %2175 = vrot.lane.b32.xlu0 %v151, 124
      %v2176 = vpop.permute.xlu0 %2175
      %2177 = vrot.lane.b32.xlu0 %v152, 124
      %v2178 = vpop.permute.xlu0 %2177
      %2179 = vrot.lane.b32.xlu0 %v153, 124
      %v2180 = vpop.permute.xlu0 %2179
      %2181 = vrot.lane.b32.xlu0 %v154, 124
      %v2182 = vpop.permute.xlu0 %2181
      %2183 = vrot.lane.b32.xlu0 %v155, 124
      %v2184 = vpop.permute.xlu0 %2183
      %2185 = vrot.lane.b32.xlu0 %v156, 124
      %v2186 = vpop.permute.xlu0 %2185
      %2187 = vrot.lane.b32.xlu0 %v157, 124
      %v2188 = vpop.permute.xlu0 %2187
      %2189 = vrot.lane.b32.xlu0 %v158, 124
      %v2190 = vpop.permute.xlu0 %2189
      %2191 = vrot.lane.b32.xlu0 %v159, 124
      %v2192 = vpop.permute.xlu0 %2191
      %2193 = vrot.lane.b32.xlu0 %v160, 124
      %v2194 = vpop.permute.xlu0 %2193
      %2195 = vrot.lane.b32.xlu0 %v161, 124
      %v2196 = vpop.permute.xlu0 %2195
      %2197 = vrot.lane.b32.xlu0 %v162, 124
      %v2198 = vpop.permute.xlu0 %2197
      %v2215 = vmul.f32 %v2054, %v2168
      %v2216 = vmul.f32 %v2055, %v2170
      %v2217 = vmul.f32 %v2056, %v2172
      %v2218 = vmul.f32 %v2057, %v2174
      %v2219 = vmul.f32 %v2058, %v2176
      %v2220 = vmul.f32 %v2059, %v2178
      %v2221 = vmul.f32 %v2060, %v2180
      %v2222 = vmul.f32 %v2061, %v2182
      %v2223 = vmul.f32 %v2062, %v2184
      %v2224 = vmul.f32 %v2063, %v2186
      %v2225 = vmul.f32 %v2064, %v2188
      %v2226 = vmul.f32 %v2065, %v2190
      %v2227 = vmul.f32 %v2066, %v2192
      %v2228 = vmul.f32 %v2067, %v2194
      %v2229 = vmul.f32 %v2068, %v2196
      %v2230 = vmul.f32 %v2069, %v2198
      %vm2231 = vcmp.eq.s32.totalorder %v1635, 4
      %2233 = vset.pattern.permute.xlu0 64
      %2234 = vperm.xlu0 %2233, %v2215
      %v2235 = vpop.permute.xlu0 %2234
      %2238 = vset.pattern.permute.xlu0 64
      %2239 = vperm.xlu0 %2238, %v2216
      %v2240 = vpop.permute.xlu0 %2239
      %2243 = vset.pattern.permute.xlu0 64
      %2244 = vperm.xlu0 %2243, %v2217
      %v2245 = vpop.permute.xlu0 %2244
      %2248 = vset.pattern.permute.xlu0 64
      %2249 = vperm.xlu0 %2248, %v2218
      %v2250 = vpop.permute.xlu0 %2249
      %2253 = vset.pattern.permute.xlu0 64
      %2254 = vperm.xlu0 %2253, %v2219
      %v2255 = vpop.permute.xlu0 %2254
      %2258 = vset.pattern.permute.xlu0 64
      %2259 = vperm.xlu0 %2258, %v2220
      %v2260 = vpop.permute.xlu0 %2259
      %2263 = vset.pattern.permute.xlu0 64
      %2264 = vperm.xlu0 %2263, %v2221
      %v2265 = vpop.permute.xlu0 %2264
      %2268 = vset.pattern.permute.xlu0 64
      %2269 = vperm.xlu0 %2268, %v2222
      %v2270 = vpop.permute.xlu0 %2269
      %2273 = vset.pattern.permute.xlu0 64
      %2274 = vperm.xlu0 %2273, %v2223
      %v2275 = vpop.permute.xlu0 %2274
      %2278 = vset.pattern.permute.xlu0 64
      %2279 = vperm.xlu0 %2278, %v2224
      %v2280 = vpop.permute.xlu0 %2279
      %2283 = vset.pattern.permute.xlu0 64
      %2284 = vperm.xlu0 %2283, %v2225
      %v2285 = vpop.permute.xlu0 %2284
      %2288 = vset.pattern.permute.xlu0 64
      %2289 = vperm.xlu0 %2288, %v2226
      %v2290 = vpop.permute.xlu0 %2289
      %2293 = vset.pattern.permute.xlu0 64
      %2294 = vperm.xlu0 %2293, %v2227
      %v2295 = vpop.permute.xlu0 %2294
      %2298 = vset.pattern.permute.xlu0 64
      %2299 = vperm.xlu0 %2298, %v2228
      %v2300 = vpop.permute.xlu0 %2299
      %2303 = vset.pattern.permute.xlu0 64
      %2304 = vperm.xlu0 %2303, %v2229
      %v2305 = vpop.permute.xlu0 %2304
      %2308 = vset.pattern.permute.xlu0 64
      %2309 = vperm.xlu0 %2308, %v2230
      %v2310 = vpop.permute.xlu0 %2309
      %v2312 = vsel %vm2231, %v2235, %v2151
      %v2313 = vsel %vm2231, %v2240, %v2152
      %v2314 = vsel %vm2231, %v2245, %v2153
      %v2315 = vsel %vm2231, %v2250, %v2154
      %v2316 = vsel %vm2231, %v2255, %v2155
      %v2317 = vsel %vm2231, %v2260, %v2156
      %v2318 = vsel %vm2231, %v2265, %v2157
      %v2319 = vsel %vm2231, %v2270, %v2158
      %v2320 = vsel %vm2231, %v2275, %v2159
      %v2321 = vsel %vm2231, %v2280, %v2160
      %v2322 = vsel %vm2231, %v2285, %v2161
      %v2323 = vsel %vm2231, %v2290, %v2162
      %v2324 = vsel %vm2231, %v2295, %v2163
      %v2325 = vsel %vm2231, %v2300, %v2164
      %v2326 = vsel %vm2231, %v2305, %v2165
      %v2327 = vsel %vm2231, %v2310, %v2166
      %2328 = vrot.lane.b32.xlu0 %v147, 123
      %v2329 = vpop.permute.xlu0 %2328
      %2330 = vrot.lane.b32.xlu0 %v148, 123
      %v2331 = vpop.permute.xlu0 %2330
      %2332 = vrot.lane.b32.xlu0 %v149, 123
      %v2333 = vpop.permute.xlu0 %2332
      %2334 = vrot.lane.b32.xlu0 %v150, 123
      %v2335 = vpop.permute.xlu0 %2334
      %2336 = vrot.lane.b32.xlu0 %v151, 123
      %v2337 = vpop.permute.xlu0 %2336
      %2338 = vrot.lane.b32.xlu0 %v152, 123
      %v2339 = vpop.permute.xlu0 %2338
      %2340 = vrot.lane.b32.xlu0 %v153, 123
      %v2341 = vpop.permute.xlu0 %2340
      %2342 = vrot.lane.b32.xlu0 %v154, 123
      %v2343 = vpop.permute.xlu0 %2342
      %2344 = vrot.lane.b32.xlu0 %v155, 123
      %v2345 = vpop.permute.xlu0 %2344
      %2346 = vrot.lane.b32.xlu0 %v156, 123
      %v2347 = vpop.permute.xlu0 %2346
      %2348 = vrot.lane.b32.xlu0 %v157, 123
      %v2349 = vpop.permute.xlu0 %2348
      %2350 = vrot.lane.b32.xlu0 %v158, 123
      %v2351 = vpop.permute.xlu0 %2350
      %2352 = vrot.lane.b32.xlu0 %v159, 123
      %v2353 = vpop.permute.xlu0 %2352
      %2354 = vrot.lane.b32.xlu0 %v160, 123
      %v2355 = vpop.permute.xlu0 %2354
      %2356 = vrot.lane.b32.xlu0 %v161, 123
      %v2357 = vpop.permute.xlu0 %2356
      %2358 = vrot.lane.b32.xlu0 %v162, 123
      %v2359 = vpop.permute.xlu0 %2358
      %v2376 = vmul.f32 %v2215, %v2329
      %v2377 = vmul.f32 %v2216, %v2331
      %v2378 = vmul.f32 %v2217, %v2333
      %v2379 = vmul.f32 %v2218, %v2335
      %v2380 = vmul.f32 %v2219, %v2337
      %v2381 = vmul.f32 %v2220, %v2339
      %v2382 = vmul.f32 %v2221, %v2341
      %v2383 = vmul.f32 %v2222, %v2343
      %v2384 = vmul.f32 %v2223, %v2345
      %v2385 = vmul.f32 %v2224, %v2347
      %v2386 = vmul.f32 %v2225, %v2349
      %v2387 = vmul.f32 %v2226, %v2351
      %v2388 = vmul.f32 %v2227, %v2353
      %v2389 = vmul.f32 %v2228, %v2355
      %v2390 = vmul.f32 %v2229, %v2357
      %v2391 = vmul.f32 %v2230, %v2359
      %vm2392 = vcmp.eq.s32.totalorder %v1635, 5
      %2394 = vset.pattern.permute.xlu0 64
      %2395 = vperm.xlu0 %2394, %v2376
      %v2396 = vpop.permute.xlu0 %2395
      %2399 = vset.pattern.permute.xlu0 64
      %2400 = vperm.xlu0 %2399, %v2377
      %v2401 = vpop.permute.xlu0 %2400
      %2404 = vset.pattern.permute.xlu0 64
      %2405 = vperm.xlu0 %2404, %v2378
      %v2406 = vpop.permute.xlu0 %2405
      %2409 = vset.pattern.permute.xlu0 64
      %2410 = vperm.xlu0 %2409, %v2379
      %v2411 = vpop.permute.xlu0 %2410
      %2414 = vset.pattern.permute.xlu0 64
      %2415 = vperm.xlu0 %2414, %v2380
      %v2416 = vpop.permute.xlu0 %2415
      %2419 = vset.pattern.permute.xlu0 64
      %2420 = vperm.xlu0 %2419, %v2381
      %v2421 = vpop.permute.xlu0 %2420
      %2424 = vset.pattern.permute.xlu0 64
      %2425 = vperm.xlu0 %2424, %v2382
      %v2426 = vpop.permute.xlu0 %2425
      %2429 = vset.pattern.permute.xlu0 64
      %2430 = vperm.xlu0 %2429, %v2383
      %v2431 = vpop.permute.xlu0 %2430
      %2434 = vset.pattern.permute.xlu0 64
      %2435 = vperm.xlu0 %2434, %v2384
      %v2436 = vpop.permute.xlu0 %2435
      %2439 = vset.pattern.permute.xlu0 64
      %2440 = vperm.xlu0 %2439, %v2385
      %v2441 = vpop.permute.xlu0 %2440
      %2444 = vset.pattern.permute.xlu0 64
      %2445 = vperm.xlu0 %2444, %v2386
      %v2446 = vpop.permute.xlu0 %2445
      %2449 = vset.pattern.permute.xlu0 64
      %2450 = vperm.xlu0 %2449, %v2387
      %v2451 = vpop.permute.xlu0 %2450
      %2454 = vset.pattern.permute.xlu0 64
      %2455 = vperm.xlu0 %2454, %v2388
      %v2456 = vpop.permute.xlu0 %2455
      %2459 = vset.pattern.permute.xlu0 64
      %2460 = vperm.xlu0 %2459, %v2389
      %v2461 = vpop.permute.xlu0 %2460
      %2464 = vset.pattern.permute.xlu0 64
      %2465 = vperm.xlu0 %2464, %v2390
      %v2466 = vpop.permute.xlu0 %2465
      %2469 = vset.pattern.permute.xlu0 64
      %2470 = vperm.xlu0 %2469, %v2391
      %v2471 = vpop.permute.xlu0 %2470
      %v2473 = vsel %vm2392, %v2396, %v2312
      %v2474 = vsel %vm2392, %v2401, %v2313
      %v2475 = vsel %vm2392, %v2406, %v2314
      %v2476 = vsel %vm2392, %v2411, %v2315
      %v2477 = vsel %vm2392, %v2416, %v2316
      %v2478 = vsel %vm2392, %v2421, %v2317
      %v2479 = vsel %vm2392, %v2426, %v2318
      %v2480 = vsel %vm2392, %v2431, %v2319
      %v2481 = vsel %vm2392, %v2436, %v2320
      %v2482 = vsel %vm2392, %v2441, %v2321
      %v2483 = vsel %vm2392, %v2446, %v2322
      %v2484 = vsel %vm2392, %v2451, %v2323
      %v2485 = vsel %vm2392, %v2456, %v2324
      %v2486 = vsel %vm2392, %v2461, %v2325
      %v2487 = vsel %vm2392, %v2466, %v2326
      %v2488 = vsel %vm2392, %v2471, %v2327
      %2489 = vrot.lane.b32.xlu0 %v147, 122
      %v2490 = vpop.permute.xlu0 %2489
      %2491 = vrot.lane.b32.xlu0 %v148, 122
      %v2492 = vpop.permute.xlu0 %2491
      %2493 = vrot.lane.b32.xlu0 %v149, 122
      %v2494 = vpop.permute.xlu0 %2493
      %2495 = vrot.lane.b32.xlu0 %v150, 122
      %v2496 = vpop.permute.xlu0 %2495
      %2497 = vrot.lane.b32.xlu0 %v151, 122
      %v2498 = vpop.permute.xlu0 %2497
      %2499 = vrot.lane.b32.xlu0 %v152, 122
      %v2500 = vpop.permute.xlu0 %2499
      %2501 = vrot.lane.b32.xlu0 %v153, 122
      %v2502 = vpop.permute.xlu0 %2501
      %2503 = vrot.lane.b32.xlu0 %v154, 122
      %v2504 = vpop.permute.xlu0 %2503
      %2505 = vrot.lane.b32.xlu0 %v155, 122
      %v2506 = vpop.permute.xlu0 %2505
      %2507 = vrot.lane.b32.xlu0 %v156, 122
      %v2508 = vpop.permute.xlu0 %2507
      %2509 = vrot.lane.b32.xlu0 %v157, 122
      %v2510 = vpop.permute.xlu0 %2509
      %2511 = vrot.lane.b32.xlu0 %v158, 122
      %v2512 = vpop.permute.xlu0 %2511
      %2513 = vrot.lane.b32.xlu0 %v159, 122
      %v2514 = vpop.permute.xlu0 %2513
      %2515 = vrot.lane.b32.xlu0 %v160, 122
      %v2516 = vpop.permute.xlu0 %2515
      %2517 = vrot.lane.b32.xlu0 %v161, 122
      %v2518 = vpop.permute.xlu0 %2517
      %2519 = vrot.lane.b32.xlu0 %v162, 122
      %v2520 = vpop.permute.xlu0 %2519
      %v2537 = vmul.f32 %v2376, %v2490
      %v2538 = vmul.f32 %v2377, %v2492
      %v2539 = vmul.f32 %v2378, %v2494
      %v2540 = vmul.f32 %v2379, %v2496
      %v2541 = vmul.f32 %v2380, %v2498
      %v2542 = vmul.f32 %v2381, %v2500
      %v2543 = vmul.f32 %v2382, %v2502
      %v2544 = vmul.f32 %v2383, %v2504
      %v2545 = vmul.f32 %v2384, %v2506
      %v2546 = vmul.f32 %v2385, %v2508
      %v2547 = vmul.f32 %v2386, %v2510
      %v2548 = vmul.f32 %v2387, %v2512
      %v2549 = vmul.f32 %v2388, %v2514
      %v2550 = vmul.f32 %v2389, %v2516
      %v2551 = vmul.f32 %v2390, %v2518
      %v2552 = vmul.f32 %v2391, %v2520
      %vm2553 = vcmp.eq.s32.totalorder %v1635, 6
      %2555 = vset.pattern.permute.xlu0 64
      %2556 = vperm.xlu0 %2555, %v2537
      %v2557 = vpop.permute.xlu0 %2556
      %2560 = vset.pattern.permute.xlu0 64
      %2561 = vperm.xlu0 %2560, %v2538
      %v2562 = vpop.permute.xlu0 %2561
      %2565 = vset.pattern.permute.xlu0 64
      %2566 = vperm.xlu0 %2565, %v2539
      %v2567 = vpop.permute.xlu0 %2566
      %2570 = vset.pattern.permute.xlu0 64
      %2571 = vperm.xlu0 %2570, %v2540
      %v2572 = vpop.permute.xlu0 %2571
      %2575 = vset.pattern.permute.xlu0 64
      %2576 = vperm.xlu0 %2575, %v2541
      %v2577 = vpop.permute.xlu0 %2576
      %2580 = vset.pattern.permute.xlu0 64
      %2581 = vperm.xlu0 %2580, %v2542
      %v2582 = vpop.permute.xlu0 %2581
      %2585 = vset.pattern.permute.xlu0 64
      %2586 = vperm.xlu0 %2585, %v2543
      %v2587 = vpop.permute.xlu0 %2586
      %2590 = vset.pattern.permute.xlu0 64
      %2591 = vperm.xlu0 %2590, %v2544
      %v2592 = vpop.permute.xlu0 %2591
      %2595 = vset.pattern.permute.xlu0 64
      %2596 = vperm.xlu0 %2595, %v2545
      %v2597 = vpop.permute.xlu0 %2596
      %2600 = vset.pattern.permute.xlu0 64
      %2601 = vperm.xlu0 %2600, %v2546
      %v2602 = vpop.permute.xlu0 %2601
      %2605 = vset.pattern.permute.xlu0 64
      %2606 = vperm.xlu0 %2605, %v2547
      %v2607 = vpop.permute.xlu0 %2606
      %2610 = vset.pattern.permute.xlu0 64
      %2611 = vperm.xlu0 %2610, %v2548
      %v2612 = vpop.permute.xlu0 %2611
      %2615 = vset.pattern.permute.xlu0 64
      %2616 = vperm.xlu0 %2615, %v2549
      %v2617 = vpop.permute.xlu0 %2616
      %2620 = vset.pattern.permute.xlu0 64
      %2621 = vperm.xlu0 %2620, %v2550
      %v2622 = vpop.permute.xlu0 %2621
      %2625 = vset.pattern.permute.xlu0 64
      %2626 = vperm.xlu0 %2625, %v2551
      %v2627 = vpop.permute.xlu0 %2626
      %2630 = vset.pattern.permute.xlu0 64
      %2631 = vperm.xlu0 %2630, %v2552
      %v2632 = vpop.permute.xlu0 %2631
      %v2634 = vsel %vm2553, %v2557, %v2473
      %v2635 = vsel %vm2553, %v2562, %v2474
      %v2636 = vsel %vm2553, %v2567, %v2475
      %v2637 = vsel %vm2553, %v2572, %v2476
      %v2638 = vsel %vm2553, %v2577, %v2477
      %v2639 = vsel %vm2553, %v2582, %v2478
      %v2640 = vsel %vm2553, %v2587, %v2479
      %v2641 = vsel %vm2553, %v2592, %v2480
      %v2642 = vsel %vm2553, %v2597, %v2481
      %v2643 = vsel %vm2553, %v2602, %v2482
      %v2644 = vsel %vm2553, %v2607, %v2483
      %v2645 = vsel %vm2553, %v2612, %v2484
      %v2646 = vsel %vm2553, %v2617, %v2485
      %v2647 = vsel %vm2553, %v2622, %v2486
      %v2648 = vsel %vm2553, %v2627, %v2487
      %v2649 = vsel %vm2553, %v2632, %v2488
      %2650 = vrot.lane.b32.xlu0 %v147, 121
      %v2651 = vpop.permute.xlu0 %2650
      %2652 = vrot.lane.b32.xlu0 %v148, 121
      %v2653 = vpop.permute.xlu0 %2652
      %2654 = vrot.lane.b32.xlu0 %v149, 121
      %v2655 = vpop.permute.xlu0 %2654
      %2656 = vrot.lane.b32.xlu0 %v150, 121
      %v2657 = vpop.permute.xlu0 %2656
      %2658 = vrot.lane.b32.xlu0 %v151, 121
      %v2659 = vpop.permute.xlu0 %2658
      %2660 = vrot.lane.b32.xlu0 %v152, 121
      %v2661 = vpop.permute.xlu0 %2660
      %2662 = vrot.lane.b32.xlu0 %v153, 121
      %v2663 = vpop.permute.xlu0 %2662
      %2664 = vrot.lane.b32.xlu0 %v154, 121
      %v2665 = vpop.permute.xlu0 %2664
      %2666 = vrot.lane.b32.xlu0 %v155, 121
      %v2667 = vpop.permute.xlu0 %2666
      %2668 = vrot.lane.b32.xlu0 %v156, 121
      %v2669 = vpop.permute.xlu0 %2668
      %2670 = vrot.lane.b32.xlu0 %v157, 121
      %v2671 = vpop.permute.xlu0 %2670
      %2672 = vrot.lane.b32.xlu0 %v158, 121
      %v2673 = vpop.permute.xlu0 %2672
      %2674 = vrot.lane.b32.xlu0 %v159, 121
      %v2675 = vpop.permute.xlu0 %2674
      %2676 = vrot.lane.b32.xlu0 %v160, 121
      %v2677 = vpop.permute.xlu0 %2676
      %2678 = vrot.lane.b32.xlu0 %v161, 121
      %v2679 = vpop.permute.xlu0 %2678
      %2680 = vrot.lane.b32.xlu0 %v162, 121
      %v2681 = vpop.permute.xlu0 %2680
      %v2698 = vmul.f32 %v2537, %v2651
      %v2699 = vmul.f32 %v2538, %v2653
      %v2700 = vmul.f32 %v2539, %v2655
      %v2701 = vmul.f32 %v2540, %v2657
      %v2702 = vmul.f32 %v2541, %v2659
      %v2703 = vmul.f32 %v2542, %v2661
      %v2704 = vmul.f32 %v2543, %v2663
      %v2705 = vmul.f32 %v2544, %v2665
      %v2706 = vmul.f32 %v2545, %v2667
      %v2707 = vmul.f32 %v2546, %v2669
      %v2708 = vmul.f32 %v2547, %v2671
      %v2709 = vmul.f32 %v2548, %v2673
      %v2710 = vmul.f32 %v2549, %v2675
      %v2711 = vmul.f32 %v2550, %v2677
      %v2712 = vmul.f32 %v2551, %v2679
      %v2713 = vmul.f32 %v2552, %v2681
      %vm2714 = vcmp.eq.s32.totalorder %v1635, 7
      %2716 = vset.pattern.permute.xlu0 64
      %2717 = vperm.xlu0 %2716, %v2698
      %v2718 = vpop.permute.xlu0 %2717
      %2721 = vset.pattern.permute.xlu0 64
      %2722 = vperm.xlu0 %2721, %v2699
      %v2723 = vpop.permute.xlu0 %2722
      %2726 = vset.pattern.permute.xlu0 64
      %2727 = vperm.xlu0 %2726, %v2700
      %v2728 = vpop.permute.xlu0 %2727
      %2731 = vset.pattern.permute.xlu0 64
      %2732 = vperm.xlu0 %2731, %v2701
      %v2733 = vpop.permute.xlu0 %2732
      %2736 = vset.pattern.permute.xlu0 64
      %2737 = vperm.xlu0 %2736, %v2702
      %v2738 = vpop.permute.xlu0 %2737
      %2741 = vset.pattern.permute.xlu0 64
      %2742 = vperm.xlu0 %2741, %v2703
      %v2743 = vpop.permute.xlu0 %2742
      %2746 = vset.pattern.permute.xlu0 64
      %2747 = vperm.xlu0 %2746, %v2704
      %v2748 = vpop.permute.xlu0 %2747
      %2751 = vset.pattern.permute.xlu0 64
      %2752 = vperm.xlu0 %2751, %v2705
      %v2753 = vpop.permute.xlu0 %2752
      %2756 = vset.pattern.permute.xlu0 64
      %2757 = vperm.xlu0 %2756, %v2706
      %v2758 = vpop.permute.xlu0 %2757
      %2761 = vset.pattern.permute.xlu0 64
      %2762 = vperm.xlu0 %2761, %v2707
      %v2763 = vpop.permute.xlu0 %2762
      %2766 = vset.pattern.permute.xlu0 64
      %2767 = vperm.xlu0 %2766, %v2708
      %v2768 = vpop.permute.xlu0 %2767
      %2771 = vset.pattern.permute.xlu0 64
      %2772 = vperm.xlu0 %2771, %v2709
      %v2773 = vpop.permute.xlu0 %2772
      %2776 = vset.pattern.permute.xlu0 64
      %2777 = vperm.xlu0 %2776, %v2710
      %v2778 = vpop.permute.xlu0 %2777
      %2781 = vset.pattern.permute.xlu0 64
      %2782 = vperm.xlu0 %2781, %v2711
      %v2783 = vpop.permute.xlu0 %2782
      %2786 = vset.pattern.permute.xlu0 64
      %2787 = vperm.xlu0 %2786, %v2712
      %v2788 = vpop.permute.xlu0 %2787
      %2791 = vset.pattern.permute.xlu0 64
      %2792 = vperm.xlu0 %2791, %v2713
      %v2793 = vpop.permute.xlu0 %2792
      %v2795 = vsel %vm2714, %v2718, %v2634
      %v2796 = vsel %vm2714, %v2723, %v2635
      %v2797 = vsel %vm2714, %v2728, %v2636
      %v2798 = vsel %vm2714, %v2733, %v2637
      %v2799 = vsel %vm2714, %v2738, %v2638
      %v2800 = vsel %vm2714, %v2743, %v2639
      %v2801 = vsel %vm2714, %v2748, %v2640
      %v2802 = vsel %vm2714, %v2753, %v2641
      %v2803 = vsel %vm2714, %v2758, %v2642
      %v2804 = vsel %vm2714, %v2763, %v2643
      %v2805 = vsel %vm2714, %v2768, %v2644
      %v2806 = vsel %vm2714, %v2773, %v2645
      %v2807 = vsel %vm2714, %v2778, %v2646
      %v2808 = vsel %vm2714, %v2783, %v2647
      %v2809 = vsel %vm2714, %v2788, %v2648
      %v2810 = vsel %vm2714, %v2793, %v2649
      %v2811 = vadd.f32 %v2795, 1e-10
      %v2812 = vadd.f32 %v2796, 1e-10
      %v2813 = vadd.f32 %v2797, 1e-10
      %v2814 = vadd.f32 %v2798, 1e-10
      %v2815 = vadd.f32 %v2799, 1e-10
      %v2816 = vadd.f32 %v2800, 1e-10
      %v2817 = vadd.f32 %v2801, 1e-10
      %v2818 = vadd.f32 %v2802, 1e-10
      %v2819 = vadd.f32 %v2803, 1e-10
      %v2820 = vadd.f32 %v2804, 1e-10
      %v2821 = vadd.f32 %v2805, 1e-10
      %v2822 = vadd.f32 %v2806, 1e-10
      %v2823 = vadd.f32 %v2807, 1e-10
      %v2824 = vadd.f32 %v2808, 1e-10
      %v2825 = vadd.f32 %v2809, 1e-10
      %v2826 = vadd.f32 %v2810, 1e-10
      %v2827 = vmin.f32 %v2811, 0.999999
      %v2828 = vmin.f32 %v2812, 0.999999
      %v2829 = vmin.f32 %v2813, 0.999999
      %v2830 = vmin.f32 %v2814, 0.999999
      %v2831 = vmin.f32 %v2815, 0.999999
      %v2832 = vmin.f32 %v2816, 0.999999
      %v2833 = vmin.f32 %v2817, 0.999999
      %v2834 = vmin.f32 %v2818, 0.999999
      %v2835 = vmin.f32 %v2819, 0.999999
      %v2836 = vmin.f32 %v2820, 0.999999
      %v2837 = vmin.f32 %v2821, 0.999999
      %v2838 = vmin.f32 %v2822, 0.999999
      %v2839 = vmin.f32 %v2823, 0.999999
      %v2840 = vmin.f32 %v2824, 0.999999
      %v2841 = vmin.f32 %v2825, 0.999999
      %v2842 = vmin.f32 %v2826, 0.999999
      %v2843 = vlog2.pop %v2827
      %v2844 = vmul.f32 %v2843, 0.6931472
      %v2845 = vlog2.pop %v2828
      %v2846 = vmul.f32 %v2845, 0.6931472
      %v2847 = vlog2.pop %v2829
      %v2848 = vmul.f32 %v2847, 0.6931472
      %v2849 = vlog2.pop %v2830
      %v2850 = vmul.f32 %v2849, 0.6931472
      %v2851 = vlog2.pop %v2831
      %v2852 = vmul.f32 %v2851, 0.6931472
      %v2853 = vlog2.pop %v2832
      %v2854 = vmul.f32 %v2853, 0.6931472
      %v2855 = vlog2.pop %v2833
      %v2856 = vmul.f32 %v2855, 0.6931472
      %v2857 = vlog2.pop %v2834
      %v2858 = vmul.f32 %v2857, 0.6931472
      %v2859 = vlog2.pop %v2835
      %v2860 = vmul.f32 %v2859, 0.6931472
      %v2861 = vlog2.pop %v2836
      %v2862 = vmul.f32 %v2861, 0.6931472
      %v2863 = vlog2.pop %v2837
      %v2864 = vmul.f32 %v2863, 0.6931472
      %v2865 = vlog2.pop %v2838
      %v2866 = vmul.f32 %v2865, 0.6931472
      %v2867 = vlog2.pop %v2839
      %v2868 = vmul.f32 %v2867, 0.6931472
      %v2869 = vlog2.pop %v2840
      %v2870 = vmul.f32 %v2869, 0.6931472
      %v2871 = vlog2.pop %v2841
      %v2872 = vmul.f32 %v2871, 0.6931472
      %v2873 = vlog2.pop %v2842
      %v2874 = vmul.f32 %v2873, 0.6931472
      %v2875 = vsub.f32 1.0, %v2827
      %v2876 = vsub.f32 1.0, %v2828
      %v2877 = vsub.f32 1.0, %v2829
      %v2878 = vsub.f32 1.0, %v2830
      %v2879 = vsub.f32 1.0, %v2831
      %v2880 = vsub.f32 1.0, %v2832
      %v2881 = vsub.f32 1.0, %v2833
      %v2882 = vsub.f32 1.0, %v2834
      %v2883 = vsub.f32 1.0, %v2835
      %v2884 = vsub.f32 1.0, %v2836
      %v2885 = vsub.f32 1.0, %v2837
      %v2886 = vsub.f32 1.0, %v2838
      %v2887 = vsub.f32 1.0, %v2839
      %v2888 = vsub.f32 1.0, %v2840
      %v2889 = vsub.f32 1.0, %v2841
      %v2890 = vsub.f32 1.0, %v2842
      %v2891 = vlog2.pop %v2875
      %v2892 = vmul.f32 %v2891, 0.6931472
      %v2893 = vlog2.pop %v2876
      %v2894 = vmul.f32 %v2893, 0.6931472
      %v2895 = vlog2.pop %v2877
      %v2896 = vmul.f32 %v2895, 0.6931472
      %v2897 = vlog2.pop %v2878
      %v2898 = vmul.f32 %v2897, 0.6931472
      %v2899 = vlog2.pop %v2879
      %v2900 = vmul.f32 %v2899, 0.6931472
      %v2901 = vlog2.pop %v2880
      %v2902 = vmul.f32 %v2901, 0.6931472
      %v2903 = vlog2.pop %v2881
      %v2904 = vmul.f32 %v2903, 0.6931472
      %v2905 = vlog2.pop %v2882
      %v2906 = vmul.f32 %v2905, 0.6931472
      %v2907 = vlog2.pop %v2883
      %v2908 = vmul.f32 %v2907, 0.6931472
      %v2909 = vlog2.pop %v2884
      %v2910 = vmul.f32 %v2909, 0.6931472
      %v2911 = vlog2.pop %v2885
      %v2912 = vmul.f32 %v2911, 0.6931472
      %v2913 = vlog2.pop %v2886
      %v2914 = vmul.f32 %v2913, 0.6931472
      %v2915 = vlog2.pop %v2887
      %v2916 = vmul.f32 %v2915, 0.6931472
      %v2917 = vlog2.pop %v2888
      %v2918 = vmul.f32 %v2917, 0.6931472
      %v2919 = vlog2.pop %v2889
      %v2920 = vmul.f32 %v2919, 0.6931472
      %v2921 = vlog2.pop %v2890
      %v2922 = vmul.f32 %v2921, 0.6931472
      %v2923 = vsub.f32 %v2844, %v2892
      %v2924 = vsub.f32 %v2846, %v2894
      %v2925 = vsub.f32 %v2848, %v2896
      %v2926 = vsub.f32 %v2850, %v2898
      %v2927 = vsub.f32 %v2852, %v2900
      %v2928 = vsub.f32 %v2854, %v2902
      %v2929 = vsub.f32 %v2856, %v2904
      %v2930 = vsub.f32 %v2858, %v2906
      %v2931 = vsub.f32 %v2860, %v2908
      %v2932 = vsub.f32 %v2862, %v2910
      %v2933 = vsub.f32 %v2864, %v2912
      %v2934 = vsub.f32 %v2866, %v2914
      %v2935 = vsub.f32 %v2868, %v2916
      %v2936 = vsub.f32 %v2870, %v2918
      %v2937 = vsub.f32 %v2872, %v2920
      %v2938 = vsub.f32 %v2874, %v2922
      %2955 = vrot.lane.b32.xlu0 %v1172, 96
      %v2956 = vpop.permute.xlu0 %2955
      %2957 = vrot.lane.b32.xlu0 %v1177, 96
      %v2958 = vpop.permute.xlu0 %2957
      %2959 = vrot.lane.b32.xlu0 %v1182, 96
      %v2960 = vpop.permute.xlu0 %2959
      %2961 = vrot.lane.b32.xlu0 %v1187, 96
      %v2962 = vpop.permute.xlu0 %2961
      %2963 = vrot.lane.b32.xlu0 %v1192, 96
      %v2964 = vpop.permute.xlu0 %2963
      %2965 = vrot.lane.b32.xlu0 %v1197, 96
      %v2966 = vpop.permute.xlu0 %2965
      %2967 = vrot.lane.b32.xlu0 %v1202, 96
      %v2968 = vpop.permute.xlu0 %2967
      %2969 = vrot.lane.b32.xlu0 %v1207, 96
      %v2970 = vpop.permute.xlu0 %2969
      %2971 = vrot.lane.b32.xlu0 %v1212, 96
      %v2972 = vpop.permute.xlu0 %2971
      %2973 = vrot.lane.b32.xlu0 %v1217, 96
      %v2974 = vpop.permute.xlu0 %2973
      %2975 = vrot.lane.b32.xlu0 %v1222, 96
      %v2976 = vpop.permute.xlu0 %2975
      %2977 = vrot.lane.b32.xlu0 %v1227, 96
      %v2978 = vpop.permute.xlu0 %2977
      %2979 = vrot.lane.b32.xlu0 %v1232, 96
      %v2980 = vpop.permute.xlu0 %2979
      %2981 = vrot.lane.b32.xlu0 %v1237, 96
      %v2982 = vpop.permute.xlu0 %2981
      %2983 = vrot.lane.b32.xlu0 %v1242, 96
      %v2984 = vpop.permute.xlu0 %2983
      %2985 = vrot.lane.b32.xlu0 %v1247, 96
      %v2986 = vpop.permute.xlu0 %2985
      %v3003 = vadd.f32 %v2923, %v2956
      %v3004 = vadd.f32 %v2924, %v2958
      %v3005 = vadd.f32 %v2925, %v2960
      %v3006 = vadd.f32 %v2926, %v2962
      %v3007 = vadd.f32 %v2927, %v2964
      %v3008 = vadd.f32 %v2928, %v2966
      %v3009 = vadd.f32 %v2929, %v2968
      %v3010 = vadd.f32 %v2930, %v2970
      %v3011 = vadd.f32 %v2931, %v2972
      %v3012 = vadd.f32 %v2932, %v2974
      %v3013 = vadd.f32 %v2933, %v2976
      %v3014 = vadd.f32 %v2934, %v2978
      %v3015 = vadd.f32 %v2935, %v2980
      %v3016 = vadd.f32 %v2936, %v2982
      %v3017 = vadd.f32 %v2937, %v2984
      %v3018 = vadd.f32 %v2938, %v2986
      %3019 = vrot.lane.b32.xlu0 %v147, 56
      %v3020 = vpop.permute.xlu0 %3019
      %3021 = vrot.lane.b32.xlu0 %v148, 56
      %v3022 = vpop.permute.xlu0 %3021
      %3023 = vrot.lane.b32.xlu0 %v149, 56
      %v3024 = vpop.permute.xlu0 %3023
      %3025 = vrot.lane.b32.xlu0 %v150, 56
      %v3026 = vpop.permute.xlu0 %3025
      %3027 = vrot.lane.b32.xlu0 %v151, 56
      %v3028 = vpop.permute.xlu0 %3027
      %3029 = vrot.lane.b32.xlu0 %v152, 56
      %v3030 = vpop.permute.xlu0 %3029
      %3031 = vrot.lane.b32.xlu0 %v153, 56
      %v3032 = vpop.permute.xlu0 %3031
      %3033 = vrot.lane.b32.xlu0 %v154, 56
      %v3034 = vpop.permute.xlu0 %3033
      %3035 = vrot.lane.b32.xlu0 %v155, 56
      %v3036 = vpop.permute.xlu0 %3035
      %3037 = vrot.lane.b32.xlu0 %v156, 56
      %v3038 = vpop.permute.xlu0 %3037
      %3039 = vrot.lane.b32.xlu0 %v157, 56
      %v3040 = vpop.permute.xlu0 %3039
      %3041 = vrot.lane.b32.xlu0 %v158, 56
      %v3042 = vpop.permute.xlu0 %3041
      %3043 = vrot.lane.b32.xlu0 %v159, 56
      %v3044 = vpop.permute.xlu0 %3043
      %3045 = vrot.lane.b32.xlu0 %v160, 56
      %v3046 = vpop.permute.xlu0 %3045
      %3047 = vrot.lane.b32.xlu0 %v161, 56
      %v3048 = vpop.permute.xlu0 %3047
      %3049 = vrot.lane.b32.xlu0 %v162, 56
      %v3050 = vpop.permute.xlu0 %3049
      %v3067 = vadd.f32 %v3003, %v3020
      %v3068 = vadd.f32 %v3004, %v3022
      %v3069 = vadd.f32 %v3005, %v3024
      %v3070 = vadd.f32 %v3006, %v3026
      %v3071 = vadd.f32 %v3007, %v3028
      %v3072 = vadd.f32 %v3008, %v3030
      %v3073 = vadd.f32 %v3009, %v3032
      %v3074 = vadd.f32 %v3010, %v3034
      %v3075 = vadd.f32 %v3011, %v3036
      %v3076 = vadd.f32 %v3012, %v3038
      %v3077 = vadd.f32 %v3013, %v3040
      %v3078 = vadd.f32 %v3014, %v3042
      %v3079 = vadd.f32 %v3015, %v3044
      %v3080 = vadd.f32 %v3016, %v3046
      %v3081 = vadd.f32 %v3017, %v3048
      %v3082 = vadd.f32 %v3018, %v3050
      %3083 = vrot.lane.b32.xlu0 %v147, 48
      %v3084 = vpop.permute.xlu0 %3083
      %3085 = vrot.lane.b32.xlu0 %v148, 48
      %v3086 = vpop.permute.xlu0 %3085
      %3087 = vrot.lane.b32.xlu0 %v149, 48
      %v3088 = vpop.permute.xlu0 %3087
      %3089 = vrot.lane.b32.xlu0 %v150, 48
      %v3090 = vpop.permute.xlu0 %3089
      %3091 = vrot.lane.b32.xlu0 %v151, 48
      %v3092 = vpop.permute.xlu0 %3091
      %3093 = vrot.lane.b32.xlu0 %v152, 48
      %v3094 = vpop.permute.xlu0 %3093
      %3095 = vrot.lane.b32.xlu0 %v153, 48
      %v3096 = vpop.permute.xlu0 %3095
      %3097 = vrot.lane.b32.xlu0 %v154, 48
      %v3098 = vpop.permute.xlu0 %3097
      %3099 = vrot.lane.b32.xlu0 %v155, 48
      %v3100 = vpop.permute.xlu0 %3099
      %3101 = vrot.lane.b32.xlu0 %v156, 48
      %v3102 = vpop.permute.xlu0 %3101
      %3103 = vrot.lane.b32.xlu0 %v157, 48
      %v3104 = vpop.permute.xlu0 %3103
      %3105 = vrot.lane.b32.xlu0 %v158, 48
      %v3106 = vpop.permute.xlu0 %3105
      %3107 = vrot.lane.b32.xlu0 %v159, 48
      %v3108 = vpop.permute.xlu0 %3107
      %3109 = vrot.lane.b32.xlu0 %v160, 48
      %v3110 = vpop.permute.xlu0 %3109
      %3111 = vrot.lane.b32.xlu0 %v161, 48
      %v3112 = vpop.permute.xlu0 %3111
      %3113 = vrot.lane.b32.xlu0 %v162, 48
      %v3114 = vpop.permute.xlu0 %3113
      %v3131 = vsub.f32 %v3067, %v3084
      %v3132 = vsub.f32 %v3068, %v3086
      %v3133 = vsub.f32 %v3069, %v3088
      %v3134 = vsub.f32 %v3070, %v3090
      %v3135 = vsub.f32 %v3071, %v3092
      %v3136 = vsub.f32 %v3072, %v3094
      %v3137 = vsub.f32 %v3073, %v3096
      %v3138 = vsub.f32 %v3074, %v3098
      %v3139 = vsub.f32 %v3075, %v3100
      %v3140 = vsub.f32 %v3076, %v3102
      %v3141 = vsub.f32 %v3077, %v3104
      %v3142 = vsub.f32 %v3078, %v3106
      %v3143 = vsub.f32 %v3079, %v3108
      %v3144 = vsub.f32 %v3080, %v3110
      %v3145 = vsub.f32 %v3081, %v3112
      %v3146 = vsub.f32 %v3082, %v3114
      %v3147 = vmul.f32 %v3131, 0.5
      %v3148 = vmul.f32 %v3132, 0.5
      %v3149 = vmul.f32 %v3133, 0.5
      %v3150 = vmul.f32 %v3134, 0.5
      %v3151 = vmul.f32 %v3135, 0.5
      %v3152 = vmul.f32 %v3136, 0.5
      %v3153 = vmul.f32 %v3137, 0.5
      %v3154 = vmul.f32 %v3138, 0.5
      %v3155 = vmul.f32 %v3139, 0.5
      %v3156 = vmul.f32 %v3140, 0.5
      %v3157 = vmul.f32 %v3141, 0.5
      %v3158 = vmul.f32 %v3142, 0.5
      %v3159 = vmul.f32 %v3143, 0.5
      %v3160 = vmul.f32 %v3144, 0.5
      %v3161 = vmul.f32 %v3145, 0.5
      %v3162 = vmul.f32 %v3146, 0.5
      %v3163 = vtanh.pop %v3147
      %v3164 = vtanh.pop %v3148
      %v3165 = vtanh.pop %v3149
      %v3166 = vtanh.pop %v3150
      %v3167 = vtanh.pop %v3151
      %v3168 = vtanh.pop %v3152
      %v3169 = vtanh.pop %v3153
      %v3170 = vtanh.pop %v3154
      %v3171 = vtanh.pop %v3155
      %v3172 = vtanh.pop %v3156
      %v3173 = vtanh.pop %v3157
      %v3174 = vtanh.pop %v3158
      %v3175 = vtanh.pop %v3159
      %v3176 = vtanh.pop %v3160
      %v3177 = vtanh.pop %v3161
      %v3178 = vtanh.pop %v3162
      %v3179 = vadd.f32 %v3163, 1.0
      %v3180 = vadd.f32 %v3164, 1.0
      %v3181 = vadd.f32 %v3165, 1.0
      %v3182 = vadd.f32 %v3166, 1.0
      %v3183 = vadd.f32 %v3167, 1.0
      %v3184 = vadd.f32 %v3168, 1.0
      %v3185 = vadd.f32 %v3169, 1.0
      %v3186 = vadd.f32 %v3170, 1.0
      %v3187 = vadd.f32 %v3171, 1.0
      %v3188 = vadd.f32 %v3172, 1.0
      %v3189 = vadd.f32 %v3173, 1.0
      %v3190 = vadd.f32 %v3174, 1.0
      %v3191 = vadd.f32 %v3175, 1.0
      %v3192 = vadd.f32 %v3176, 1.0
      %v3193 = vadd.f32 %v3177, 1.0
      %v3194 = vadd.f32 %v3178, 1.0
      %v3195 = vmul.f32 %v3179, 0.5
      %v3196 = vmul.f32 %v3180, 0.5
      %v3197 = vmul.f32 %v3181, 0.5
      %v3198 = vmul.f32 %v3182, 0.5
      %v3199 = vmul.f32 %v3183, 0.5
      %v3200 = vmul.f32 %v3184, 0.5
      %v3201 = vmul.f32 %v3185, 0.5
      %v3202 = vmul.f32 %v3186, 0.5
      %v3203 = vmul.f32 %v3187, 0.5
      %v3204 = vmul.f32 %v3188, 0.5
      %v3205 = vmul.f32 %v3189, 0.5
      %v3206 = vmul.f32 %v3190, 0.5
      %v3207 = vmul.f32 %v3191, 0.5
      %v3208 = vmul.f32 %v3192, 0.5
      %v3209 = vmul.f32 %v3193, 0.5
      %v3210 = vmul.f32 %v3194, 0.5
      %v3211 = vmul.f32 %v3003, 0.5
      %v3212 = vmul.f32 %v3004, 0.5
      %v3213 = vmul.f32 %v3005, 0.5
      %v3214 = vmul.f32 %v3006, 0.5
      %v3215 = vmul.f32 %v3007, 0.5
      %v3216 = vmul.f32 %v3008, 0.5
      %v3217 = vmul.f32 %v3009, 0.5
      %v3218 = vmul.f32 %v3010, 0.5
      %v3219 = vmul.f32 %v3011, 0.5
      %v3220 = vmul.f32 %v3012, 0.5
      %v3221 = vmul.f32 %v3013, 0.5
      %v3222 = vmul.f32 %v3014, 0.5
      %v3223 = vmul.f32 %v3015, 0.5
      %v3224 = vmul.f32 %v3016, 0.5
      %v3225 = vmul.f32 %v3017, 0.5
      %v3226 = vmul.f32 %v3018, 0.5
      %v3227 = vtanh.pop %v3211
      %v3228 = vtanh.pop %v3212
      %v3229 = vtanh.pop %v3213
      %v3230 = vtanh.pop %v3214
      %v3231 = vtanh.pop %v3215
      %v3232 = vtanh.pop %v3216
      %v3233 = vtanh.pop %v3217
      %v3234 = vtanh.pop %v3218
      %v3235 = vtanh.pop %v3219
      %v3236 = vtanh.pop %v3220
      %v3237 = vtanh.pop %v3221
      %v3238 = vtanh.pop %v3222
      %v3239 = vtanh.pop %v3223
      %v3240 = vtanh.pop %v3224
      %v3241 = vtanh.pop %v3225
      %v3242 = vtanh.pop %v3226
      %v3243 = vadd.f32 %v3227, 1.0
      %v3244 = vadd.f32 %v3228, 1.0
      %v3245 = vadd.f32 %v3229, 1.0
      %v3246 = vadd.f32 %v3230, 1.0
      %v3247 = vadd.f32 %v3231, 1.0
      %v3248 = vadd.f32 %v3232, 1.0
      %v3249 = vadd.f32 %v3233, 1.0
      %v3250 = vadd.f32 %v3234, 1.0
      %v3251 = vadd.f32 %v3235, 1.0
      %v3252 = vadd.f32 %v3236, 1.0
      %v3253 = vadd.f32 %v3237, 1.0
      %v3254 = vadd.f32 %v3238, 1.0
      %v3255 = vadd.f32 %v3239, 1.0
      %v3256 = vadd.f32 %v3240, 1.0
      %v3257 = vadd.f32 %v3241, 1.0
      %v3258 = vadd.f32 %v3242, 1.0
      %v3259 = vmul.f32 %v3243, 0.5
      %v3260 = vmul.f32 %v3244, 0.5
      %v3261 = vmul.f32 %v3245, 0.5
      %v3262 = vmul.f32 %v3246, 0.5
      %v3263 = vmul.f32 %v3247, 0.5
      %v3264 = vmul.f32 %v3248, 0.5
      %v3265 = vmul.f32 %v3249, 0.5
      %v3266 = vmul.f32 %v3250, 0.5
      %v3267 = vmul.f32 %v3251, 0.5
      %v3268 = vmul.f32 %v3252, 0.5
      %v3269 = vmul.f32 %v3253, 0.5
      %v3270 = vmul.f32 %v3254, 0.5
      %v3271 = vmul.f32 %v3255, 0.5
      %v3272 = vmul.f32 %v3256, 0.5
      %v3273 = vmul.f32 %v3257, 0.5
      %v3274 = vmul.f32 %v3258, 0.5
      %v3275 = vmul.f32 %v1586, %v3195
      %v3276 = vmul.f32 %v1587, %v3196
      %v3277 = vmul.f32 %v1588, %v3197
      %v3278 = vmul.f32 %v1589, %v3198
      %v3279 = vmul.f32 %v1590, %v3199
      %v3280 = vmul.f32 %v1591, %v3200
      %v3281 = vmul.f32 %v1592, %v3201
      %v3282 = vmul.f32 %v1593, %v3202
      %v3283 = vmul.f32 %v1594, %v3203
      %v3284 = vmul.f32 %v1595, %v3204
      %v3285 = vmul.f32 %v1596, %v3205
      %v3286 = vmul.f32 %v1597, %v3206
      %v3287 = vmul.f32 %v1598, %v3207
      %v3288 = vmul.f32 %v1599, %v3208
      %v3289 = vmul.f32 %v1600, %v3209
      %v3290 = vmul.f32 %v1601, %v3210
      %vm3291 = vcmask 64512
      %v3293 = vsel %vm3291, %v3275, 0
      %v3296 = vsel %vm3291, %v3276, 0
      %v3299 = vsel %vm3291, %v3277, 0
      %v3302 = vsel %vm3291, %v3278, 0
      %v3305 = vsel %vm3291, %v3279, 0
      %v3308 = vsel %vm3291, %v3280, 0
      %v3311 = vsel %vm3291, %v3281, 0
      %v3314 = vsel %vm3291, %v3282, 0
      %v3317 = vsel %vm3291, %v3283, 0
      %v3320 = vsel %vm3291, %v3284, 0
      %v3323 = vsel %vm3291, %v3285, 0
      %v3326 = vsel %vm3291, %v3286, 0
      %v3329 = vsel %vm3291, %v3287, 0
      %v3332 = vsel %vm3291, %v3288, 0
      %v3335 = vsel %vm3291, %v3289, 0
      %v3338 = vsel %vm3291, %v3290, 0
      %3340 = vmatprep.subr.mxu0 0.0
      %3341 = vmatpush1.msra.mxu0 %v177
      %3342 = vmatprep.subr.mxu0 0.0
      %3343 = vmatpush1.msra.mxu0 0.0
      %3344 = vmatprep.subr.mxu0 0.0
      %3345 = vmatpush1.msra.mxu0 0.0
      %3346 = vmatprep.subr.mxu0 0.0
      %3347 = vmatpush1.msra.mxu0 0.0
      %3348 = vmatprep.subr.mxu0 0.0
      %3349 = vmatpush1.msra.mxu0 0.0
      %3350 = vmatprep.subr.mxu0 0.0
      %3351 = vmatpush1.msra.mxu0 0.0
      %3352 = vmatprep.subr.mxu0 0.0
      %3353 = vmatpush1.msra.mxu0 0.0
      %3354 = vmatprep.subr.mxu0 0.0
      %3355 = vmatpush1.msra.mxu0 0.0
      %3356 = vmatprep.subr.mxu0 0.0
      %3357 = vmatpush1.msra.mxu0 0.0
      %3358 = vmatprep.subr.mxu0 0.0
      %3359 = vmatpush1.msra.mxu0 0.0
      %3360 = vmatprep.subr.mxu0 0.0
      %3361 = vmatpush1.msra.mxu0 0.0
      %3362 = vmatprep.subr.mxu0 0.0
      %3363 = vmatpush1.msra.mxu0 0.0
      %3364 = vmatprep.subr.mxu0 0.0
      %3365 = vmatpush1.msra.mxu0 0.0
      %3366 = vmatprep.subr.mxu0 0.0
      %3367 = vmatpush1.msra.mxu0 0.0
      %3368 = vmatprep.subr.mxu0 0.0
      %3369 = vmatpush1.msra.mxu0 0.0
      %3370 = vmatprep.subr.mxu0 0.0
      %3371 = vmatpush1.msra.mxu0 0.0
      %3372 = vmatprep.subr.mxu0 0.0
      %3373 = vmatpush1.msra.mxu0 0.0
      %3374 = vmatprep.subr.mxu0 0.0
      %3375 = vmatpush1.msra.mxu0 0.0
      %3376 = vmatprep.subr.mxu0 0.0
      %3377 = vmatpush1.msra.mxu0 0.0
      %3378 = vmatprep.subr.mxu0 0.0
      %3379 = vmatpush1.msra.mxu0 0.0
      %3380 = vmatprep.subr.mxu0 0.0
      %3381 = vmatpush1.msra.mxu0 0.0
      %3382 = vmatprep.subr.mxu0 0.0
      %3383 = vmatpush1.msra.mxu0 0.0
      %3384 = vmatprep.subr.mxu0 0.0
      %3385 = vmatpush1.msra.mxu0 0.0
      %3386 = vmatprep.subr.mxu0 0.0
      %3387 = vmatpush1.msra.mxu0 0.0
      %3388 = vmatprep.subr.mxu0 0.0
      %3389 = vmatpush1.msra.mxu0 0.0
      %3390 = vmatprep.subr.mxu0 0.0
      %3391 = vmatpush1.msra.mxu0 0.0
      %3392 = vmatprep.subr.mxu0 0.0
      %3393 = vmatpush1.msra.mxu0 0.0
      %3394 = vmatprep.subr.mxu0 0.0
      %3395 = vmatpush1.msra.mxu0 0.0
      %3396 = vmatprep.subr.mxu0 0.0
      %3397 = vmatpush1.msra.mxu0 0.0
      %3398 = vmatprep.subr.mxu0 0.0
      %3399 = vmatpush1.msra.mxu0 0.0
      %3400 = vmatprep.subr.mxu0 0.0
      %3401 = vmatpush1.msra.mxu0 0.0
      %3402 = vmatprep.subr.mxu0 0.0
      %3403 = vmatpush1.msra.mxu0 0.0
      %3404 = vmatprep.mubr.f32.mxu0 0.0
      %3405 = vmatmul.mubr.f32.gmra.mrb[0].mxu0 %v3293
      %v3406 = vpop.f32.mrb[0].mxu0
      %v3407 = vadd.f32 0.0, %v3406
      %v3408 = vpop.f32.mrb[0].mxu0
      %3409 = vmatprep.mubr.f32.mxu0 0.0
      %3410 = vmatmul.mubr.f32.gmra.mrb[0].mxu0 %v3296
      %v3411 = vpop.f32.mrb[0].mxu0
      %v3412 = vadd.f32 0.0, %v3411
      %v3413 = vpop.f32.mrb[0].mxu0
      %3414 = vmatprep.mubr.f32.mxu0 0.0
      %3415 = vmatmul.mubr.f32.gmra.mrb[0].mxu0 %v3299
      %v3416 = vpop.f32.mrb[0].mxu0
      %v3417 = vadd.f32 0.0, %v3416
      %v3418 = vpop.f32.mrb[0].mxu0
      %3419 = vmatprep.mubr.f32.mxu0 0.0
      %3420 = vmatmul.mubr.f32.gmra.mrb[0].mxu0 %v3302
      %v3421 = vpop.f32.mrb[0].mxu0
      %v3422 = vadd.f32 0.0, %v3421
      %v3423 = vpop.f32.mrb[0].mxu0
      %3424 = vmatprep.mubr.f32.mxu0 0.0
      %3425 = vmatmul.mubr.f32.gmra.mrb[0].mxu0 %v3305
      %v3426 = vpop.f32.mrb[0].mxu0
      %v3427 = vadd.f32 0.0, %v3426
      %v3428 = vpop.f32.mrb[0].mxu0
      %3429 = vmatprep.mubr.f32.mxu0 0.0
      %3430 = vmatmul.mubr.f32.gmra.mrb[0].mxu0 %v3308
      %v3431 = vpop.f32.mrb[0].mxu0
      %v3432 = vadd.f32 0.0, %v3431
      %v3433 = vpop.f32.mrb[0].mxu0
      %3434 = vmatprep.mubr.f32.mxu0 0.0
      %3435 = vmatmul.mubr.f32.gmra.mrb[0].mxu0 %v3311
      %v3436 = vpop.f32.mrb[0].mxu0
      %v3437 = vadd.f32 0.0, %v3436
      %v3438 = vpop.f32.mrb[0].mxu0
      %3439 = vmatprep.mubr.f32.mxu0 0.0
      %3440 = vmatmul.mubr.f32.gmra.mrb[0].mxu0 %v3314
      %v3441 = vpop.f32.mrb[0].mxu0
      %v3442 = vadd.f32 0.0, %v3441
      %v3443 = vpop.f32.mrb[0].mxu0
      %3444 = vmatprep.mubr.f32.mxu0 0.0
      %3445 = vmatmul.mubr.f32.gmra.mrb[0].mxu0 %v3317
      %v3446 = vpop.f32.mrb[0].mxu0
      %v3447 = vadd.f32 0.0, %v3446
      %v3448 = vpop.f32.mrb[0].mxu0
      %3449 = vmatprep.mubr.f32.mxu0 0.0
      %3450 = vmatmul.mubr.f32.gmra.mrb[0].mxu0 %v3320
      %v3451 = vpop.f32.mrb[0].mxu0
      %v3452 = vadd.f32 0.0, %v3451
      %v3453 = vpop.f32.mrb[0].mxu0
      %3454 = vmatprep.mubr.f32.mxu0 0.0
      %3455 = vmatmul.mubr.f32.gmra.mrb[0].mxu0 %v3323
      %v3456 = vpop.f32.mrb[0].mxu0
      %v3457 = vadd.f32 0.0, %v3456
      %v3458 = vpop.f32.mrb[0].mxu0
      %3459 = vmatprep.mubr.f32.mxu0 0.0
      %3460 = vmatmul.mubr.f32.gmra.mrb[0].mxu0 %v3326
      %v3461 = vpop.f32.mrb[0].mxu0
      %v3462 = vadd.f32 0.0, %v3461
      %v3463 = vpop.f32.mrb[0].mxu0
      %3464 = vmatprep.mubr.f32.mxu0 0.0
      %3465 = vmatmul.mubr.f32.gmra.mrb[0].mxu0 %v3329
      %v3466 = vpop.f32.mrb[0].mxu0
      %v3467 = vadd.f32 0.0, %v3466
      %v3468 = vpop.f32.mrb[0].mxu0
      %3469 = vmatprep.mubr.f32.mxu0 0.0
      %3470 = vmatmul.mubr.f32.gmra.mrb[0].mxu0 %v3332
      %v3471 = vpop.f32.mrb[0].mxu0
      %v3472 = vadd.f32 0.0, %v3471
      %v3473 = vpop.f32.mrb[0].mxu0
      %3474 = vmatprep.mubr.f32.mxu0 0.0
      %3475 = vmatmul.mubr.f32.gmra.mrb[0].mxu0 %v3335
      %v3476 = vpop.f32.mrb[0].mxu0
      %v3477 = vadd.f32 0.0, %v3476
      %v3478 = vpop.f32.mrb[0].mxu0
      %3479 = vmatprep.mubr.f32.mxu0 0.0
      %3480 = vmatmul.mubr.f32.gmra.mrb[0].mxu0 %v3338
      %v3481 = vpop.f32.mrb[0].mxu0
      %v3482 = vadd.f32 0.0, %v3481
      %v3483 = vpop.f32.mrb[0].mxu0
      %3484 = vdwg.mxu0
      %3501 = vrot.lane.b32.xlu0 %v1586, 120
      %v3502 = vpop.permute.xlu0 %3501
      %3503 = vrot.lane.b32.xlu0 %v1587, 120
      %v3504 = vpop.permute.xlu0 %3503
      %3505 = vrot.lane.b32.xlu0 %v1588, 120
      %v3506 = vpop.permute.xlu0 %3505
      %3507 = vrot.lane.b32.xlu0 %v1589, 120
      %v3508 = vpop.permute.xlu0 %3507
      %3509 = vrot.lane.b32.xlu0 %v1590, 120
      %v3510 = vpop.permute.xlu0 %3509
      %3511 = vrot.lane.b32.xlu0 %v1591, 120
      %v3512 = vpop.permute.xlu0 %3511
      %3513 = vrot.lane.b32.xlu0 %v1592, 120
      %v3514 = vpop.permute.xlu0 %3513
      %3515 = vrot.lane.b32.xlu0 %v1593, 120
      %v3516 = vpop.permute.xlu0 %3515
      %3517 = vrot.lane.b32.xlu0 %v1594, 120
      %v3518 = vpop.permute.xlu0 %3517
      %3519 = vrot.lane.b32.xlu0 %v1595, 120
      %v3520 = vpop.permute.xlu0 %3519
      %3521 = vrot.lane.b32.xlu0 %v1596, 120
      %v3522 = vpop.permute.xlu0 %3521
      %3523 = vrot.lane.b32.xlu0 %v1597, 120
      %v3524 = vpop.permute.xlu0 %3523
      %3525 = vrot.lane.b32.xlu0 %v1598, 120
      %v3526 = vpop.permute.xlu0 %3525
      %3527 = vrot.lane.b32.xlu0 %v1599, 120
      %v3528 = vpop.permute.xlu0 %3527
      %3529 = vrot.lane.b32.xlu0 %v1600, 120
      %v3530 = vpop.permute.xlu0 %3529
      %3531 = vrot.lane.b32.xlu0 %v1601, 120
      %v3532 = vpop.permute.xlu0 %3531
      %v3533 = vsel %vm3291, %v3502, 0
      %v3535 = vsel %vm3291, %v3504, 0
      %v3537 = vsel %vm3291, %v3506, 0
      %v3539 = vsel %vm3291, %v3508, 0
      %v3541 = vsel %vm3291, %v3510, 0
      %v3543 = vsel %vm3291, %v3512, 0
      %v3545 = vsel %vm3291, %v3514, 0
      %v3547 = vsel %vm3291, %v3516, 0
      %v3549 = vsel %vm3291, %v3518, 0
      %v3551 = vsel %vm3291, %v3520, 0
      %v3553 = vsel %vm3291, %v3522, 0
      %v3555 = vsel %vm3291, %v3524, 0
      %v3557 = vsel %vm3291, %v3526, 0
      %v3559 = vsel %vm3291, %v3528, 0
      %v3561 = vsel %vm3291, %v3530, 0
      %v3563 = vsel %vm3291, %v3532, 0
      %3565 = vmatprep.subr.mxu0 0.0
      %3566 = vmatpush1.msra.mxu0 %v175
      %3567 = vmatprep.subr.mxu0 0.0
      %3568 = vmatpush1.msra.mxu0 0.0
      %3569 = vmatprep.subr.mxu0 0.0
      %3570 = vmatpush1.msra.mxu0 0.0
      %3571 = vmatprep.subr.mxu0 0.0
      %3572 = vmatpush1.msra.mxu0 0.0
      %3573 = vmatprep.subr.mxu0 0.0
      %3574 = vmatpush1.msra.mxu0 0.0
      %3575 = vmatprep.subr.mxu0 0.0
      %3576 = vmatpush1.msra.mxu0 0.0
      %3577 = vmatprep.subr.mxu0 0.0
      %3578 = vmatpush1.msra.mxu0 0.0
      %3579 = vmatprep.subr.mxu0 0.0
      %3580 = vmatpush1.msra.mxu0 0.0
      %3581 = vmatprep.subr.mxu0 0.0
      %3582 = vmatpush1.msra.mxu0 0.0
      %3583 = vmatprep.subr.mxu0 0.0
      %3584 = vmatpush1.msra.mxu0 0.0
      %3585 = vmatprep.subr.mxu0 0.0
      %3586 = vmatpush1.msra.mxu0 0.0
      %3587 = vmatprep.subr.mxu0 0.0
      %3588 = vmatpush1.msra.mxu0 0.0
      %3589 = vmatprep.subr.mxu0 0.0
      %3590 = vmatpush1.msra.mxu0 0.0
      %3591 = vmatprep.subr.mxu0 0.0
      %3592 = vmatpush1.msra.mxu0 0.0
      %3593 = vmatprep.subr.mxu0 0.0
      %3594 = vmatpush1.msra.mxu0 0.0
      %3595 = vmatprep.subr.mxu0 0.0
      %3596 = vmatpush1.msra.mxu0 0.0
      %3597 = vmatprep.subr.mxu0 0.0
      %3598 = vmatpush1.msra.mxu0 0.0
      %3599 = vmatprep.subr.mxu0 0.0
      %3600 = vmatpush1.msra.mxu0 0.0
      %3601 = vmatprep.subr.mxu0 0.0
      %3602 = vmatpush1.msra.mxu0 0.0
      %3603 = vmatprep.subr.mxu0 0.0
      %3604 = vmatpush1.msra.mxu0 0.0
      %3605 = vmatprep.subr.mxu0 0.0
      %3606 = vmatpush1.msra.mxu0 0.0
      %3607 = vmatprep.subr.mxu0 0.0
      %3608 = vmatpush1.msra.mxu0 0.0
      %3609 = vmatprep.subr.mxu0 0.0
      %3610 = vmatpush1.msra.mxu0 0.0
      %3611 = vmatprep.subr.mxu0 0.0
      %3612 = vmatpush1.msra.mxu0 0.0
      %3613 = vmatprep.subr.mxu0 0.0
      %3614 = vmatpush1.msra.mxu0 0.0
      %3615 = vmatprep.subr.mxu0 0.0
      %3616 = vmatpush1.msra.mxu0 0.0
      %3617 = vmatprep.subr.mxu0 0.0
      %3618 = vmatpush1.msra.mxu0 0.0
      %3619 = vmatprep.subr.mxu0 0.0
      %3620 = vmatpush1.msra.mxu0 0.0
      %3621 = vmatprep.subr.mxu0 0.0
      %3622 = vmatpush1.msra.mxu0 0.0
      %3623 = vmatprep.subr.mxu0 0.0
      %3624 = vmatpush1.msra.mxu0 0.0
      %3625 = vmatprep.subr.mxu0 0.0
      %3626 = vmatpush1.msra.mxu0 0.0
      %3627 = vmatprep.subr.mxu0 0.0
      %3628 = vmatpush1.msra.mxu0 0.0
      %3629 = vmatprep.mubr.f32.mxu0 0.0
      %3630 = vmatmul.mubr.f32.gmra.mrb[0].mxu0 %v3533
      %v3631 = vpop.f32.mrb[0].mxu0
      %v3632 = vadd.f32 0.0, %v3631
      %v3633 = vpop.f32.mrb[0].mxu0
      %3634 = vmatprep.mubr.f32.mxu0 0.0
      %3635 = vmatmul.mubr.f32.gmra.mrb[0].mxu0 %v3535
      %v3636 = vpop.f32.mrb[0].mxu0
      %v3637 = vadd.f32 0.0, %v3636
      %v3638 = vpop.f32.mrb[0].mxu0
      %3639 = vmatprep.mubr.f32.mxu0 0.0
      %3640 = vmatmul.mubr.f32.gmra.mrb[0].mxu0 %v3537
      %v3641 = vpop.f32.mrb[0].mxu0
      %v3642 = vadd.f32 0.0, %v3641
      %v3643 = vpop.f32.mrb[0].mxu0
      %3644 = vmatprep.mubr.f32.mxu0 0.0
      %3645 = vmatmul.mubr.f32.gmra.mrb[0].mxu0 %v3539
      %v3646 = vpop.f32.mrb[0].mxu0
      %v3647 = vadd.f32 0.0, %v3646
      %v3648 = vpop.f32.mrb[0].mxu0
      %3649 = vmatprep.mubr.f32.mxu0 0.0
      %3650 = vmatmul.mubr.f32.gmra.mrb[0].mxu0 %v3541
      %v3651 = vpop.f32.mrb[0].mxu0
      %v3652 = vadd.f32 0.0, %v3651
      %v3653 = vpop.f32.mrb[0].mxu0
      %3654 = vmatprep.mubr.f32.mxu0 0.0
      %3655 = vmatmul.mubr.f32.gmra.mrb[0].mxu0 %v3543
      %v3656 = vpop.f32.mrb[0].mxu0
      %v3657 = vadd.f32 0.0, %v3656
      %v3658 = vpop.f32.mrb[0].mxu0
      %3659 = vmatprep.mubr.f32.mxu0 0.0
      %3660 = vmatmul.mubr.f32.gmra.mrb[0].mxu0 %v3545
      %v3661 = vpop.f32.mrb[0].mxu0
      %v3662 = vadd.f32 0.0, %v3661
      %v3663 = vpop.f32.mrb[0].mxu0
      %3664 = vmatprep.mubr.f32.mxu0 0.0
      %3665 = vmatmul.mubr.f32.gmra.mrb[0].mxu0 %v3547
      %v3666 = vpop.f32.mrb[0].mxu0
      %v3667 = vadd.f32 0.0, %v3666
      %v3668 = vpop.f32.mrb[0].mxu0
      %3669 = vmatprep.mubr.f32.mxu0 0.0
      %3670 = vmatmul.mubr.f32.gmra.mrb[0].mxu0 %v3549
      %v3671 = vpop.f32.mrb[0].mxu0
      %v3672 = vadd.f32 0.0, %v3671
      %v3673 = vpop.f32.mrb[0].mxu0
      %3674 = vmatprep.mubr.f32.mxu0 0.0
      %3675 = vmatmul.mubr.f32.gmra.mrb[0].mxu0 %v3551
      %v3676 = vpop.f32.mrb[0].mxu0
      %v3677 = vadd.f32 0.0, %v3676
      %v3678 = vpop.f32.mrb[0].mxu0
      %3679 = vmatprep.mubr.f32.mxu0 0.0
      %3680 = vmatmul.mubr.f32.gmra.mrb[0].mxu0 %v3553
      %v3681 = vpop.f32.mrb[0].mxu0
      %v3682 = vadd.f32 0.0, %v3681
      %v3683 = vpop.f32.mrb[0].mxu0
      %3684 = vmatprep.mubr.f32.mxu0 0.0
      %3685 = vmatmul.mubr.f32.gmra.mrb[0].mxu0 %v3555
      %v3686 = vpop.f32.mrb[0].mxu0
      %v3687 = vadd.f32 0.0, %v3686
      %v3688 = vpop.f32.mrb[0].mxu0
      %3689 = vmatprep.mubr.f32.mxu0 0.0
      %3690 = vmatmul.mubr.f32.gmra.mrb[0].mxu0 %v3557
      %v3691 = vpop.f32.mrb[0].mxu0
      %v3692 = vadd.f32 0.0, %v3691
      %v3693 = vpop.f32.mrb[0].mxu0
      %3694 = vmatprep.mubr.f32.mxu0 0.0
      %3695 = vmatmul.mubr.f32.gmra.mrb[0].mxu0 %v3559
      %v3696 = vpop.f32.mrb[0].mxu0
      %v3697 = vadd.f32 0.0, %v3696
      %v3698 = vpop.f32.mrb[0].mxu0
      %3699 = vmatprep.mubr.f32.mxu0 0.0
      %3700 = vmatmul.mubr.f32.gmra.mrb[0].mxu0 %v3561
      %v3701 = vpop.f32.mrb[0].mxu0
      %v3702 = vadd.f32 0.0, %v3701
      %v3703 = vpop.f32.mrb[0].mxu0
      %3704 = vmatprep.mubr.f32.mxu0 0.0
      %3705 = vmatmul.mubr.f32.gmra.mrb[0].mxu0 %v3563
      %v3706 = vpop.f32.mrb[0].mxu0
      %v3707 = vadd.f32 0.0, %v3706
      %v3708 = vpop.f32.mrb[0].mxu0
      %3709 = vdwg.mxu0
      %v3710 = vmul.f32 %v3632, 1.442695
      %v3711 = vpow.pop %v3710
      %v3712 = vmul.f32 %v3637, 1.442695
      %v3713 = vpow.pop %v3712
      %v3714 = vmul.f32 %v3642, 1.442695
      %v3715 = vpow.pop %v3714
      %v3716 = vmul.f32 %v3647, 1.442695
      %v3717 = vpow.pop %v3716
      %v3718 = vmul.f32 %v3652, 1.442695
      %v3719 = vpow.pop %v3718
      %v3720 = vmul.f32 %v3657, 1.442695
      %v3721 = vpow.pop %v3720
      %v3722 = vmul.f32 %v3662, 1.442695
      %v3723 = vpow.pop %v3722
      %v3724 = vmul.f32 %v3667, 1.442695
      %v3725 = vpow.pop %v3724
      %v3726 = vmul.f32 %v3672, 1.442695
      %v3727 = vpow.pop %v3726
      %v3728 = vmul.f32 %v3677, 1.442695
      %v3729 = vpow.pop %v3728
      %v3730 = vmul.f32 %v3682, 1.442695
      %v3731 = vpow.pop %v3730
      %v3732 = vmul.f32 %v3687, 1.442695
      %v3733 = vpow.pop %v3732
      %v3734 = vmul.f32 %v3692, 1.442695
      %v3735 = vpow.pop %v3734
      %v3736 = vmul.f32 %v3697, 1.442695
      %v3737 = vpow.pop %v3736
      %v3738 = vmul.f32 %v3702, 1.442695
      %v3739 = vpow.pop %v3738
      %v3740 = vmul.f32 %v3707, 1.442695
      %v3741 = vpow.pop %v3740
      %3742 = vmatprep.subr.mxu0 0.0
      %3743 = vmatpush1.msra.mxu0 %v176
      %3744 = vmatprep.subr.mxu0 0.0
      %3745 = vmatpush1.msra.mxu0 0.0
      %3746 = vmatprep.subr.mxu0 0.0
      %3747 = vmatpush1.msra.mxu0 0.0
      %3748 = vmatprep.subr.mxu0 0.0
      %3749 = vmatpush1.msra.mxu0 0.0
      %3750 = vmatprep.subr.mxu0 0.0
      %3751 = vmatpush1.msra.mxu0 0.0
      %3752 = vmatprep.subr.mxu0 0.0
      %3753 = vmatpush1.msra.mxu0 0.0
      %3754 = vmatprep.subr.mxu0 0.0
      %3755 = vmatpush1.msra.mxu0 0.0
      %3756 = vmatprep.subr.mxu0 0.0
      %3757 = vmatpush1.msra.mxu0 0.0
      %3758 = vmatprep.subr.mxu0 0.0
      %3759 = vmatpush1.msra.mxu0 0.0
      %3760 = vmatprep.subr.mxu0 0.0
      %3761 = vmatpush1.msra.mxu0 0.0
      %3762 = vmatprep.subr.mxu0 0.0
      %3763 = vmatpush1.msra.mxu0 0.0
      %3764 = vmatprep.subr.mxu0 0.0
      %3765 = vmatpush1.msra.mxu0 0.0
      %3766 = vmatprep.subr.mxu0 0.0
      %3767 = vmatpush1.msra.mxu0 0.0
      %3768 = vmatprep.subr.mxu0 0.0
      %3769 = vmatpush1.msra.mxu0 0.0
      %3770 = vmatprep.subr.mxu0 0.0
      %3771 = vmatpush1.msra.mxu0 0.0
      %3772 = vmatprep.subr.mxu0 0.0
      %3773 = vmatpush1.msra.mxu0 0.0
      %3774 = vmatprep.subr.mxu0 0.0
      %3775 = vmatpush1.msra.mxu0 0.0
      %3776 = vmatprep.subr.mxu0 0.0
      %3777 = vmatpush1.msra.mxu0 0.0
      %3778 = vmatprep.subr.mxu0 0.0
      %3779 = vmatpush1.msra.mxu0 0.0
      %3780 = vmatprep.subr.mxu0 0.0
      %3781 = vmatpush1.msra.mxu0 0.0
      %3782 = vmatprep.subr.mxu0 0.0
      %3783 = vmatpush1.msra.mxu0 0.0
      %3784 = vmatprep.subr.mxu0 0.0
      %3785 = vmatpush1.msra.mxu0 0.0
      %3786 = vmatprep.subr.mxu0 0.0
      %3787 = vmatpush1.msra.mxu0 0.0
      %3788 = vmatprep.subr.mxu0 0.0
      %3789 = vmatpush1.msra.mxu0 0.0
      %3790 = vmatprep.subr.mxu0 0.0
      %3791 = vmatpush1.msra.mxu0 0.0
      %3792 = vmatprep.subr.mxu0 0.0
      %3793 = vmatpush1.msra.mxu0 0.0
      %3794 = vmatprep.subr.mxu0 0.0
      %3795 = vmatpush1.msra.mxu0 0.0
      %3796 = vmatprep.subr.mxu0 0.0
      %3797 = vmatpush1.msra.mxu0 0.0
      %3798 = vmatprep.subr.mxu0 0.0
      %3799 = vmatpush1.msra.mxu0 0.0
      %3800 = vmatprep.subr.mxu0 0.0
      %3801 = vmatpush1.msra.mxu0 0.0
      %3802 = vmatprep.subr.mxu0 0.0
      %3803 = vmatpush1.msra.mxu0 0.0
      %3804 = vmatprep.subr.mxu0 0.0
      %3805 = vmatpush1.msra.mxu0 0.0
      %3806 = vmatprep.mubr.f32.mxu0 0.0
      %3807 = vmatmul.mubr.f32.gmra.mrb[0].mxu0 %v3533
      %v3808 = vpop.f32.mrb[0].mxu0
      %v3809 = vadd.f32 0.0, %v3808
      %v3810 = vpop.f32.mrb[0].mxu0
      %3811 = vmatprep.mubr.f32.mxu0 0.0
      %3812 = vmatmul.mubr.f32.gmra.mrb[0].mxu0 %v3535
      %v3813 = vpop.f32.mrb[0].mxu0
      %v3814 = vadd.f32 0.0, %v3813
      %v3815 = vpop.f32.mrb[0].mxu0
      %3816 = vmatprep.mubr.f32.mxu0 0.0
      %3817 = vmatmul.mubr.f32.gmra.mrb[0].mxu0 %v3537
      %v3818 = vpop.f32.mrb[0].mxu0
      %v3819 = vadd.f32 0.0, %v3818
      %v3820 = vpop.f32.mrb[0].mxu0
      %3821 = vmatprep.mubr.f32.mxu0 0.0
      %3822 = vmatmul.mubr.f32.gmra.mrb[0].mxu0 %v3539
      %v3823 = vpop.f32.mrb[0].mxu0
      %v3824 = vadd.f32 0.0, %v3823
      %v3825 = vpop.f32.mrb[0].mxu0
      %3826 = vmatprep.mubr.f32.mxu0 0.0
      %3827 = vmatmul.mubr.f32.gmra.mrb[0].mxu0 %v3541
      %v3828 = vpop.f32.mrb[0].mxu0
      %v3829 = vadd.f32 0.0, %v3828
      %v3830 = vpop.f32.mrb[0].mxu0
      %3831 = vmatprep.mubr.f32.mxu0 0.0
      %3832 = vmatmul.mubr.f32.gmra.mrb[0].mxu0 %v3543
      %v3833 = vpop.f32.mrb[0].mxu0
      %v3834 = vadd.f32 0.0, %v3833
      %v3835 = vpop.f32.mrb[0].mxu0
      %3836 = vmatprep.mubr.f32.mxu0 0.0
      %3837 = vmatmul.mubr.f32.gmra.mrb[0].mxu0 %v3545
      %v3838 = vpop.f32.mrb[0].mxu0
      %v3839 = vadd.f32 0.0, %v3838
      %v3840 = vpop.f32.mrb[0].mxu0
      %3841 = vmatprep.mubr.f32.mxu0 0.0
      %3842 = vmatmul.mubr.f32.gmra.mrb[0].mxu0 %v3547
      %v3843 = vpop.f32.mrb[0].mxu0
      %v3844 = vadd.f32 0.0, %v3843
      %v3845 = vpop.f32.mrb[0].mxu0
      %3846 = vmatprep.mubr.f32.mxu0 0.0
      %3847 = vmatmul.mubr.f32.gmra.mrb[0].mxu0 %v3549
      %v3848 = vpop.f32.mrb[0].mxu0
      %v3849 = vadd.f32 0.0, %v3848
      %v3850 = vpop.f32.mrb[0].mxu0
      %3851 = vmatprep.mubr.f32.mxu0 0.0
      %3852 = vmatmul.mubr.f32.gmra.mrb[0].mxu0 %v3551
      %v3853 = vpop.f32.mrb[0].mxu0
      %v3854 = vadd.f32 0.0, %v3853
      %v3855 = vpop.f32.mrb[0].mxu0
      %3856 = vmatprep.mubr.f32.mxu0 0.0
      %3857 = vmatmul.mubr.f32.gmra.mrb[0].mxu0 %v3553
      %v3858 = vpop.f32.mrb[0].mxu0
      %v3859 = vadd.f32 0.0, %v3858
      %v3860 = vpop.f32.mrb[0].mxu0
      %3861 = vmatprep.mubr.f32.mxu0 0.0
      %3862 = vmatmul.mubr.f32.gmra.mrb[0].mxu0 %v3555
      %v3863 = vpop.f32.mrb[0].mxu0
      %v3864 = vadd.f32 0.0, %v3863
      %v3865 = vpop.f32.mrb[0].mxu0
      %3866 = vmatprep.mubr.f32.mxu0 0.0
      %3867 = vmatmul.mubr.f32.gmra.mrb[0].mxu0 %v3557
      %v3868 = vpop.f32.mrb[0].mxu0
      %v3869 = vadd.f32 0.0, %v3868
      %v3870 = vpop.f32.mrb[0].mxu0
      %3871 = vmatprep.mubr.f32.mxu0 0.0
      %3872 = vmatmul.mubr.f32.gmra.mrb[0].mxu0 %v3559
      %v3873 = vpop.f32.mrb[0].mxu0
      %v3874 = vadd.f32 0.0, %v3873
      %v3875 = vpop.f32.mrb[0].mxu0
      %3876 = vmatprep.mubr.f32.mxu0 0.0
      %3877 = vmatmul.mubr.f32.gmra.mrb[0].mxu0 %v3561
      %v3878 = vpop.f32.mrb[0].mxu0
      %v3879 = vadd.f32 0.0, %v3878
      %v3880 = vpop.f32.mrb[0].mxu0
      %3881 = vmatprep.mubr.f32.mxu0 0.0
      %3882 = vmatmul.mubr.f32.gmra.mrb[0].mxu0 %v3563
      %v3883 = vpop.f32.mrb[0].mxu0
      %v3884 = vadd.f32 0.0, %v3883
      %v3885 = vpop.f32.mrb[0].mxu0
      %3886 = vdwg.mxu0
      %v3887 = vmul.f32 %v3407, %v3711
      %v3888 = vmul.f32 %v3412, %v3713
      %v3889 = vmul.f32 %v3417, %v3715
      %v3890 = vmul.f32 %v3422, %v3717
      %v3891 = vmul.f32 %v3427, %v3719
      %v3892 = vmul.f32 %v3432, %v3721
      %v3893 = vmul.f32 %v3437, %v3723
      %v3894 = vmul.f32 %v3442, %v3725
      %v3895 = vmul.f32 %v3447, %v3727
      %v3896 = vmul.f32 %v3452, %v3729
      %v3897 = vmul.f32 %v3457, %v3731
      %v3898 = vmul.f32 %v3462, %v3733
      %v3899 = vmul.f32 %v3467, %v3735
      %v3900 = vmul.f32 %v3472, %v3737
      %v3901 = vmul.f32 %v3477, %v3739
      %v3902 = vmul.f32 %v3482, %v3741
      %v3903 = vadd.f32 %v3887, %v3809
      %v3904 = vadd.f32 %v3888, %v3814
      %v3905 = vadd.f32 %v3889, %v3819
      %v3906 = vadd.f32 %v3890, %v3824
      %v3907 = vadd.f32 %v3891, %v3829
      %v3908 = vadd.f32 %v3892, %v3834
      %v3909 = vadd.f32 %v3893, %v3839
      %v3910 = vadd.f32 %v3894, %v3844
      %v3911 = vadd.f32 %v3895, %v3849
      %v3912 = vadd.f32 %v3896, %v3854
      %v3913 = vadd.f32 %v3897, %v3859
      %v3914 = vadd.f32 %v3898, %v3864
      %v3915 = vadd.f32 %v3899, %v3869
      %v3916 = vadd.f32 %v3900, %v3874
      %v3917 = vadd.f32 %v3901, %v3879
      %v3918 = vadd.f32 %v3902, %v3884
      %v3919 = vrsqrt.pop %v1426
      %v3920 = vmul.f32 %v1426, %v3919
      %vm3921 = vcmp.eq.f32.partialorder %v1426, inf
      %v3922 = vsel %vm3921, %v1426, %v3920
      %vm3923 = vcmp.eq.f32.partialorder %v1426, 0.0
      %v3924 = vand.u32 %v1426, 2147483648
      %v3925 = vsel %vm3923, %v3924, %v3922
      %v3926 = vrsqrt.pop %v1427
      %v3927 = vmul.f32 %v1427, %v3926
      %vm3928 = vcmp.eq.f32.partialorder %v1427, inf
      %v3929 = vsel %vm3928, %v1427, %v3927
      %vm3930 = vcmp.eq.f32.partialorder %v1427, 0.0
      %v3931 = vand.u32 %v1427, 2147483648
      %v3932 = vsel %vm3930, %v3931, %v3929
      %v3933 = vrsqrt.pop %v1428
      %v3934 = vmul.f32 %v1428, %v3933
      %vm3935 = vcmp.eq.f32.partialorder %v1428, inf
      %v3936 = vsel %vm3935, %v1428, %v3934
      %vm3937 = vcmp.eq.f32.partialorder %v1428, 0.0
      %v3938 = vand.u32 %v1428, 2147483648
      %v3939 = vsel %vm3937, %v3938, %v3936
      %v3940 = vrsqrt.pop %v1429
      %v3941 = vmul.f32 %v1429, %v3940
      %vm3942 = vcmp.eq.f32.partialorder %v1429, inf
      %v3943 = vsel %vm3942, %v1429, %v3941
      %vm3944 = vcmp.eq.f32.partialorder %v1429, 0.0
      %v3945 = vand.u32 %v1429, 2147483648
      %v3946 = vsel %vm3944, %v3945, %v3943
      %v3947 = vrsqrt.pop %v1430
      %v3948 = vmul.f32 %v1430, %v3947
      %vm3949 = vcmp.eq.f32.partialorder %v1430, inf
      %v3950 = vsel %vm3949, %v1430, %v3948
      %vm3951 = vcmp.eq.f32.partialorder %v1430, 0.0
      %v3952 = vand.u32 %v1430, 2147483648
      %v3953 = vsel %vm3951, %v3952, %v3950
      %v3954 = vrsqrt.pop %v1431
      %v3955 = vmul.f32 %v1431, %v3954
      %vm3956 = vcmp.eq.f32.partialorder %v1431, inf
      %v3957 = vsel %vm3956, %v1431, %v3955
      %vm3958 = vcmp.eq.f32.partialorder %v1431, 0.0
      %v3959 = vand.u32 %v1431, 2147483648
      %v3960 = vsel %vm3958, %v3959, %v3957
      %v3961 = vrsqrt.pop %v1432
      %v3962 = vmul.f32 %v1432, %v3961
      %vm3963 = vcmp.eq.f32.partialorder %v1432, inf
      %v3964 = vsel %vm3963, %v1432, %v3962
      %vm3965 = vcmp.eq.f32.partialorder %v1432, 0.0
      %v3966 = vand.u32 %v1432, 2147483648
      %v3967 = vsel %vm3965, %v3966, %v3964
      %v3968 = vrsqrt.pop %v1433
      %v3969 = vmul.f32 %v1433, %v3968
      %vm3970 = vcmp.eq.f32.partialorder %v1433, inf
      %v3971 = vsel %vm3970, %v1433, %v3969
      %vm3972 = vcmp.eq.f32.partialorder %v1433, 0.0
      %v3973 = vand.u32 %v1433, 2147483648
      %v3974 = vsel %vm3972, %v3973, %v3971
      %v3975 = vrsqrt.pop %v1434
      %v3976 = vmul.f32 %v1434, %v3975
      %vm3977 = vcmp.eq.f32.partialorder %v1434, inf
      %v3978 = vsel %vm3977, %v1434, %v3976
      %vm3979 = vcmp.eq.f32.partialorder %v1434, 0.0
      %v3980 = vand.u32 %v1434, 2147483648
      %v3981 = vsel %vm3979, %v3980, %v3978
      %v3982 = vrsqrt.pop %v1435
      %v3983 = vmul.f32 %v1435, %v3982
      %vm3984 = vcmp.eq.f32.partialorder %v1435, inf
      %v3985 = vsel %vm3984, %v1435, %v3983
      %vm3986 = vcmp.eq.f32.partialorder %v1435, 0.0
      %v3987 = vand.u32 %v1435, 2147483648
      %v3988 = vsel %vm3986, %v3987, %v3985
      %v3989 = vrsqrt.pop %v1436
      %v3990 = vmul.f32 %v1436, %v3989
      %vm3991 = vcmp.eq.f32.partialorder %v1436, inf
      %v3992 = vsel %vm3991, %v1436, %v3990
      %vm3993 = vcmp.eq.f32.partialorder %v1436, 0.0
      %v3994 = vand.u32 %v1436, 2147483648
      %v3995 = vsel %vm3993, %v3994, %v3992
      %v3996 = vrsqrt.pop %v1437
      %v3997 = vmul.f32 %v1437, %v3996
      %vm3998 = vcmp.eq.f32.partialorder %v1437, inf
      %v3999 = vsel %vm3998, %v1437, %v3997
      %vm4000 = vcmp.eq.f32.partialorder %v1437, 0.0
      %v4001 = vand.u32 %v1437, 2147483648
      %v4002 = vsel %vm4000, %v4001, %v3999
      %v4003 = vrsqrt.pop %v1438
      %v4004 = vmul.f32 %v1438, %v4003
      %vm4005 = vcmp.eq.f32.partialorder %v1438, inf
      %v4006 = vsel %vm4005, %v1438, %v4004
      %vm4007 = vcmp.eq.f32.partialorder %v1438, 0.0
      %v4008 = vand.u32 %v1438, 2147483648
      %v4009 = vsel %vm4007, %v4008, %v4006
      %v4010 = vrsqrt.pop %v1439
      %v4011 = vmul.f32 %v1439, %v4010
      %vm4012 = vcmp.eq.f32.partialorder %v1439, inf
      %v4013 = vsel %vm4012, %v1439, %v4011
      %vm4014 = vcmp.eq.f32.partialorder %v1439, 0.0
      %v4015 = vand.u32 %v1439, 2147483648
      %v4016 = vsel %vm4014, %v4015, %v4013
      %v4017 = vrsqrt.pop %v1440
      %v4018 = vmul.f32 %v1440, %v4017
      %vm4019 = vcmp.eq.f32.partialorder %v1440, inf
      %v4020 = vsel %vm4019, %v1440, %v4018
      %vm4021 = vcmp.eq.f32.partialorder %v1440, 0.0
      %v4022 = vand.u32 %v1440, 2147483648
      %v4023 = vsel %vm4021, %v4022, %v4020
      %v4024 = vrsqrt.pop %v1441
      %v4025 = vmul.f32 %v1441, %v4024
      %vm4026 = vcmp.eq.f32.partialorder %v1441, inf
      %v4027 = vsel %vm4026, %v1441, %v4025
      %vm4028 = vcmp.eq.f32.partialorder %v1441, 0.0
      %v4029 = vand.u32 %v1441, 2147483648
      %v4030 = vsel %vm4028, %v4029, %v4027
      %v4031 = vmul.f32 %v3925, %v3020
      %v4032 = vmul.f32 %v3932, %v3022
      %v4033 = vmul.f32 %v3939, %v3024
      %v4034 = vmul.f32 %v3946, %v3026
      %v4035 = vmul.f32 %v3953, %v3028
      %v4036 = vmul.f32 %v3960, %v3030
      %v4037 = vmul.f32 %v3967, %v3032
      %v4038 = vmul.f32 %v3974, %v3034
      %v4039 = vmul.f32 %v3981, %v3036
      %v4040 = vmul.f32 %v3988, %v3038
      %v4041 = vmul.f32 %v3995, %v3040
      %v4042 = vmul.f32 %v4002, %v3042
      %v4043 = vmul.f32 %v4009, %v3044
      %v4044 = vmul.f32 %v4016, %v3046
      %v4045 = vmul.f32 %v4023, %v3048
      %v4046 = vmul.f32 %v4030, %v3050
      %4063 = vrot.lane.b32.xlu0 %v4031, 112
      %v4064 = vpop.permute.xlu0 %4063
      %4065 = vrot.lane.b32.xlu0 %v4032, 112
      %v4066 = vpop.permute.xlu0 %4065
      %4067 = vrot.lane.b32.xlu0 %v4033, 112
      %v4068 = vpop.permute.xlu0 %4067
      %4069 = vrot.lane.b32.xlu0 %v4034, 112
      %v4070 = vpop.permute.xlu0 %4069
      %4071 = vrot.lane.b32.xlu0 %v4035, 112
      %v4072 = vpop.permute.xlu0 %4071
      %4073 = vrot.lane.b32.xlu0 %v4036, 112
      %v4074 = vpop.permute.xlu0 %4073
      %4075 = vrot.lane.b32.xlu0 %v4037, 112
      %v4076 = vpop.permute.xlu0 %4075
      %4077 = vrot.lane.b32.xlu0 %v4038, 112
      %v4078 = vpop.permute.xlu0 %4077
      %4079 = vrot.lane.b32.xlu0 %v4039, 112
      %v4080 = vpop.permute.xlu0 %4079
      %4081 = vrot.lane.b32.xlu0 %v4040, 112
      %v4082 = vpop.permute.xlu0 %4081
      %4083 = vrot.lane.b32.xlu0 %v4041, 112
      %v4084 = vpop.permute.xlu0 %4083
      %4085 = vrot.lane.b32.xlu0 %v4042, 112
      %v4086 = vpop.permute.xlu0 %4085
      %4087 = vrot.lane.b32.xlu0 %v4043, 112
      %v4088 = vpop.permute.xlu0 %4087
      %4089 = vrot.lane.b32.xlu0 %v4044, 112
      %v4090 = vpop.permute.xlu0 %4089
      %4091 = vrot.lane.b32.xlu0 %v4045, 112
      %v4092 = vpop.permute.xlu0 %4091
      %4093 = vrot.lane.b32.xlu0 %v4046, 112
      %v4094 = vpop.permute.xlu0 %4093
      %v4111 = vadd.f32 %v1586, %v4064
      %v4112 = vadd.f32 %v1587, %v4066
      %v4113 = vadd.f32 %v1588, %v4068
      %v4114 = vadd.f32 %v1589, %v4070
      %v4115 = vadd.f32 %v1590, %v4072
      %v4116 = vadd.f32 %v1591, %v4074
      %v4117 = vadd.f32 %v1592, %v4076
      %v4118 = vadd.f32 %v1593, %v4078
      %v4119 = vadd.f32 %v1594, %v4080
      %v4120 = vadd.f32 %v1595, %v4082
      %v4121 = vadd.f32 %v1596, %v4084
      %v4122 = vadd.f32 %v1597, %v4086
      %v4123 = vadd.f32 %v1598, %v4088
      %v4124 = vadd.f32 %v1599, %v4090
      %v4125 = vadd.f32 %v1600, %v4092
      %v4126 = vadd.f32 %v1601, %v4094
      %v4127 = vmul.f32 %v4111, %v3195
      %v4128 = vmul.f32 %v4112, %v3196
      %v4129 = vmul.f32 %v4113, %v3197
      %v4130 = vmul.f32 %v4114, %v3198
      %v4131 = vmul.f32 %v4115, %v3199
      %v4132 = vmul.f32 %v4116, %v3200
      %v4133 = vmul.f32 %v4117, %v3201
      %v4134 = vmul.f32 %v4118, %v3202
      %v4135 = vmul.f32 %v4119, %v3203
      %v4136 = vmul.f32 %v4120, %v3204
      %v4137 = vmul.f32 %v4121, %v3205
      %v4138 = vmul.f32 %v4122, %v3206
      %v4139 = vmul.f32 %v4123, %v3207
      %v4140 = vmul.f32 %v4124, %v3208
      %v4141 = vmul.f32 %v4125, %v3209
      %v4142 = vmul.f32 %v4126, %v3210
      %vm4143 = vcmp.gt.f32.partialorder %v147, 1.0
      %vm4144 = vcmp.gt.f32.partialorder %v148, 1.0
      %vm4145 = vcmp.gt.f32.partialorder %v149, 1.0
      %vm4146 = vcmp.gt.f32.partialorder %v150, 1.0
      %vm4147 = vcmp.gt.f32.partialorder %v151, 1.0
      %vm4148 = vcmp.gt.f32.partialorder %v152, 1.0
      %vm4149 = vcmp.gt.f32.partialorder %v153, 1.0
      %vm4150 = vcmp.gt.f32.partialorder %v154, 1.0
      %vm4151 = vcmp.gt.f32.partialorder %v155, 1.0
      %vm4152 = vcmp.gt.f32.partialorder %v156, 1.0
      %vm4153 = vcmp.gt.f32.partialorder %v157, 1.0
      %vm4154 = vcmp.gt.f32.partialorder %v158, 1.0
      %vm4155 = vcmp.gt.f32.partialorder %v159, 1.0
      %vm4156 = vcmp.gt.f32.partialorder %v160, 1.0
      %vm4157 = vcmp.gt.f32.partialorder %v161, 1.0
      %vm4158 = vcmp.gt.f32.partialorder %v162, 1.0
      %v4159 = vsel %vm4143, %v147, 1.0
      %v4160 = vsel %vm4144, %v148, 1.0
      %v4161 = vsel %vm4145, %v149, 1.0
      %v4162 = vsel %vm4146, %v150, 1.0
      %v4163 = vsel %vm4147, %v151, 1.0
      %v4164 = vsel %vm4148, %v152, 1.0
      %v4165 = vsel %vm4149, %v153, 1.0
      %v4166 = vsel %vm4150, %v154, 1.0
      %v4167 = vsel %vm4151, %v155, 1.0
      %v4168 = vsel %vm4152, %v156, 1.0
      %v4169 = vsel %vm4153, %v157, 1.0
      %v4170 = vsel %vm4154, %v158, 1.0
      %v4171 = vsel %vm4155, %v159, 1.0
      %v4172 = vsel %vm4156, %v160, 1.0
      %v4173 = vsel %vm4157, %v161, 1.0
      %v4174 = vsel %vm4158, %v162, 1.0
      %v4175 = vlog2.pop %v4159
      %v4176 = vmul.f32 %v4175, 0.6931472
      %v4177 = vlog2.pop %v4160
      %v4178 = vmul.f32 %v4177, 0.6931472
      %v4179 = vlog2.pop %v4161
      %v4180 = vmul.f32 %v4179, 0.6931472
      %v4181 = vlog2.pop %v4162
      %v4182 = vmul.f32 %v4181, 0.6931472
      %v4183 = vlog2.pop %v4163
      %v4184 = vmul.f32 %v4183, 0.6931472
      %v4185 = vlog2.pop %v4164
      %v4186 = vmul.f32 %v4185, 0.6931472
      %v4187 = vlog2.pop %v4165
      %v4188 = vmul.f32 %v4187, 0.6931472
      %v4189 = vlog2.pop %v4166
      %v4190 = vmul.f32 %v4189, 0.6931472
      %v4191 = vlog2.pop %v4167
      %v4192 = vmul.f32 %v4191, 0.6931472
      %v4193 = vlog2.pop %v4168
      %v4194 = vmul.f32 %v4193, 0.6931472
      %v4195 = vlog2.pop %v4169
      %v4196 = vmul.f32 %v4195, 0.6931472
      %v4197 = vlog2.pop %v4170
      %v4198 = vmul.f32 %v4197, 0.6931472
      %v4199 = vlog2.pop %v4171
      %v4200 = vmul.f32 %v4199, 0.6931472
      %v4201 = vlog2.pop %v4172
      %v4202 = vmul.f32 %v4201, 0.6931472
      %v4203 = vlog2.pop %v4173
      %v4204 = vmul.f32 %v4203, 0.6931472
      %v4205 = vlog2.pop %v4174
      %v4206 = vmul.f32 %v4205, 0.6931472
      %v4207 = vmul.f32 %v147, %v4176
      %v4208 = vmul.f32 %v148, %v4178
      %v4209 = vmul.f32 %v149, %v4180
      %v4210 = vmul.f32 %v150, %v4182
      %v4211 = vmul.f32 %v151, %v4184
      %v4212 = vmul.f32 %v152, %v4186
      %v4213 = vmul.f32 %v153, %v4188
      %v4214 = vmul.f32 %v154, %v4190
      %v4215 = vmul.f32 %v155, %v4192
      %v4216 = vmul.f32 %v156, %v4194
      %v4217 = vmul.f32 %v157, %v4196
      %v4218 = vmul.f32 %v158, %v4198
      %v4219 = vmul.f32 %v159, %v4200
      %v4220 = vmul.f32 %v160, %v4202
      %v4221 = vmul.f32 %v161, %v4204
      %v4222 = vmul.f32 %v162, %v4206
      %v4223 = vsub.f32 %v4207, %v147
      %v4224 = vsub.f32 %v4208, %v148
      %v4225 = vsub.f32 %v4209, %v149
      %v4226 = vsub.f32 %v4210, %v150
      %v4227 = vsub.f32 %v4211, %v151
      %v4228 = vsub.f32 %v4212, %v152
      %v4229 = vsub.f32 %v4213, %v153
      %v4230 = vsub.f32 %v4214, %v154
      %v4231 = vsub.f32 %v4215, %v155
      %v4232 = vsub.f32 %v4216, %v156
      %v4233 = vsub.f32 %v4217, %v157
      %v4234 = vsub.f32 %v4218, %v158
      %v4235 = vsub.f32 %v4219, %v159
      %v4236 = vsub.f32 %v4220, %v160
      %v4237 = vsub.f32 %v4221, %v161
      %v4238 = vsub.f32 %v4222, %v162
      %v4239 = vadd.f32 %v4176, 1.837877
      %v4240 = vadd.f32 %v4178, 1.837877
      %v4241 = vadd.f32 %v4180, 1.837877
      %v4242 = vadd.f32 %v4182, 1.837877
      %v4243 = vadd.f32 %v4184, 1.837877
      %v4244 = vadd.f32 %v4186, 1.837877
      %v4245 = vadd.f32 %v4188, 1.837877
      %v4246 = vadd.f32 %v4190, 1.837877
      %v4247 = vadd.f32 %v4192, 1.837877
      %v4248 = vadd.f32 %v4194, 1.837877
      %v4249 = vadd.f32 %v4196, 1.837877
      %v4250 = vadd.f32 %v4198, 1.837877
      %v4251 = vadd.f32 %v4200, 1.837877
      %v4252 = vadd.f32 %v4202, 1.837877
      %v4253 = vadd.f32 %v4204, 1.837877
      %v4254 = vadd.f32 %v4206, 1.837877
      %v4255 = vmul.f32 %v4239, 0.5
      %v4256 = vmul.f32 %v4240, 0.5
      %v4257 = vmul.f32 %v4241, 0.5
      %v4258 = vmul.f32 %v4242, 0.5
      %v4259 = vmul.f32 %v4243, 0.5
      %v4260 = vmul.f32 %v4244, 0.5
      %v4261 = vmul.f32 %v4245, 0.5
      %v4262 = vmul.f32 %v4246, 0.5
      %v4263 = vmul.f32 %v4247, 0.5
      %v4264 = vmul.f32 %v4248, 0.5
      %v4265 = vmul.f32 %v4249, 0.5
      %v4266 = vmul.f32 %v4250, 0.5
      %v4267 = vmul.f32 %v4251, 0.5
      %v4268 = vmul.f32 %v4252, 0.5
      %v4269 = vmul.f32 %v4253, 0.5
      %v4270 = vmul.f32 %v4254, 0.5
      %v4271 = vadd.f32 %v4223, %v4255
      %v4272 = vadd.f32 %v4224, %v4256
      %v4273 = vadd.f32 %v4225, %v4257
      %v4274 = vadd.f32 %v4226, %v4258
      %v4275 = vadd.f32 %v4227, %v4259
      %v4276 = vadd.f32 %v4228, %v4260
      %v4277 = vadd.f32 %v4229, %v4261
      %v4278 = vadd.f32 %v4230, %v4262
      %v4279 = vadd.f32 %v4231, %v4263
      %v4280 = vadd.f32 %v4232, %v4264
      %v4281 = vadd.f32 %v4233, %v4265
      %v4282 = vadd.f32 %v4234, %v4266
      %v4283 = vadd.f32 %v4235, %v4267
      %v4284 = vadd.f32 %v4236, %v4268
      %v4285 = vadd.f32 %v4237, %v4269
      %v4286 = vadd.f32 %v4238, %v4270
      %v4287 = vsel %vm4143, %v4271, 0.0
      %v4288 = vsel %vm4144, %v4272, 0.0
      %v4289 = vsel %vm4145, %v4273, 0.0
      %v4290 = vsel %vm4146, %v4274, 0.0
      %v4291 = vsel %vm4147, %v4275, 0.0
      %v4292 = vsel %vm4148, %v4276, 0.0
      %v4293 = vsel %vm4149, %v4277, 0.0
      %v4294 = vsel %vm4150, %v4278, 0.0
      %v4295 = vsel %vm4151, %v4279, 0.0
      %v4296 = vsel %vm4152, %v4280, 0.0
      %v4297 = vsel %vm4153, %v4281, 0.0
      %v4298 = vsel %vm4154, %v4282, 0.0
      %v4299 = vsel %vm4155, %v4283, 0.0
      %v4300 = vsel %vm4156, %v4284, 0.0
      %v4301 = vsel %vm4157, %v4285, 0.0
      %v4302 = vsel %vm4158, %v4286, 0.0
      %v4303 = vmul.f32 %v3903, 1.442695
      %v4304 = vpow.pop %v4303
      %v4305 = vmul.f32 %v3904, 1.442695
      %v4306 = vpow.pop %v4305
      %v4307 = vmul.f32 %v3905, 1.442695
      %v4308 = vpow.pop %v4307
      %v4309 = vmul.f32 %v3906, 1.442695
      %v4310 = vpow.pop %v4309
      %v4311 = vmul.f32 %v3907, 1.442695
      %v4312 = vpow.pop %v4311
      %v4313 = vmul.f32 %v3908, 1.442695
      %v4314 = vpow.pop %v4313
      %v4315 = vmul.f32 %v3909, 1.442695
      %v4316 = vpow.pop %v4315
      %v4317 = vmul.f32 %v3910, 1.442695
      %v4318 = vpow.pop %v4317
      %v4319 = vmul.f32 %v3911, 1.442695
      %v4320 = vpow.pop %v4319
      %v4321 = vmul.f32 %v3912, 1.442695
      %v4322 = vpow.pop %v4321
      %v4323 = vmul.f32 %v3913, 1.442695
      %v4324 = vpow.pop %v4323
      %v4325 = vmul.f32 %v3914, 1.442695
      %v4326 = vpow.pop %v4325
      %v4327 = vmul.f32 %v3915, 1.442695
      %v4328 = vpow.pop %v4327
      %v4329 = vmul.f32 %v3916, 1.442695
      %v4330 = vpow.pop %v4329
      %v4331 = vmul.f32 %v3917, 1.442695
      %v4332 = vpow.pop %v4331
      %v4333 = vmul.f32 %v3918, 1.442695
      %v4334 = vpow.pop %v4333
      %v4335 = vmul.f32 %v147, %v3903
      %v4336 = vmul.f32 %v148, %v3904
      %v4337 = vmul.f32 %v149, %v3905
      %v4338 = vmul.f32 %v150, %v3906
      %v4339 = vmul.f32 %v151, %v3907
      %v4340 = vmul.f32 %v152, %v3908
      %v4341 = vmul.f32 %v153, %v3909
      %v4342 = vmul.f32 %v154, %v3910
      %v4343 = vmul.f32 %v155, %v3911
      %v4344 = vmul.f32 %v156, %v3912
      %v4345 = vmul.f32 %v157, %v3913
      %v4346 = vmul.f32 %v158, %v3914
      %v4347 = vmul.f32 %v159, %v3915
      %v4348 = vmul.f32 %v160, %v3916
      %v4349 = vmul.f32 %v161, %v3917
      %v4350 = vmul.f32 %v162, %v3918
      %v4351 = vsub.f32 %v4304, %v4335
      %v4352 = vsub.f32 %v4306, %v4336
      %v4353 = vsub.f32 %v4308, %v4337
      %v4354 = vsub.f32 %v4310, %v4338
      %v4355 = vsub.f32 %v4312, %v4339
      %v4356 = vsub.f32 %v4314, %v4340
      %v4357 = vsub.f32 %v4316, %v4341
      %v4358 = vsub.f32 %v4318, %v4342
      %v4359 = vsub.f32 %v4320, %v4343
      %v4360 = vsub.f32 %v4322, %v4344
      %v4361 = vsub.f32 %v4324, %v4345
      %v4362 = vsub.f32 %v4326, %v4346
      %v4363 = vsub.f32 %v4328, %v4347
      %v4364 = vsub.f32 %v4330, %v4348
      %v4365 = vsub.f32 %v4332, %v4349
      %v4366 = vsub.f32 %v4334, %v4350
      %v4367 = vadd.f32 %v4351, %v4287
      %v4368 = vadd.f32 %v4352, %v4288
      %v4369 = vadd.f32 %v4353, %v4289
      %v4370 = vadd.f32 %v4354, %v4290
      %v4371 = vadd.f32 %v4355, %v4291
      %v4372 = vadd.f32 %v4356, %v4292
      %v4373 = vadd.f32 %v4357, %v4293
      %v4374 = vadd.f32 %v4358, %v4294
      %v4375 = vadd.f32 %v4359, %v4295
      %v4376 = vadd.f32 %v4360, %v4296
      %v4377 = vadd.f32 %v4361, %v4297
      %v4378 = vadd.f32 %v4362, %v4298
      %v4379 = vadd.f32 %v4363, %v4299
      %v4380 = vadd.f32 %v4364, %v4300
      %v4381 = vadd.f32 %v4365, %v4301
      %v4382 = vadd.f32 %v4366, %v4302
      %v4383 = vmul.f32 %v4367, %v244
      %v4384 = vmul.f32 %v4368, %v246
      %v4385 = vmul.f32 %v4369, %v248
      %v4386 = vmul.f32 %v4370, %v250
      %v4387 = vmul.f32 %v4371, %v252
      %v4388 = vmul.f32 %v4372, %v254
      %v4389 = vmul.f32 %v4373, %v256
      %v4390 = vmul.f32 %v4374, %v258
      %v4391 = vmul.f32 %v4375, %v260
      %v4392 = vmul.f32 %v4376, %v262
      %v4393 = vmul.f32 %v4377, %v264
      %v4394 = vmul.f32 %v4378, %v266
      %v4395 = vmul.f32 %v4379, %v268
      %v4396 = vmul.f32 %v4380, %v270
      %v4397 = vmul.f32 %v4381, %v272
      %v4398 = vmul.f32 %v4382, %v274
      %v4399 = vsel %vm311, %v4383, 0.0
      %4400 = vadd.xlane.f32.xlu0 %v4399
      %v4401 = vpop.xlane.xlu0 %4400
      %v4402 = vsel %vm311, %v4384, 0.0
      %4403 = vadd.xlane.f32.xlu0 %v4402
      %v4404 = vpop.xlane.xlu0 %4403
      %v4405 = vsel %vm311, %v4385, 0.0
      %4406 = vadd.xlane.f32.xlu0 %v4405
      %v4407 = vpop.xlane.xlu0 %4406
      %v4408 = vsel %vm311, %v4386, 0.0
      %4409 = vadd.xlane.f32.xlu0 %v4408
      %v4410 = vpop.xlane.xlu0 %4409
      %v4411 = vsel %vm311, %v4387, 0.0
      %4412 = vadd.xlane.f32.xlu0 %v4411
      %v4413 = vpop.xlane.xlu0 %4412
      %v4414 = vsel %vm311, %v4388, 0.0
      %4415 = vadd.xlane.f32.xlu0 %v4414
      %v4416 = vpop.xlane.xlu0 %4415
      %v4417 = vsel %vm311, %v4389, 0.0
      %4418 = vadd.xlane.f32.xlu0 %v4417
      %v4419 = vpop.xlane.xlu0 %4418
      %v4420 = vsel %vm311, %v4390, 0.0
      %4421 = vadd.xlane.f32.xlu0 %v4420
      %v4422 = vpop.xlane.xlu0 %4421
      %v4423 = vsel %vm311, %v4391, 0.0
      %4424 = vadd.xlane.f32.xlu0 %v4423
      %v4425 = vpop.xlane.xlu0 %4424
      %v4426 = vsel %vm311, %v4392, 0.0
      %4427 = vadd.xlane.f32.xlu0 %v4426
      %v4428 = vpop.xlane.xlu0 %4427
      %v4429 = vsel %vm311, %v4393, 0.0
      %4430 = vadd.xlane.f32.xlu0 %v4429
      %v4431 = vpop.xlane.xlu0 %4430
      %v4432 = vsel %vm311, %v4394, 0.0
      %4433 = vadd.xlane.f32.xlu0 %v4432
      %v4434 = vpop.xlane.xlu0 %4433
      %v4435 = vsel %vm311, %v4395, 0.0
      %4436 = vadd.xlane.f32.xlu0 %v4435
      %v4437 = vpop.xlane.xlu0 %4436
      %v4438 = vsel %vm311, %v4396, 0.0
      %4439 = vadd.xlane.f32.xlu0 %v4438
      %v4440 = vpop.xlane.xlu0 %4439
      %v4441 = vsel %vm311, %v4397, 0.0
      %4442 = vadd.xlane.f32.xlu0 %v4441
      %v4443 = vpop.xlane.xlu0 %4442
      %v4444 = vsel %vm311, %v4398, 0.0
      %4445 = vadd.xlane.f32.xlu0 %v4444
      %v4446 = vpop.xlane.xlu0 %4445
      %v4447 = vadd.f32 %v1603, 1.0
      %v4448 = vadd.f32 %v1605, 1.0
      %v4449 = vadd.f32 %v1607, 1.0
      %v4450 = vadd.f32 %v1609, 1.0
      %v4451 = vadd.f32 %v1611, 1.0
      %v4452 = vadd.f32 %v1613, 1.0
      %v4453 = vadd.f32 %v1615, 1.0
      %v4454 = vadd.f32 %v1617, 1.0
      %v4455 = vadd.f32 %v1619, 1.0
      %v4456 = vadd.f32 %v1621, 1.0
      %v4457 = vadd.f32 %v1623, 1.0
      %v4458 = vadd.f32 %v1625, 1.0
      %v4459 = vadd.f32 %v1627, 1.0
      %v4460 = vadd.f32 %v1629, 1.0
      %v4461 = vadd.f32 %v1631, 1.0
      %v4462 = vadd.f32 %v1633, 1.0
      %v4463 = vmul.f32 %v1586, %v1586
      %v4464 = vmul.f32 %v1587, %v1587
      %v4465 = vmul.f32 %v1588, %v1588
      %v4466 = vmul.f32 %v1589, %v1589
      %v4467 = vmul.f32 %v1590, %v1590
      %v4468 = vmul.f32 %v1591, %v1591
      %v4469 = vmul.f32 %v1592, %v1592
      %v4470 = vmul.f32 %v1593, %v1593
      %v4471 = vmul.f32 %v1594, %v1594
      %v4472 = vmul.f32 %v1595, %v1595
      %v4473 = vmul.f32 %v1596, %v1596
      %v4474 = vmul.f32 %v1597, %v1597
      %v4475 = vmul.f32 %v1598, %v1598
      %v4476 = vmul.f32 %v1599, %v1599
      %v4477 = vmul.f32 %v1600, %v1600
      %v4478 = vmul.f32 %v1601, %v1601
      %4495 = vrot.lane.b32.xlu0 %v4463, 16
      %v4496 = vpop.permute.xlu0 %4495
      %4497 = vrot.lane.b32.xlu0 %v4464, 16
      %v4498 = vpop.permute.xlu0 %4497
      %4499 = vrot.lane.b32.xlu0 %v4465, 16
      %v4500 = vpop.permute.xlu0 %4499
      %4501 = vrot.lane.b32.xlu0 %v4466, 16
      %v4502 = vpop.permute.xlu0 %4501
      %4503 = vrot.lane.b32.xlu0 %v4467, 16
      %v4504 = vpop.permute.xlu0 %4503
      %4505 = vrot.lane.b32.xlu0 %v4468, 16
      %v4506 = vpop.permute.xlu0 %4505
      %4507 = vrot.lane.b32.xlu0 %v4469, 16
      %v4508 = vpop.permute.xlu0 %4507
      %4509 = vrot.lane.b32.xlu0 %v4470, 16
      %v4510 = vpop.permute.xlu0 %4509
      %4511 = vrot.lane.b32.xlu0 %v4471, 16
      %v4512 = vpop.permute.xlu0 %4511
      %4513 = vrot.lane.b32.xlu0 %v4472, 16
      %v4514 = vpop.permute.xlu0 %4513
      %4515 = vrot.lane.b32.xlu0 %v4473, 16
      %v4516 = vpop.permute.xlu0 %4515
      %4517 = vrot.lane.b32.xlu0 %v4474, 16
      %v4518 = vpop.permute.xlu0 %4517
      %4519 = vrot.lane.b32.xlu0 %v4475, 16
      %v4520 = vpop.permute.xlu0 %4519
      %4521 = vrot.lane.b32.xlu0 %v4476, 16
      %v4522 = vpop.permute.xlu0 %4521
      %4523 = vrot.lane.b32.xlu0 %v4477, 16
      %v4524 = vpop.permute.xlu0 %4523
      %4525 = vrot.lane.b32.xlu0 %v4478, 16
      %v4526 = vpop.permute.xlu0 %4525
      %v4543 = vsub.f32 %v4447, %v4496
      %v4544 = vsub.f32 %v4448, %v4498
      %v4545 = vsub.f32 %v4449, %v4500
      %v4546 = vsub.f32 %v4450, %v4502
      %v4547 = vsub.f32 %v4451, %v4504
      %v4548 = vsub.f32 %v4452, %v4506
      %v4549 = vsub.f32 %v4453, %v4508
      %v4550 = vsub.f32 %v4454, %v4510
      %v4551 = vsub.f32 %v4455, %v4512
      %v4552 = vsub.f32 %v4456, %v4514
      %v4553 = vsub.f32 %v4457, %v4516
      %v4554 = vsub.f32 %v4458, %v4518
      %v4555 = vsub.f32 %v4459, %v4520
      %v4556 = vsub.f32 %v4460, %v4522
      %v4557 = vsub.f32 %v4461, %v4524
      %v4558 = vsub.f32 %v4462, %v4526
      %v4559 = vsub.f32 %v4543, %v1426
      %v4560 = vsub.f32 %v4544, %v1427
      %v4561 = vsub.f32 %v4545, %v1428
      %v4562 = vsub.f32 %v4546, %v1429
      %v4563 = vsub.f32 %v4547, %v1430
      %v4564 = vsub.f32 %v4548, %v1431
      %v4565 = vsub.f32 %v4549, %v1432
      %v4566 = vsub.f32 %v4550, %v1433
      %v4567 = vsub.f32 %v4551, %v1434
      %v4568 = vsub.f32 %v4552, %v1435
      %v4569 = vsub.f32 %v4553, %v1436
      %v4570 = vsub.f32 %v4554, %v1437
      %v4571 = vsub.f32 %v4555, %v1438
      %v4572 = vsub.f32 %v4556, %v1439
      %v4573 = vsub.f32 %v4557, %v1440
      %v4574 = vsub.f32 %v4558, %v1441
      %v4575 = vmul.f32 %v4559, -0.5
      %v4576 = vmul.f32 %v4560, -0.5
      %v4577 = vmul.f32 %v4561, -0.5
      %v4578 = vmul.f32 %v4562, -0.5
      %v4579 = vmul.f32 %v4563, -0.5
      %v4580 = vmul.f32 %v4564, -0.5
      %v4581 = vmul.f32 %v4565, -0.5
      %v4582 = vmul.f32 %v4566, -0.5
      %v4583 = vmul.f32 %v4567, -0.5
      %v4584 = vmul.f32 %v4568, -0.5
      %v4585 = vmul.f32 %v4569, -0.5
      %v4586 = vmul.f32 %v4570, -0.5
      %v4587 = vmul.f32 %v4571, -0.5
      %v4588 = vmul.f32 %v4572, -0.5
      %v4589 = vmul.f32 %v4573, -0.5
      %v4590 = vmul.f32 %v4574, -0.5
      %4607 = vrot.lane.b32.xlu0 %v4575, 112
      %v4608 = vpop.permute.xlu0 %4607
      %4609 = vrot.lane.b32.xlu0 %v4576, 112
      %v4610 = vpop.permute.xlu0 %4609
      %4611 = vrot.lane.b32.xlu0 %v4577, 112
      %v4612 = vpop.permute.xlu0 %4611
      %4613 = vrot.lane.b32.xlu0 %v4578, 112
      %v4614 = vpop.permute.xlu0 %4613
      %4615 = vrot.lane.b32.xlu0 %v4579, 112
      %v4616 = vpop.permute.xlu0 %4615
      %4617 = vrot.lane.b32.xlu0 %v4580, 112
      %v4618 = vpop.permute.xlu0 %4617
      %4619 = vrot.lane.b32.xlu0 %v4581, 112
      %v4620 = vpop.permute.xlu0 %4619
      %4621 = vrot.lane.b32.xlu0 %v4582, 112
      %v4622 = vpop.permute.xlu0 %4621
      %4623 = vrot.lane.b32.xlu0 %v4583, 112
      %v4624 = vpop.permute.xlu0 %4623
      %4625 = vrot.lane.b32.xlu0 %v4584, 112
      %v4626 = vpop.permute.xlu0 %4625
      %4627 = vrot.lane.b32.xlu0 %v4585, 112
      %v4628 = vpop.permute.xlu0 %4627
      %4629 = vrot.lane.b32.xlu0 %v4586, 112
      %v4630 = vpop.permute.xlu0 %4629
      %4631 = vrot.lane.b32.xlu0 %v4587, 112
      %v4632 = vpop.permute.xlu0 %4631
      %4633 = vrot.lane.b32.xlu0 %v4588, 112
      %v4634 = vpop.permute.xlu0 %4633
      %4635 = vrot.lane.b32.xlu0 %v4589, 112
      %v4636 = vpop.permute.xlu0 %4635
      %4637 = vrot.lane.b32.xlu0 %v4590, 112
      %v4638 = vpop.permute.xlu0 %4637
      %v4655 = vsel %vm3291, %v4608, 0.0
      %4656 = vadd.xlane.f32.xlu0 %v4655
      %v4657 = vpop.xlane.xlu0 %4656
      %v4658 = vsel %vm3291, %v4610, 0.0
      %4659 = vadd.xlane.f32.xlu0 %v4658
      %v4660 = vpop.xlane.xlu0 %4659
      %v4661 = vsel %vm3291, %v4612, 0.0
      %4662 = vadd.xlane.f32.xlu0 %v4661
      %v4663 = vpop.xlane.xlu0 %4662
      %v4664 = vsel %vm3291, %v4614, 0.0
      %4665 = vadd.xlane.f32.xlu0 %v4664
      %v4666 = vpop.xlane.xlu0 %4665
      %v4667 = vsel %vm3291, %v4616, 0.0
      %4668 = vadd.xlane.f32.xlu0 %v4667
      %v4669 = vpop.xlane.xlu0 %4668
      %v4670 = vsel %vm3291, %v4618, 0.0
      %4671 = vadd.xlane.f32.xlu0 %v4670
      %v4672 = vpop.xlane.xlu0 %4671
      %v4673 = vsel %vm3291, %v4620, 0.0
      %4674 = vadd.xlane.f32.xlu0 %v4673
      %v4675 = vpop.xlane.xlu0 %4674
      %v4676 = vsel %vm3291, %v4622, 0.0
      %4677 = vadd.xlane.f32.xlu0 %v4676
      %v4678 = vpop.xlane.xlu0 %4677
      %v4679 = vsel %vm3291, %v4624, 0.0
      %4680 = vadd.xlane.f32.xlu0 %v4679
      %v4681 = vpop.xlane.xlu0 %4680
      %v4682 = vsel %vm3291, %v4626, 0.0
      %4683 = vadd.xlane.f32.xlu0 %v4682
      %v4684 = vpop.xlane.xlu0 %4683
      %v4685 = vsel %vm3291, %v4628, 0.0
      %4686 = vadd.xlane.f32.xlu0 %v4685
      %v4687 = vpop.xlane.xlu0 %4686
      %v4688 = vsel %vm3291, %v4630, 0.0
      %4689 = vadd.xlane.f32.xlu0 %v4688
      %v4690 = vpop.xlane.xlu0 %4689
      %v4691 = vsel %vm3291, %v4632, 0.0
      %4692 = vadd.xlane.f32.xlu0 %v4691
      %v4693 = vpop.xlane.xlu0 %4692
      %v4694 = vsel %vm3291, %v4634, 0.0
      %4695 = vadd.xlane.f32.xlu0 %v4694
      %v4696 = vpop.xlane.xlu0 %4695
      %v4697 = vsel %vm3291, %v4636, 0.0
      %4698 = vadd.xlane.f32.xlu0 %v4697
      %v4699 = vpop.xlane.xlu0 %4698
      %v4700 = vsel %vm3291, %v4638, 0.0
      %4701 = vadd.xlane.f32.xlu0 %v4700
      %v4702 = vpop.xlane.xlu0 %4701
      %4703 = vrot.lane.b32.xlu0 %v4575, 104
      %v4704 = vpop.permute.xlu0 %4703
      %4705 = vrot.lane.b32.xlu0 %v4576, 104
      %v4706 = vpop.permute.xlu0 %4705
      %4707 = vrot.lane.b32.xlu0 %v4577, 104
      %v4708 = vpop.permute.xlu0 %4707
      %4709 = vrot.lane.b32.xlu0 %v4578, 104
      %v4710 = vpop.permute.xlu0 %4709
      %4711 = vrot.lane.b32.xlu0 %v4579, 104
      %v4712 = vpop.permute.xlu0 %4711
      %4713 = vrot.lane.b32.xlu0 %v4580, 104
      %v4714 = vpop.permute.xlu0 %4713
      %4715 = vrot.lane.b32.xlu0 %v4581, 104
      %v4716 = vpop.permute.xlu0 %4715
      %4717 = vrot.lane.b32.xlu0 %v4582, 104
      %v4718 = vpop.permute.xlu0 %4717
      %4719 = vrot.lane.b32.xlu0 %v4583, 104
      %v4720 = vpop.permute.xlu0 %4719
      %4721 = vrot.lane.b32.xlu0 %v4584, 104
      %v4722 = vpop.permute.xlu0 %4721
      %4723 = vrot.lane.b32.xlu0 %v4585, 104
      %v4724 = vpop.permute.xlu0 %4723
      %4725 = vrot.lane.b32.xlu0 %v4586, 104
      %v4726 = vpop.permute.xlu0 %4725
      %4727 = vrot.lane.b32.xlu0 %v4587, 104
      %v4728 = vpop.permute.xlu0 %4727
      %4729 = vrot.lane.b32.xlu0 %v4588, 104
      %v4730 = vpop.permute.xlu0 %4729
      %4731 = vrot.lane.b32.xlu0 %v4589, 104
      %v4732 = vpop.permute.xlu0 %4731
      %4733 = vrot.lane.b32.xlu0 %v4590, 104
      %v4734 = vpop.permute.xlu0 %4733
      %v4751 = vsel %vm3291, %v4704, 0.0
      %4752 = vadd.xlane.f32.xlu0 %v4751
      %v4753 = vpop.xlane.xlu0 %4752
      %v4754 = vsel %vm3291, %v4706, 0.0
      %4755 = vadd.xlane.f32.xlu0 %v4754
      %v4756 = vpop.xlane.xlu0 %4755
      %v4757 = vsel %vm3291, %v4708, 0.0
      %4758 = vadd.xlane.f32.xlu0 %v4757
      %v4759 = vpop.xlane.xlu0 %4758
      %v4760 = vsel %vm3291, %v4710, 0.0
      %4761 = vadd.xlane.f32.xlu0 %v4760
      %v4762 = vpop.xlane.xlu0 %4761
      %v4763 = vsel %vm3291, %v4712, 0.0
      %4764 = vadd.xlane.f32.xlu0 %v4763
      %v4765 = vpop.xlane.xlu0 %4764
      %v4766 = vsel %vm3291, %v4714, 0.0
      %4767 = vadd.xlane.f32.xlu0 %v4766
      %v4768 = vpop.xlane.xlu0 %4767
      %v4769 = vsel %vm3291, %v4716, 0.0
      %4770 = vadd.xlane.f32.xlu0 %v4769
      %v4771 = vpop.xlane.xlu0 %4770
      %v4772 = vsel %vm3291, %v4718, 0.0
      %4773 = vadd.xlane.f32.xlu0 %v4772
      %v4774 = vpop.xlane.xlu0 %4773
      %v4775 = vsel %vm3291, %v4720, 0.0
      %4776 = vadd.xlane.f32.xlu0 %v4775
      %v4777 = vpop.xlane.xlu0 %4776
      %v4778 = vsel %vm3291, %v4722, 0.0
      %4779 = vadd.xlane.f32.xlu0 %v4778
      %v4780 = vpop.xlane.xlu0 %4779
      %v4781 = vsel %vm3291, %v4724, 0.0
      %4782 = vadd.xlane.f32.xlu0 %v4781
      %v4783 = vpop.xlane.xlu0 %4782
      %v4784 = vsel %vm3291, %v4726, 0.0
      %4785 = vadd.xlane.f32.xlu0 %v4784
      %v4786 = vpop.xlane.xlu0 %4785
      %v4787 = vsel %vm3291, %v4728, 0.0
      %4788 = vadd.xlane.f32.xlu0 %v4787
      %v4789 = vpop.xlane.xlu0 %4788
      %v4790 = vsel %vm3291, %v4730, 0.0
      %4791 = vadd.xlane.f32.xlu0 %v4790
      %v4792 = vpop.xlane.xlu0 %4791
      %v4793 = vsel %vm3291, %v4732, 0.0
      %4794 = vadd.xlane.f32.xlu0 %v4793
      %v4795 = vpop.xlane.xlu0 %4794
      %v4796 = vsel %vm3291, %v4734, 0.0
      %4797 = vadd.xlane.f32.xlu0 %v4796
      %v4798 = vpop.xlane.xlu0 %4797
      %v4799 = vmul.f32 %v4753, 5.0
      %v4800 = vmul.f32 %v4756, 5.0
      %v4801 = vmul.f32 %v4759, 5.0
      %v4802 = vmul.f32 %v4762, 5.0
      %v4803 = vmul.f32 %v4765, 5.0
      %v4804 = vmul.f32 %v4768, 5.0
      %v4805 = vmul.f32 %v4771, 5.0
      %v4806 = vmul.f32 %v4774, 5.0
      %v4807 = vmul.f32 %v4777, 5.0
      %v4808 = vmul.f32 %v4780, 5.0
      %v4809 = vmul.f32 %v4783, 5.0
      %v4810 = vmul.f32 %v4786, 5.0
      %v4811 = vmul.f32 %v4789, 5.0
      %v4812 = vmul.f32 %v4792, 5.0
      %v4813 = vmul.f32 %v4795, 5.0
      %v4814 = vmul.f32 %v4798, 5.0
      %v4815 = vadd.f32 %v4657, %v4799
      %v4816 = vadd.f32 %v4660, %v4800
      %v4817 = vadd.f32 %v4663, %v4801
      %v4818 = vadd.f32 %v4666, %v4802
      %v4819 = vadd.f32 %v4669, %v4803
      %v4820 = vadd.f32 %v4672, %v4804
      %v4821 = vadd.f32 %v4675, %v4805
      %v4822 = vadd.f32 %v4678, %v4806
      %v4823 = vadd.f32 %v4681, %v4807
      %v4824 = vadd.f32 %v4684, %v4808
      %v4825 = vadd.f32 %v4687, %v4809
      %v4826 = vadd.f32 %v4690, %v4810
      %v4827 = vadd.f32 %v4693, %v4811
      %v4828 = vadd.f32 %v4696, %v4812
      %v4829 = vadd.f32 %v4699, %v4813
      %v4830 = vadd.f32 %v4702, %v4814
      %v4831 = vrcp.pop %v2827
      %v4832 = vmul.f32 %v3259, %v4831
      %v4833 = vrcp.pop %v2828
      %v4834 = vmul.f32 %v3260, %v4833
      %v4835 = vrcp.pop %v2829
      %v4836 = vmul.f32 %v3261, %v4835
      %v4837 = vrcp.pop %v2830
      %v4838 = vmul.f32 %v3262, %v4837
      %v4839 = vrcp.pop %v2831
      %v4840 = vmul.f32 %v3263, %v4839
      %v4841 = vrcp.pop %v2832
      %v4842 = vmul.f32 %v3264, %v4841
      %v4843 = vrcp.pop %v2833
      %v4844 = vmul.f32 %v3265, %v4843
      %v4845 = vrcp.pop %v2834
      %v4846 = vmul.f32 %v3266, %v4845
      %v4847 = vrcp.pop %v2835
      %v4848 = vmul.f32 %v3267, %v4847
      %v4849 = vrcp.pop %v2836
      %v4850 = vmul.f32 %v3268, %v4849
      %v4851 = vrcp.pop %v2837
      %v4852 = vmul.f32 %v3269, %v4851
      %v4853 = vrcp.pop %v2838
      %v4854 = vmul.f32 %v3270, %v4853
      %v4855 = vrcp.pop %v2839
      %v4856 = vmul.f32 %v3271, %v4855
      %v4857 = vrcp.pop %v2840
      %v4858 = vmul.f32 %v3272, %v4857
      %v4859 = vrcp.pop %v2841
      %v4860 = vmul.f32 %v3273, %v4859
      %v4861 = vrcp.pop %v2842
      %v4862 = vmul.f32 %v3274, %v4861
      %v4863 = vadd.f32 %v4832, 1e-12
      %v4864 = vadd.f32 %v4834, 1e-12
      %v4865 = vadd.f32 %v4836, 1e-12
      %v4866 = vadd.f32 %v4838, 1e-12
      %v4867 = vadd.f32 %v4840, 1e-12
      %v4868 = vadd.f32 %v4842, 1e-12
      %v4869 = vadd.f32 %v4844, 1e-12
      %v4870 = vadd.f32 %v4846, 1e-12
      %v4871 = vadd.f32 %v4848, 1e-12
      %v4872 = vadd.f32 %v4850, 1e-12
      %v4873 = vadd.f32 %v4852, 1e-12
      %v4874 = vadd.f32 %v4854, 1e-12
      %v4875 = vadd.f32 %v4856, 1e-12
      %v4876 = vadd.f32 %v4858, 1e-12
      %v4877 = vadd.f32 %v4860, 1e-12
      %v4878 = vadd.f32 %v4862, 1e-12
      %v4879 = vlog2.pop %v4863
      %v4880 = vmul.f32 %v4879, 0.6931472
      %v4881 = vlog2.pop %v4864
      %v4882 = vmul.f32 %v4881, 0.6931472
      %v4883 = vlog2.pop %v4865
      %v4884 = vmul.f32 %v4883, 0.6931472
      %v4885 = vlog2.pop %v4866
      %v4886 = vmul.f32 %v4885, 0.6931472
      %v4887 = vlog2.pop %v4867
      %v4888 = vmul.f32 %v4887, 0.6931472
      %v4889 = vlog2.pop %v4868
      %v4890 = vmul.f32 %v4889, 0.6931472
      %v4891 = vlog2.pop %v4869
      %v4892 = vmul.f32 %v4891, 0.6931472
      %v4893 = vlog2.pop %v4870
      %v4894 = vmul.f32 %v4893, 0.6931472
      %v4895 = vlog2.pop %v4871
      %v4896 = vmul.f32 %v4895, 0.6931472
      %v4897 = vlog2.pop %v4872
      %v4898 = vmul.f32 %v4897, 0.6931472
      %v4899 = vlog2.pop %v4873
      %v4900 = vmul.f32 %v4899, 0.6931472
      %v4901 = vlog2.pop %v4874
      %v4902 = vmul.f32 %v4901, 0.6931472
      %v4903 = vlog2.pop %v4875
      %v4904 = vmul.f32 %v4903, 0.6931472
      %v4905 = vlog2.pop %v4876
      %v4906 = vmul.f32 %v4905, 0.6931472
      %v4907 = vlog2.pop %v4877
      %v4908 = vmul.f32 %v4907, 0.6931472
      %v4909 = vlog2.pop %v4878
      %v4910 = vmul.f32 %v4909, 0.6931472
      %v4911 = vmul.f32 %v3259, %v4880
      %v4912 = vmul.f32 %v3260, %v4882
      %v4913 = vmul.f32 %v3261, %v4884
      %v4914 = vmul.f32 %v3262, %v4886
      %v4915 = vmul.f32 %v3263, %v4888
      %v4916 = vmul.f32 %v3264, %v4890
      %v4917 = vmul.f32 %v3265, %v4892
      %v4918 = vmul.f32 %v3266, %v4894
      %v4919 = vmul.f32 %v3267, %v4896
      %v4920 = vmul.f32 %v3268, %v4898
      %v4921 = vmul.f32 %v3269, %v4900
      %v4922 = vmul.f32 %v3270, %v4902
      %v4923 = vmul.f32 %v3271, %v4904
      %v4924 = vmul.f32 %v3272, %v4906
      %v4925 = vmul.f32 %v3273, %v4908
      %v4926 = vmul.f32 %v3274, %v4910
      %v4927 = vsub.f32 1.0, %v3259
      %v4928 = vsub.f32 1.0, %v3260
      %v4929 = vsub.f32 1.0, %v3261
      %v4930 = vsub.f32 1.0, %v3262
      %v4931 = vsub.f32 1.0, %v3263
      %v4932 = vsub.f32 1.0, %v3264
      %v4933 = vsub.f32 1.0, %v3265
      %v4934 = vsub.f32 1.0, %v3266
      %v4935 = vsub.f32 1.0, %v3267
      %v4936 = vsub.f32 1.0, %v3268
      %v4937 = vsub.f32 1.0, %v3269
      %v4938 = vsub.f32 1.0, %v3270
      %v4939 = vsub.f32 1.0, %v3271
      %v4940 = vsub.f32 1.0, %v3272
      %v4941 = vsub.f32 1.0, %v3273
      %v4942 = vsub.f32 1.0, %v3274
      %v4943 = vrcp.pop %v2875
      %v4944 = vmul.f32 %v4927, %v4943
      %v4945 = vrcp.pop %v2876
      %v4946 = vmul.f32 %v4928, %v4945
      %v4947 = vrcp.pop %v2877
      %v4948 = vmul.f32 %v4929, %v4947
      %v4949 = vrcp.pop %v2878
      %v4950 = vmul.f32 %v4930, %v4949
      %v4951 = vrcp.pop %v2879
      %v4952 = vmul.f32 %v4931, %v4951
      %v4953 = vrcp.pop %v2880
      %v4954 = vmul.f32 %v4932, %v4953
      %v4955 = vrcp.pop %v2881
      %v4956 = vmul.f32 %v4933, %v4955
      %v4957 = vrcp.pop %v2882
      %v4958 = vmul.f32 %v4934, %v4957
      %v4959 = vrcp.pop %v2883
      %v4960 = vmul.f32 %v4935, %v4959
      %v4961 = vrcp.pop %v2884
      %v4962 = vmul.f32 %v4936, %v4961
      %v4963 = vrcp.pop %v2885
      %v4964 = vmul.f32 %v4937, %v4963
      %v4965 = vrcp.pop %v2886
      %v4966 = vmul.f32 %v4938, %v4965
      %v4967 = vrcp.pop %v2887
      %v4968 = vmul.f32 %v4939, %v4967
      %v4969 = vrcp.pop %v2888
      %v4970 = vmul.f32 %v4940, %v4969
      %v4971 = vrcp.pop %v2889
      %v4972 = vmul.f32 %v4941, %v4971
      %v4973 = vrcp.pop %v2890
      %v4974 = vmul.f32 %v4942, %v4973
      %v4975 = vadd.f32 %v4944, 1e-12
      %v4976 = vadd.f32 %v4946, 1e-12
      %v4977 = vadd.f32 %v4948, 1e-12
      %v4978 = vadd.f32 %v4950, 1e-12
      %v4979 = vadd.f32 %v4952, 1e-12
      %v4980 = vadd.f32 %v4954, 1e-12
      %v4981 = vadd.f32 %v4956, 1e-12
      %v4982 = vadd.f32 %v4958, 1e-12
      %v4983 = vadd.f32 %v4960, 1e-12
      %v4984 = vadd.f32 %v4962, 1e-12
      %v4985 = vadd.f32 %v4964, 1e-12
      %v4986 = vadd.f32 %v4966, 1e-12
      %v4987 = vadd.f32 %v4968, 1e-12
      %v4988 = vadd.f32 %v4970, 1e-12
      %v4989 = vadd.f32 %v4972, 1e-12
      %v4990 = vadd.f32 %v4974, 1e-12
      %v4991 = vlog2.pop %v4975
      %v4992 = vmul.f32 %v4991, 0.6931472
      %v4993 = vlog2.pop %v4976
      %v4994 = vmul.f32 %v4993, 0.6931472
      %v4995 = vlog2.pop %v4977
      %v4996 = vmul.f32 %v4995, 0.6931472
      %v4997 = vlog2.pop %v4978
      %v4998 = vmul.f32 %v4997, 0.6931472
      %v4999 = vlog2.pop %v4979
      %v5000 = vmul.f32 %v4999, 0.6931472
      %v5001 = vlog2.pop %v4980
      %v5002 = vmul.f32 %v5001, 0.6931472
      %v5003 = vlog2.pop %v4981
      %v5004 = vmul.f32 %v5003, 0.6931472
      %v5005 = vlog2.pop %v4982
      %v5006 = vmul.f32 %v5005, 0.6931472
      %v5007 = vlog2.pop %v4983
      %v5008 = vmul.f32 %v5007, 0.6931472
      %v5009 = vlog2.pop %v4984
      %v5010 = vmul.f32 %v5009, 0.6931472
      %v5011 = vlog2.pop %v4985
      %v5012 = vmul.f32 %v5011, 0.6931472
      %v5013 = vlog2.pop %v4986
      %v5014 = vmul.f32 %v5013, 0.6931472
      %v5015 = vlog2.pop %v4987
      %v5016 = vmul.f32 %v5015, 0.6931472
      %v5017 = vlog2.pop %v4988
      %v5018 = vmul.f32 %v5017, 0.6931472
      %v5019 = vlog2.pop %v4989
      %v5020 = vmul.f32 %v5019, 0.6931472
      %v5021 = vlog2.pop %v4990
      %v5022 = vmul.f32 %v5021, 0.6931472
      %v5023 = vmul.f32 %v4927, %v4992
      %v5024 = vmul.f32 %v4928, %v4994
      %v5025 = vmul.f32 %v4929, %v4996
      %v5026 = vmul.f32 %v4930, %v4998
      %v5027 = vmul.f32 %v4931, %v5000
      %v5028 = vmul.f32 %v4932, %v5002
      %v5029 = vmul.f32 %v4933, %v5004
      %v5030 = vmul.f32 %v4934, %v5006
      %v5031 = vmul.f32 %v4935, %v5008
      %v5032 = vmul.f32 %v4936, %v5010
      %v5033 = vmul.f32 %v4937, %v5012
      %v5034 = vmul.f32 %v4938, %v5014
      %v5035 = vmul.f32 %v4939, %v5016
      %v5036 = vmul.f32 %v4940, %v5018
      %v5037 = vmul.f32 %v4941, %v5020
      %v5038 = vmul.f32 %v4942, %v5022
      %v5039 = vadd.f32 %v4911, %v5023
      %v5040 = vadd.f32 %v4912, %v5024
      %v5041 = vadd.f32 %v4913, %v5025
      %v5042 = vadd.f32 %v4914, %v5026
      %v5043 = vadd.f32 %v4915, %v5027
      %v5044 = vadd.f32 %v4916, %v5028
      %v5045 = vadd.f32 %v4917, %v5029
      %v5046 = vadd.f32 %v4918, %v5030
      %v5047 = vadd.f32 %v4919, %v5031
      %v5048 = vadd.f32 %v4920, %v5032
      %v5049 = vadd.f32 %v4921, %v5033
      %v5050 = vadd.f32 %v4922, %v5034
      %v5051 = vadd.f32 %v4923, %v5035
      %v5052 = vadd.f32 %v4924, %v5036
      %v5053 = vadd.f32 %v4925, %v5037
      %v5054 = vadd.f32 %v4926, %v5038
      %v5055 = vsel %vm3291, %v5039, 0.0
      %5056 = vadd.xlane.f32.xlu0 %v5055
      %v5057 = vpop.xlane.xlu0 %5056
      %v5058 = vsel %vm3291, %v5040, 0.0
      %5059 = vadd.xlane.f32.xlu0 %v5058
      %v5060 = vpop.xlane.xlu0 %5059
      %v5061 = vsel %vm3291, %v5041, 0.0
      %5062 = vadd.xlane.f32.xlu0 %v5061
      %v5063 = vpop.xlane.xlu0 %5062
      %v5064 = vsel %vm3291, %v5042, 0.0
      %5065 = vadd.xlane.f32.xlu0 %v5064
      %v5066 = vpop.xlane.xlu0 %5065
      %v5067 = vsel %vm3291, %v5043, 0.0
      %5068 = vadd.xlane.f32.xlu0 %v5067
      %v5069 = vpop.xlane.xlu0 %5068
      %v5070 = vsel %vm3291, %v5044, 0.0
      %5071 = vadd.xlane.f32.xlu0 %v5070
      %v5072 = vpop.xlane.xlu0 %5071
      %v5073 = vsel %vm3291, %v5045, 0.0
      %5074 = vadd.xlane.f32.xlu0 %v5073
      %v5075 = vpop.xlane.xlu0 %5074
      %v5076 = vsel %vm3291, %v5046, 0.0
      %5077 = vadd.xlane.f32.xlu0 %v5076
      %v5078 = vpop.xlane.xlu0 %5077
      %v5079 = vsel %vm3291, %v5047, 0.0
      %5080 = vadd.xlane.f32.xlu0 %v5079
      %v5081 = vpop.xlane.xlu0 %5080
      %v5082 = vsel %vm3291, %v5048, 0.0
      %5083 = vadd.xlane.f32.xlu0 %v5082
      %v5084 = vpop.xlane.xlu0 %5083
      %v5085 = vsel %vm3291, %v5049, 0.0
      %5086 = vadd.xlane.f32.xlu0 %v5085
      %v5087 = vpop.xlane.xlu0 %5086
      %v5088 = vsel %vm3291, %v5050, 0.0
      %5089 = vadd.xlane.f32.xlu0 %v5088
      %v5090 = vpop.xlane.xlu0 %5089
      %v5091 = vsel %vm3291, %v5051, 0.0
      %5092 = vadd.xlane.f32.xlu0 %v5091
      %v5093 = vpop.xlane.xlu0 %5092
      %v5094 = vsel %vm3291, %v5052, 0.0
      %5095 = vadd.xlane.f32.xlu0 %v5094
      %v5096 = vpop.xlane.xlu0 %5095
      %v5097 = vsel %vm3291, %v5053, 0.0
      %5098 = vadd.xlane.f32.xlu0 %v5097
      %v5099 = vpop.xlane.xlu0 %5098
      %v5100 = vsel %vm3291, %v5054, 0.0
      %5101 = vadd.xlane.f32.xlu0 %v5100
      %v5102 = vpop.xlane.xlu0 %5101
      %v5103 = vadd.f32 %v4401, %v4815
      %v5104 = vadd.f32 %v4404, %v4816
      %v5105 = vadd.f32 %v4407, %v4817
      %v5106 = vadd.f32 %v4410, %v4818
      %v5107 = vadd.f32 %v4413, %v4819
      %v5108 = vadd.f32 %v4416, %v4820
      %v5109 = vadd.f32 %v4419, %v4821
      %v5110 = vadd.f32 %v4422, %v4822
      %v5111 = vadd.f32 %v4425, %v4823
      %v5112 = vadd.f32 %v4428, %v4824
      %v5113 = vadd.f32 %v4431, %v4825
      %v5114 = vadd.f32 %v4434, %v4826
      %v5115 = vadd.f32 %v4437, %v4827
      %v5116 = vadd.f32 %v4440, %v4828
      %v5117 = vadd.f32 %v4443, %v4829
      %v5118 = vadd.f32 %v4446, %v4830
      %v5119 = vadd.f32 %v5103, %v5057
      %v5120 = vadd.f32 %v5104, %v5060
      %v5121 = vadd.f32 %v5105, %v5063
      %v5122 = vadd.f32 %v5106, %v5066
      %v5123 = vadd.f32 %v5107, %v5069
      %v5124 = vadd.f32 %v5108, %v5072
      %v5125 = vadd.f32 %v5109, %v5075
      %v5126 = vadd.f32 %v5110, %v5078
      %v5127 = vadd.f32 %v5111, %v5081
      %v5128 = vadd.f32 %v5112, %v5084
      %v5129 = vadd.f32 %v5113, %v5087
      %v5130 = vadd.f32 %v5114, %v5090
      %v5131 = vadd.f32 %v5115, %v5093
      %v5132 = vadd.f32 %v5116, %v5096
      %v5133 = vadd.f32 %v5117, %v5099
      %v5134 = vadd.f32 %v5118, %v5102
      %5135 = vst [vmem:[%s145] sm:$0xff] 0.0
      %5136 = vst [vmem:[%s145 + $0x8] sm:$0xff] 0.0
      %5137 = vst [vmem:[%s145 + $0x10] sm:$0xff] 0.0
      %5138 = vst [vmem:[%s145 + $0x18] sm:$0xff] 0.0
      %5139 = vst [vmem:[%s145 + $0x20] sm:$0xff] 0.0
      %5140 = vst [vmem:[%s145 + $0x28] sm:$0xff] 0.0
      %5141 = vst [vmem:[%s145 + $0x30] sm:$0xff] 0.0
      %5142 = vst [vmem:[%s145 + $0x38] sm:$0xff] 0.0
      %5143 = vst [vmem:[%s145 + $0x40] sm:$0xff] 0.0
      %5144 = vst [vmem:[%s145 + $0x48] sm:$0xff] 0.0
      %5145 = vst [vmem:[%s145 + $0x50] sm:$0xff] 0.0
      %5146 = vst [vmem:[%s145 + $0x58] sm:$0xff] 0.0
      %5147 = vst [vmem:[%s145 + $0x60] sm:$0xff] 0.0
      %5148 = vst [vmem:[%s145 + $0x68] sm:$0xff] 0.0
      %5149 = vst [vmem:[%s145 + $0x70] sm:$0xff] 0.0
      %5150 = vst [vmem:[%s145 + $0x78] sm:$0xff] 0.0
      %5151 = vst.msk [vmem:[%s145] sm:$0xff] %vm3291, %v4127
      %5152 = vst.msk [vmem:[%s145 + $0x8] sm:$0xff] %vm3291, %v4128
      %5153 = vst.msk [vmem:[%s145 + $0x10] sm:$0xff] %vm3291, %v4129
      %5154 = vst.msk [vmem:[%s145 + $0x18] sm:$0xff] %vm3291, %v4130
      %5155 = vst.msk [vmem:[%s145 + $0x20] sm:$0xff] %vm3291, %v4131
      %5156 = vst.msk [vmem:[%s145 + $0x28] sm:$0xff] %vm3291, %v4132
      %5157 = vst.msk [vmem:[%s145 + $0x30] sm:$0xff] %vm3291, %v4133
      %5158 = vst.msk [vmem:[%s145 + $0x38] sm:$0xff] %vm3291, %v4134
      %5159 = vst.msk [vmem:[%s145 + $0x40] sm:$0xff] %vm3291, %v4135
      %5160 = vst.msk [vmem:[%s145 + $0x48] sm:$0xff] %vm3291, %v4136
      %5161 = vst.msk [vmem:[%s145 + $0x50] sm:$0xff] %vm3291, %v4137
      %5162 = vst.msk [vmem:[%s145 + $0x58] sm:$0xff] %vm3291, %v4138
      %5163 = vst.msk [vmem:[%s145 + $0x60] sm:$0xff] %vm3291, %v4139
      %5164 = vst.msk [vmem:[%s145 + $0x68] sm:$0xff] %vm3291, %v4140
      %5165 = vst.msk [vmem:[%s145 + $0x70] sm:$0xff] %vm3291, %v4141
      %5166 = vst.msk [vmem:[%s145 + $0x78] sm:$0xff] %vm3291, %v4142
      %5167 = vrot.lane.b32.xlu0 %v3275, 8
      %v5168 = vpop.permute.xlu0 %5167
      %5169 = vrot.lane.b32.xlu0 %v3276, 8
      %v5170 = vpop.permute.xlu0 %5169
      %5171 = vrot.lane.b32.xlu0 %v3277, 8
      %v5172 = vpop.permute.xlu0 %5171
      %5173 = vrot.lane.b32.xlu0 %v3278, 8
      %v5174 = vpop.permute.xlu0 %5173
      %5175 = vrot.lane.b32.xlu0 %v3279, 8
      %v5176 = vpop.permute.xlu0 %5175
      %5177 = vrot.lane.b32.xlu0 %v3280, 8
      %v5178 = vpop.permute.xlu0 %5177
      %5179 = vrot.lane.b32.xlu0 %v3281, 8
      %v5180 = vpop.permute.xlu0 %5179
      %5181 = vrot.lane.b32.xlu0 %v3282, 8
      %v5182 = vpop.permute.xlu0 %5181
      %5183 = vrot.lane.b32.xlu0 %v3283, 8
      %v5184 = vpop.permute.xlu0 %5183
      %5185 = vrot.lane.b32.xlu0 %v3284, 8
      %v5186 = vpop.permute.xlu0 %5185
      %5187 = vrot.lane.b32.xlu0 %v3285, 8
      %v5188 = vpop.permute.xlu0 %5187
      %5189 = vrot.lane.b32.xlu0 %v3286, 8
      %v5190 = vpop.permute.xlu0 %5189
      %5191 = vrot.lane.b32.xlu0 %v3287, 8
      %v5192 = vpop.permute.xlu0 %5191
      %5193 = vrot.lane.b32.xlu0 %v3288, 8
      %v5194 = vpop.permute.xlu0 %5193
      %5195 = vrot.lane.b32.xlu0 %v3289, 8
      %v5196 = vpop.permute.xlu0 %5195
      %5197 = vrot.lane.b32.xlu0 %v3290, 8
      %v5198 = vpop.permute.xlu0 %5197
      %vm5215 = vcmask 130112
      %5216 = vst.msk [vmem:[%s145] sm:$0xff] %vm5215, %v5168
      %5217 = vst.msk [vmem:[%s145 + $0x8] sm:$0xff] %vm5215, %v5170
      %5218 = vst.msk [vmem:[%s145 + $0x10] sm:$0xff] %vm5215, %v5172
      %5219 = vst.msk [vmem:[%s145 + $0x18] sm:$0xff] %vm5215, %v5174
      %5220 = vst.msk [vmem:[%s145 + $0x20] sm:$0xff] %vm5215, %v5176
      %5221 = vst.msk [vmem:[%s145 + $0x28] sm:$0xff] %vm5215, %v5178
      %5222 = vst.msk [vmem:[%s145 + $0x30] sm:$0xff] %vm5215, %v5180
      %5223 = vst.msk [vmem:[%s145 + $0x38] sm:$0xff] %vm5215, %v5182
      %5224 = vst.msk [vmem:[%s145 + $0x40] sm:$0xff] %vm5215, %v5184
      %5225 = vst.msk [vmem:[%s145 + $0x48] sm:$0xff] %vm5215, %v5186
      %5226 = vst.msk [vmem:[%s145 + $0x50] sm:$0xff] %vm5215, %v5188
      %5227 = vst.msk [vmem:[%s145 + $0x58] sm:$0xff] %vm5215, %v5190
      %5228 = vst.msk [vmem:[%s145 + $0x60] sm:$0xff] %vm5215, %v5192
      %5229 = vst.msk [vmem:[%s145 + $0x68] sm:$0xff] %vm5215, %v5194
      %5230 = vst.msk [vmem:[%s145 + $0x70] sm:$0xff] %vm5215, %v5196
      %5231 = vst.msk [vmem:[%s145 + $0x78] sm:$0xff] %vm5215, %v5198
      %vm5232 = vcmask 138368
      %5233 = vst.msk [vmem:[%s145] sm:$0xff] %vm5232, %v5119
      %5234 = vst.msk [vmem:[%s145 + $0x8] sm:$0xff] %vm5232, %v5120
      %5235 = vst.msk [vmem:[%s145 + $0x10] sm:$0xff] %vm5232, %v5121
      %5236 = vst.msk [vmem:[%s145 + $0x18] sm:$0xff] %vm5232, %v5122
      %5237 = vst.msk [vmem:[%s145 + $0x20] sm:$0xff] %vm5232, %v5123
      %5238 = vst.msk [vmem:[%s145 + $0x28] sm:$0xff] %vm5232, %v5124
      %5239 = vst.msk [vmem:[%s145 + $0x30] sm:$0xff] %vm5232, %v5125
      %5240 = vst.msk [vmem:[%s145 + $0x38] sm:$0xff] %vm5232, %v5126
      %5241 = vst.msk [vmem:[%s145 + $0x40] sm:$0xff] %vm5232, %v5127
      %5242 = vst.msk [vmem:[%s145 + $0x48] sm:$0xff] %vm5232, %v5128
      %5243 = vst.msk [vmem:[%s145 + $0x50] sm:$0xff] %vm5232, %v5129
      %5244 = vst.msk [vmem:[%s145 + $0x58] sm:$0xff] %vm5232, %v5130
      %5245 = vst.msk [vmem:[%s145 + $0x60] sm:$0xff] %vm5232, %v5131
      %5246 = vst.msk [vmem:[%s145 + $0x68] sm:$0xff] %vm5232, %v5132
      %5247 = vst.msk [vmem:[%s145 + $0x70] sm:$0xff] %vm5232, %v5133
      %5248 = vst.msk [vmem:[%s145 + $0x78] sm:$0xff] %vm5232, %v5134
      %s5249 = smul.u32 16, %s13
      %p5250 = scmp.lt.s32.totalorder %s5249, 31
      %s5251 = scalar_select %p5250, %s5249, 31
      %s5252 = smul.addr %s5251, 8
      %s5253 = scalar_lea.vmem %s2, %s5252
      // Predicated region
      $region29: #{net_forward.1} parent=27 // pred_check
        %p5254 = pneg %p78
      $region30: #{net_forward.1} parent=27 // pred_check_branch
        %5256 = sbr.rel (%p5254) target = $region32
      $region31: #{net_forward.1} parent=27 // pred_region
        %s5257 = smul.u32 16, %s13
      $region32: #{net_forward.1} parent=27 // pred_fallthru
        _
    $region28: #{net_forward.1} parent=5 // pred_fallthru
      _
    %p5258 = scmp.le.s32.totalorder 2, %s8
    // Predicated region
    $region33: #{net_forward.1} parent=5 // pred_check
      %p5259 = pneg %p5258
    $region34: #{net_forward.1} parent=5 // pred_check_branch
      %5261 = sbr.rel (%p5259) target = $region36
    $region35: #{net_forward.1} parent=5 // pred_region
      %s5262 = ssub.s32 %s8, 2
      // Predicated region
      $region37: #{net_forward.1} parent=35 // pred_check
        %p5263 = pneg %p84
      $region38: #{net_forward.1} parent=35 // pred_check_branch
        %5265 = sbr.rel (%p5263) target = $region40
      $region39: #{net_forward.1} parent=35 // pred_region
        %s5266 = smul.u32 16, %s14
        %p5267 = scmp.lt.s32.totalorder %s5266, 31
        %s5268 = scalar_select %p5267, %s5266, 31
        %s5269 = smul.addr %s5268, 8
        %s5270 = scalar_lea.vmem %s2, %s5269
      $region40: #{net_forward.1} parent=35 // pred_fallthru
        _
    $region36: #{net_forward.1} parent=5 // pred_fallthru
      _
  $region6: #{net_forward.1} parent=0 // loop_footer
    %s12 = sadd.s32 1, %s8
  $region7: #{net_forward.1} parent=0 // loop_footer_branch
    %7 = sbr.rel target = $region3
  $region8: #{net_forward.1} parent=0 // loop_exit
    _

</llo_original>
